<compile_context>
chip_gen: v7x
topology: tpu7x:2x2x1
jax: 0.10.0
libtpu: 0.0.40
codegen_flags: <defaults>
</compile_context>

<pallas_src>
import functools
import math

import jax
import jax.numpy as jnp
import numpy as np
from jax import lax
from jax.experimental import pallas as pl
from jax.experimental.pallas import tpu as pltpu


# ----------------------------------------------------------------------------
# Fused encoder-layer kernel
# ----------------------------------------------------------------------------

def _layernorm(x, g, b, eps):
    mean = jnp.mean(x, axis=-1, keepdims=True)
    var = jnp.mean((x - mean) ** 2, axis=-1, keepdims=True)
    return (x - mean) * lax.rsqrt(var + eps) * g + b


def _encoder_layer_kernel(x_ref,
                          wqkv_ref, bqkv_ref, wo_ref, bo_ref,
                          w1_ref, b1_ref, w2_ref, b2_ref,
                          ln1g_ref, ln1b_ref, ln2g_ref, ln2b_ref,
                          o_ref, *, nhead, scale, eps):
    """One batch element per grid step; the whole layer stays resident in VMEM."""
    x = x_ref[0].astype(jnp.float32)                         # (S, D)
    S, D = x.shape
    Hd = D // nhead

    # ---- fused QKV projection (single MXU matmul on the packed weight) -----
    qkv = jnp.dot(x, wqkv_ref[...], preferred_element_type=jnp.float32)
    qkv = qkv + bqkv_ref[...]                                # (S, 3D)

    # ---- multi-head self-attention, heads split in-kernel (static slices) --
    head_outs = []
    for h in range(nhead):
        q = qkv[:, h * Hd:(h + 1) * Hd] * scale                      # (S, Hd)
        k = qkv[:, D + h * Hd:D + (h + 1) * Hd]                      # (S, Hd)
        v = qkv[:, 2 * D + h * Hd:2 * D + (h + 1) * Hd]              # (S, Hd)
        s = lax.dot_general(q, k, (((1,), (1,)), ((), ())),
                            preferred_element_type=jnp.float32)      # (S, S)
        s = s - jnp.max(s, axis=-1, keepdims=True)
        p = jnp.exp(s)
        # EUP approx reciprocal for the softmax denominator (frees VALU slots).
        p = p * pl.reciprocal(jnp.sum(p, axis=-1, keepdims=True), approx=True)
        head_outs.append(jnp.dot(p, v, preferred_element_type=jnp.float32))
    attn = jnp.concatenate(head_outs, axis=-1)               # (S, D)

    attn = jnp.dot(attn, wo_ref[...], preferred_element_type=jnp.float32)
    attn = attn + bo_ref[...]

    # ---- residual add + LayerNorm 1 (fused, no HBM round trip) -------------
    y = _layernorm(x + attn, ln1g_ref[...], ln1b_ref[...], eps)

    # ---- FF1 + ReLU + FF2 fused: (S, dim_ff) intermediate never hits HBM ----
    ff = jnp.dot(y, w1_ref[...], preferred_element_type=jnp.float32) + b1_ref[...]
    ff = jnp.maximum(ff, 0.0)
    ff = jnp.dot(ff, w2_ref[...], preferred_element_type=jnp.float32) + b2_ref[...]

    # ---- residual add + LayerNorm 2 (fused) ---------------------------------
    out = _layernorm(y + ff, ln2g_ref[...], ln2b_ref[...], eps)
    o_ref[0] = out.astype(o_ref.dtype)
    # TODO(synk): src_key_padding_mask (additive -inf on scores) not implemented;
    #             the reference forward is exercised here with mask=None.
    # TODO(synk): dropout treated as identity (eval mode only).


def encoder_layer(x, lp, nhead, eps=1e-5):
    """x: (B, S, D) -> (B, S, D), one fused pallas_call for the whole layer."""
    B, S, D = x.shape
    F = lp["ff1_w"].shape[1]
    scale = 1.0 / math.sqrt(D // nhead)

    def full(shape):
        return pl.BlockSpec(shape, lambda b, _n=len(shape): (0,) * _n)

    act_spec = pl.BlockSpec((1, S, D), lambda b: (b, 0, 0))

    return pl.pallas_call(
        functools.partial(_encoder_layer_kernel,
                          nhead=nhead, scale=scale, eps=eps),
        out_shape=jax.ShapeDtypeStruct((B, S, D), x.dtype),
        grid=(B,),
        in_specs=[
            act_spec,
            full((D, 3 * D)), full((1, 3 * D)),
            full((D, D)), full((1, D)),
            full((D, F)), full((1, F)),
            full((F, D)), full((1, D)),
            full((1, D)), full((1, D)), full((1, D)), full((1, D)),
        ],
        out_specs=act_spec,
        compiler_params=pltpu.CompilerParams(
            dimension_semantics=("parallel",)),
    )(x,
      lp["in_proj_w"], lp["in_proj_b"].reshape(1, -1),
      lp["out_proj_w"], lp["out_proj_b"].reshape(1, -1),
      lp["ff1_w"], lp["ff1_b"].reshape(1, -1),
      lp["ff2_w"], lp["ff2_b"].reshape(1, -1),
      lp["ln1_g"].reshape(1, -1), lp["ln1_b"].reshape(1, -1),
      lp["ln2_g"].reshape(1, -1), lp["ln2_b"].reshape(1, -1))


# ----------------------------------------------------------------------------
# Model glue (plain JAX): parameter setup, embedding + positional encoding
# ----------------------------------------------------------------------------

def make_positional_encoding(d_model, max_len):
    position = np.arange(max_len, dtype=np.float32)[:, None]
    div_term = np.exp(np.arange(0, d_model, 2, dtype=np.float32)
                      * (-np.log(10000.0) / d_model))
    pe = np.zeros((max_len, d_model), dtype=np.float32)
    pe[:, 0::2] = np.sin(position * div_term)
    pe[:, 1::2] = np.cos(position * div_term)
    return jnp.asarray(pe[None])  # (1, max_len, d_model)


def init_params(key, vocab_size, d_model, nhead, dim_feedforward, num_layers):
    keys = jax.random.split(key, 1 + 6 * num_layers)
    params = {
        "embedding": 0.02 * jax.random.normal(keys[0], (vocab_size, d_model),
                                              jnp.float32),
        "layers": [],
    }
    ki = 1
    for _ in range(num_layers):
        lp = {
            # pre-transposed (d_in, d_out) so the kernel does x @ w + b
            "in_proj_w": 0.02 * jax.random.normal(
                keys[ki + 0], (d_model, 3 * d_model), jnp.float32),
            "in_proj_b": jnp.zeros((3 * d_model,), jnp.float32),
            "out_proj_w": 0.02 * jax.random.normal(
                keys[ki + 1], (d_model, d_model), jnp.float32),
            "out_proj_b": jnp.zeros((d_model,), jnp.float32),
            "ff1_w": 0.02 * jax.random.normal(
                keys[ki + 2], (d_model, dim_feedforward), jnp.float32),
            "ff1_b": jnp.zeros((dim_feedforward,), jnp.float32),
            "ff2_w": 0.02 * jax.random.normal(
                keys[ki + 3], (dim_feedforward, d_model), jnp.float32),
            "ff2_b": jnp.zeros((d_model,), jnp.float32),
            "ln1_g": jnp.ones((d_model,), jnp.float32),
            "ln1_b": jnp.zeros((d_model,), jnp.float32),
            "ln2_g": jnp.ones((d_model,), jnp.float32),
            "ln2_b": jnp.zeros((d_model,), jnp.float32),
        }
        params["layers"].append(lp)
        ki += 6
    return params


def encoder_forward(params, pe_table, tokens, nhead):
    # Embedding lookup (data-dependent gather) + positional-encoding add are
    # left to XLA so they fuse into a single gather+add — no standalone
    # elementwise pallas_call for the PE add.
    S = tokens.shape[1]
    out = params["embedding"][tokens] + pe_table[:, :S, :]   # (B, S, D)
    for lp in params["layers"]:
        out = encoder_layer(out, lp, nhead)
    return out


# ----------------------------------------------------------------------------
# Main
# ----------------------------------------------------------------------------

if __name__ == "__main__":
    # small but consistent hyper-params
    VOCAB_SIZE = 50
    MAX_LEN = 16
    D_MODEL = 32
    NHEAD = 4
    DIM_FF = 64
    NUM_LAYERS = 2
    BATCH = 2
    SEQ = 8

    key = jax.random.PRNGKey(0)
    pkey, tkey = jax.random.split(key)

    params = init_params(pkey, VOCAB_SIZE, D_MODEL, NHEAD, DIM_FF, NUM_LAYERS)
    pe_table = make_positional_encoding(D_MODEL, MAX_LEN)

    tokens = jax.random.randint(tkey, (BATCH, SEQ), 0, VOCAB_SIZE, jnp.int32)

    fwd = jax.jit(functools.partial(encoder_forward, nhead=NHEAD))
    out = fwd(params, pe_table, tokens)
    out = jax.block_until_ready(out)

    assert out.shape == (BATCH, SEQ, D_MODEL)
    assert jnp.all(jnp.isfinite(out))
    print("KERNEL_OK")
</pallas_src>

<mosaic_0001>
module attributes {stable_mosaic.version = 11 : i64} {
  func.func @_encoder_layer_kernel(%arg0: i32, %arg1: memref<1x8x32xf32, #tpu.memory_space<vmem>>, %arg2: memref<32x96xf32, #tpu.memory_space<vmem>>, %arg3: memref<1x96xf32, #tpu.memory_space<vmem>>, %arg4: memref<32x32xf32, #tpu.memory_space<vmem>>, %arg5: memref<1x32xf32, #tpu.memory_space<vmem>>, %arg6: memref<32x64xf32, #tpu.memory_space<vmem>>, %arg7: memref<1x64xf32, #tpu.memory_space<vmem>>, %arg8: memref<64x32xf32, #tpu.memory_space<vmem>>, %arg9: memref<1x32xf32, #tpu.memory_space<vmem>>, %arg10: memref<1x32xf32, #tpu.memory_space<vmem>>, %arg11: memref<1x32xf32, #tpu.memory_space<vmem>>, %arg12: memref<1x32xf32, #tpu.memory_space<vmem>>, %arg13: memref<1x32xf32, #tpu.memory_space<vmem>>, %arg14: memref<1x8x32xf32, #tpu.memory_space<vmem>>) attributes {dimension_semantics = [#tpu.dimension_semantics<parallel>], iteration_bounds = array<i64: 2>, scalar_prefetch = 0 : i64, scratch_operands = 0 : i64, tpu.core_type = #tpu.core_type<tc>, window_params = [{transform_indices = @transform_0, window_bounds = array<i64: 1, 8, 32>}, {pipeline_mode = #tpu.pipeline_mode<synchronous>, transform_indices = @transform_1, window_bounds = array<i64: 32, 96>}, {pipeline_mode = #tpu.pipeline_mode<synchronous>, transform_indices = @transform_2, window_bounds = array<i64: 1, 96>}, {pipeline_mode = #tpu.pipeline_mode<synchronous>, transform_indices = @transform_3, window_bounds = array<i64: 32, 32>}, {pipeline_mode = #tpu.pipeline_mode<synchronous>, transform_indices = @transform_4, window_bounds = array<i64: 1, 32>}, {pipeline_mode = #tpu.pipeline_mode<synchronous>, transform_indices = @transform_5, window_bounds = array<i64: 32, 64>}, {pipeline_mode = #tpu.pipeline_mode<synchronous>, transform_indices = @transform_6, window_bounds = array<i64: 1, 64>}, {pipeline_mode = #tpu.pipeline_mode<synchronous>, transform_indices = @transform_7, window_bounds = array<i64: 64, 32>}, {pipeline_mode = #tpu.pipeline_mode<synchronous>, transform_indices = @transform_8, window_bounds = array<i64: 1, 32>}, {pipeline_mode = #tpu.pipeline_mode<synchronous>, transform_indices = @transform_9, window_bounds = array<i64: 1, 32>}, {pipeline_mode = #tpu.pipeline_mode<synchronous>, transform_indices = @transform_10, window_bounds = array<i64: 1, 32>}, {pipeline_mode = #tpu.pipeline_mode<synchronous>, transform_indices = @transform_11, window_bounds = array<i64: 1, 32>}, {pipeline_mode = #tpu.pipeline_mode<synchronous>, transform_indices = @transform_12, window_bounds = array<i64: 1, 32>}, {transform_indices = @transform_13, window_bounds = array<i64: 1, 8, 32>}]} {
    %c0 = arith.constant 0 : index
    %c0_0 = arith.constant 0 : index
    %c0_1 = arith.constant 0 : index
    %0 = vector.load %arg1[%c0, %c0_0, %c0_1] : memref<1x8x32xf32, #tpu.memory_space<vmem>>, vector<1x8x32xf32>
    %1 = vector.shape_cast %0 : vector<1x8x32xf32> to vector<8x32xf32>
    %c0_2 = arith.constant 0 : index
    %c0_3 = arith.constant 0 : index
    %2 = vector.load %arg2[%c0_2, %c0_3] : memref<32x96xf32, #tpu.memory_space<vmem>>, vector<32x96xf32>
    %cst = arith.constant dense<0.000000e+00> : vector<8x96xf32>
    %3 = tpu.matmul %1, %2, %cst {dimension_numbers = #tpu.dot_dimension_numbers<[1], [0], [0], [1], [0, 0, 1, 1], [], []>} : vector<8x32xf32>, vector<32x96xf32>, vector<8x96xf32> -> vector<8x96xf32>
    %c0_4 = arith.constant 0 : index
    %c0_5 = arith.constant 0 : index
    %4 = vector.load %arg3[%c0_4, %c0_5] : memref<1x96xf32, #tpu.memory_space<vmem>>, vector<1x96xf32>
    %5 = vector.broadcast %4 : vector<1x96xf32> to vector<8x96xf32>
    %6 = arith.addf %3, %5 : vector<8x96xf32>
    %7 = vector.extract_strided_slice %6 {offsets = [0, 0], sizes = [8, 8], strides = [1, 1]} : vector<8x96xf32> to vector<8x8xf32>
    %cst_6 = arith.constant 0.353553385 : f32
    %8 = vector.broadcast %cst_6 : f32 to vector<8x8xf32>
    %9 = arith.mulf %7, %8 : vector<8x8xf32>
    %10 = vector.extract_strided_slice %6 {offsets = [0, 32], sizes = [8, 8], strides = [1, 1]} : vector<8x96xf32> to vector<8x8xf32>
    %11 = vector.extract_strided_slice %6 {offsets = [0, 64], sizes = [8, 8], strides = [1, 1]} : vector<8x96xf32> to vector<8x8xf32>
    %cst_7 = arith.constant dense<0.000000e+00> : vector<8x8xf32>
    %12 = tpu.matmul %9, %10, %cst_7 {dimension_numbers = #tpu.dot_dimension_numbers<[1], [1], [0], [0], [0, 0, 1, 0], [], []>} : vector<8x8xf32>, vector<8x8xf32>, vector<8x8xf32> -> vector<8x8xf32>
    %cst_8 = arith.constant dense<0xFF800000> : vector<8xf32>
    %13 = vector.multi_reduction <maximumf>, %12, %cst_8 [1] : vector<8x8xf32> to vector<8xf32>
    %14 = vector.shape_cast %13 : vector<8xf32> to vector<8x1xf32>
    %15 = vector.broadcast %14 : vector<8x1xf32> to vector<8x8xf32>
    %16 = arith.subf %12, %15 : vector<8x8xf32>
    %17 = math.exp %16 : vector<8x8xf32>
    %cst_9 = arith.constant dense<0.000000e+00> : vector<8xf32>
    %18 = vector.multi_reduction <add>, %17, %cst_9 [1] : vector<8x8xf32> to vector<8xf32>
    %19 = vector.shape_cast %18 : vector<8xf32> to vector<8x1xf32>
    %20 = tpu.reciprocal %19 {approx = true} : vector<8x1xf32> -> vector<8x1xf32>
    %21 = vector.broadcast %20 : vector<8x1xf32> to vector<8x8xf32>
    %22 = arith.mulf %17, %21 : vector<8x8xf32>
    %cst_10 = arith.constant dense<0.000000e+00> : vector<8x8xf32>
    %23 = tpu.matmul %22, %11, %cst_10 {dimension_numbers = #tpu.dot_dimension_numbers<[1], [0], [0], [1], [0, 0, 1, 1], [], []>} : vector<8x8xf32>, vector<8x8xf32>, vector<8x8xf32> -> vector<8x8xf32>
    %24 = vector.extract_strided_slice %6 {offsets = [0, 8], sizes = [8, 8], strides = [1, 1]} : vector<8x96xf32> to vector<8x8xf32>
    %cst_11 = arith.constant 0.353553385 : f32
    %25 = vector.broadcast %cst_11 : f32 to vector<8x8xf32>
    %26 = arith.mulf %24, %25 : vector<8x8xf32>
    %27 = vector.extract_strided_slice %6 {offsets = [0, 40], sizes = [8, 8], strides = [1, 1]} : vector<8x96xf32> to vector<8x8xf32>
    %28 = vector.extract_strided_slice %6 {offsets = [0, 72], sizes = [8, 8], strides = [1, 1]} : vector<8x96xf32> to vector<8x8xf32>
    %cst_12 = arith.constant dense<0.000000e+00> : vector<8x8xf32>
    %29 = tpu.matmul %26, %27, %cst_12 {dimension_numbers = #tpu.dot_dimension_numbers<[1], [1], [0], [0], [0, 0, 1, 0], [], []>} : vector<8x8xf32>, vector<8x8xf32>, vector<8x8xf32> -> vector<8x8xf32>
    %cst_13 = arith.constant dense<0xFF800000> : vector<8xf32>
    %30 = vector.multi_reduction <maximumf>, %29, %cst_13 [1] : vector<8x8xf32> to vector<8xf32>
    %31 = vector.shape_cast %30 : vector<8xf32> to vector<8x1xf32>
    %32 = vector.broadcast %31 : vector<8x1xf32> to vector<8x8xf32>
    %33 = arith.subf %29, %32 : vector<8x8xf32>
    %34 = math.exp %33 : vector<8x8xf32>
    %cst_14 = arith.constant dense<0.000000e+00> : vector<8xf32>
    %35 = vector.multi_reduction <add>, %34, %cst_14 [1] : vector<8x8xf32> to vector<8xf32>
    %36 = vector.shape_cast %35 : vector<8xf32> to vector<8x1xf32>
    %37 = tpu.reciprocal %36 {approx = true} : vector<8x1xf32> -> vector<8x1xf32>
    %38 = vector.broadcast %37 : vector<8x1xf32> to vector<8x8xf32>
    %39 = arith.mulf %34, %38 : vector<8x8xf32>
    %cst_15 = arith.constant dense<0.000000e+00> : vector<8x8xf32>
    %40 = tpu.matmul %39, %28, %cst_15 {dimension_numbers = #tpu.dot_dimension_numbers<[1], [0], [0], [1], [0, 0, 1, 1], [], []>} : vector<8x8xf32>, vector<8x8xf32>, vector<8x8xf32> -> vector<8x8xf32>
    %41 = vector.extract_strided_slice %6 {offsets = [0, 16], sizes = [8, 8], strides = [1, 1]} : vector<8x96xf32> to vector<8x8xf32>
    %cst_16 = arith.constant 0.353553385 : f32
    %42 = vector.broadcast %cst_16 : f32 to vector<8x8xf32>
    %43 = arith.mulf %41, %42 : vector<8x8xf32>
    %44 = vector.extract_strided_slice %6 {offsets = [0, 48], sizes = [8, 8], strides = [1, 1]} : vector<8x96xf32> to vector<8x8xf32>
    %45 = vector.extract_strided_slice %6 {offsets = [0, 80], sizes = [8, 8], strides = [1, 1]} : vector<8x96xf32> to vector<8x8xf32>
    %cst_17 = arith.constant dense<0.000000e+00> : vector<8x8xf32>
    %46 = tpu.matmul %43, %44, %cst_17 {dimension_numbers = #tpu.dot_dimension_numbers<[1], [1], [0], [0], [0, 0, 1, 0], [], []>} : vector<8x8xf32>, vector<8x8xf32>, vector<8x8xf32> -> vector<8x8xf32>
    %cst_18 = arith.constant dense<0xFF800000> : vector<8xf32>
    %47 = vector.multi_reduction <maximumf>, %46, %cst_18 [1] : vector<8x8xf32> to vector<8xf32>
    %48 = vector.shape_cast %47 : vector<8xf32> to vector<8x1xf32>
    %49 = vector.broadcast %48 : vector<8x1xf32> to vector<8x8xf32>
    %50 = arith.subf %46, %49 : vector<8x8xf32>
    %51 = math.exp %50 : vector<8x8xf32>
    %cst_19 = arith.constant dense<0.000000e+00> : vector<8xf32>
    %52 = vector.multi_reduction <add>, %51, %cst_19 [1] : vector<8x8xf32> to vector<8xf32>
    %53 = vector.shape_cast %52 : vector<8xf32> to vector<8x1xf32>
    %54 = tpu.reciprocal %53 {approx = true} : vector<8x1xf32> -> vector<8x1xf32>
    %55 = vector.broadcast %54 : vector<8x1xf32> to vector<8x8xf32>
    %56 = arith.mulf %51, %55 : vector<8x8xf32>
    %cst_20 = arith.constant dense<0.000000e+00> : vector<8x8xf32>
    %57 = tpu.matmul %56, %45, %cst_20 {dimension_numbers = #tpu.dot_dimension_numbers<[1], [0], [0], [1], [0, 0, 1, 1], [], []>} : vector<8x8xf32>, vector<8x8xf32>, vector<8x8xf32> -> vector<8x8xf32>
    %58 = vector.extract_strided_slice %6 {offsets = [0, 24], sizes = [8, 8], strides = [1, 1]} : vector<8x96xf32> to vector<8x8xf32>
    %cst_21 = arith.constant 0.353553385 : f32
    %59 = vector.broadcast %cst_21 : f32 to vector<8x8xf32>
    %60 = arith.mulf %58, %59 : vector<8x8xf32>
    %61 = vector.extract_strided_slice %6 {offsets = [0, 56], sizes = [8, 8], strides = [1, 1]} : vector<8x96xf32> to vector<8x8xf32>
    %62 = vector.extract_strided_slice %6 {offsets = [0, 88], sizes = [8, 8], strides = [1, 1]} : vector<8x96xf32> to vector<8x8xf32>
    %cst_22 = arith.constant dense<0.000000e+00> : vector<8x8xf32>
    %63 = tpu.matmul %60, %61, %cst_22 {dimension_numbers = #tpu.dot_dimension_numbers<[1], [1], [0], [0], [0, 0, 1, 0], [], []>} : vector<8x8xf32>, vector<8x8xf32>, vector<8x8xf32> -> vector<8x8xf32>
    %cst_23 = arith.constant dense<0xFF800000> : vector<8xf32>
    %64 = vector.multi_reduction <maximumf>, %63, %cst_23 [1] : vector<8x8xf32> to vector<8xf32>
    %65 = vector.shape_cast %64 : vector<8xf32> to vector<8x1xf32>
    %66 = vector.broadcast %65 : vector<8x1xf32> to vector<8x8xf32>
    %67 = arith.subf %63, %66 : vector<8x8xf32>
    %68 = math.exp %67 : vector<8x8xf32>
    %cst_24 = arith.constant dense<0.000000e+00> : vector<8xf32>
    %69 = vector.multi_reduction <add>, %68, %cst_24 [1] : vector<8x8xf32> to vector<8xf32>
    %70 = vector.shape_cast %69 : vector<8xf32> to vector<8x1xf32>
    %71 = tpu.reciprocal %70 {approx = true} : vector<8x1xf32> -> vector<8x1xf32>
    %72 = vector.broadcast %71 : vector<8x1xf32> to vector<8x8xf32>
    %73 = arith.mulf %68, %72 : vector<8x8xf32>
    %cst_25 = arith.constant dense<0.000000e+00> : vector<8x8xf32>
    %74 = tpu.matmul %73, %62, %cst_25 {dimension_numbers = #tpu.dot_dimension_numbers<[1], [0], [0], [1], [0, 0, 1, 1], [], []>} : vector<8x8xf32>, vector<8x8xf32>, vector<8x8xf32> -> vector<8x8xf32>
    %75 = tpu.concatenate %23, %40, %57, %74 in 1 : vector<8x8xf32>, vector<8x8xf32>, vector<8x8xf32>, vector<8x8xf32> -> vector<8x32xf32>
    %c0_26 = arith.constant 0 : index
    %c0_27 = arith.constant 0 : index
    %76 = vector.load %arg4[%c0_26, %c0_27] : memref<32x32xf32, #tpu.memory_space<vmem>>, vector<32x32xf32>
    %cst_28 = arith.constant dense<0.000000e+00> : vector<8x32xf32>
    %77 = tpu.matmul %75, %76, %cst_28 {dimension_numbers = #tpu.dot_dimension_numbers<[1], [0], [0], [1], [0, 0, 1, 1], [], []>} : vector<8x32xf32>, vector<32x32xf32>, vector<8x32xf32> -> vector<8x32xf32>
    %c0_29 = arith.constant 0 : index
    %c0_30 = arith.constant 0 : index
    %78 = vector.load %arg5[%c0_29, %c0_30] : memref<1x32xf32, #tpu.memory_space<vmem>>, vector<1x32xf32>
    %79 = vector.broadcast %78 : vector<1x32xf32> to vector<8x32xf32>
    %80 = arith.addf %77, %79 : vector<8x32xf32>
    %81 = arith.addf %1, %80 : vector<8x32xf32>
    %c0_31 = arith.constant 0 : index
    %c0_32 = arith.constant 0 : index
    %82 = vector.load %arg10[%c0_31, %c0_32] : memref<1x32xf32, #tpu.memory_space<vmem>>, vector<1x32xf32>
    %c0_33 = arith.constant 0 : index
    %c0_34 = arith.constant 0 : index
    %83 = vector.load %arg11[%c0_33, %c0_34] : memref<1x32xf32, #tpu.memory_space<vmem>>, vector<1x32xf32>
    %cst_35 = arith.constant dense<0.000000e+00> : vector<8xf32>
    %84 = vector.multi_reduction <add>, %81, %cst_35 [1] : vector<8x32xf32> to vector<8xf32>
    %85 = vector.shape_cast %84 : vector<8xf32> to vector<8x1xf32>
    %cst_36 = arith.constant 3.200000e+01 : f32
    %86 = vector.broadcast %cst_36 : f32 to vector<8x1xf32>
    %87 = arith.divf %85, %86 : vector<8x1xf32>
    %88 = vector.broadcast %87 : vector<8x1xf32> to vector<8x32xf32>
    %89 = arith.subf %81, %88 : vector<8x32xf32>
    %90 = arith.mulf %89, %89 : vector<8x32xf32>
    %cst_37 = arith.constant dense<0.000000e+00> : vector<8xf32>
    %91 = vector.multi_reduction <add>, %90, %cst_37 [1] : vector<8x32xf32> to vector<8xf32>
    %92 = vector.shape_cast %91 : vector<8xf32> to vector<8x1xf32>
    %cst_38 = arith.constant 3.200000e+01 : f32
    %93 = vector.broadcast %cst_38 : f32 to vector<8x1xf32>
    %94 = arith.divf %92, %93 : vector<8x1xf32>
    %95 = vector.broadcast %87 : vector<8x1xf32> to vector<8x32xf32>
    %96 = arith.subf %81, %95 : vector<8x32xf32>
    %cst_39 = arith.constant 9.99999974E-6 : f32
    %97 = vector.broadcast %cst_39 : f32 to vector<8x1xf32>
    %98 = arith.addf %94, %97 : vector<8x1xf32>
    %99 = math.rsqrt %98 : vector<8x1xf32>
    %100 = vector.broadcast %99 : vector<8x1xf32> to vector<8x32xf32>
    %101 = arith.mulf %96, %100 : vector<8x32xf32>
    %102 = vector.broadcast %82 : vector<1x32xf32> to vector<8x32xf32>
    %103 = arith.mulf %101, %102 : vector<8x32xf32>
    %104 = vector.broadcast %83 : vector<1x32xf32> to vector<8x32xf32>
    %105 = arith.addf %103, %104 : vector<8x32xf32>
    %c0_40 = arith.constant 0 : index
    %c0_41 = arith.constant 0 : index
    %106 = vector.load %arg6[%c0_40, %c0_41] : memref<32x64xf32, #tpu.memory_space<vmem>>, vector<32x64xf32>
    %cst_42 = arith.constant dense<0.000000e+00> : vector<8x64xf32>
    %107 = tpu.matmul %105, %106, %cst_42 {dimension_numbers = #tpu.dot_dimension_numbers<[1], [0], [0], [1], [0, 0, 1, 1], [], []>} : vector<8x32xf32>, vector<32x64xf32>, vector<8x64xf32> -> vector<8x64xf32>
    %c0_43 = arith.constant 0 : index
    %c0_44 = arith.constant 0 : index
    %108 = vector.load %arg7[%c0_43, %c0_44] : memref<1x64xf32, #tpu.memory_space<vmem>>, vector<1x64xf32>
    %109 = vector.broadcast %108 : vector<1x64xf32> to vector<8x64xf32>
    %110 = arith.addf %107, %109 : vector<8x64xf32>
    %cst_45 = arith.constant 0.000000e+00 : f32
    %111 = vector.broadcast %cst_45 : f32 to vector<8x64xf32>
    %112 = arith.maximumf %110, %111 : vector<8x64xf32>
    %c0_46 = arith.constant 0 : index
    %c0_47 = arith.constant 0 : index
    %113 = vector.load %arg8[%c0_46, %c0_47] : memref<64x32xf32, #tpu.memory_space<vmem>>, vector<64x32xf32>
    %cst_48 = arith.constant dense<0.000000e+00> : vector<8x32xf32>
    %114 = tpu.matmul %112, %113, %cst_48 {dimension_numbers = #tpu.dot_dimension_numbers<[1], [0], [0], [1], [0, 0, 1, 1], [], []>} : vector<8x64xf32>, vector<64x32xf32>, vector<8x32xf32> -> vector<8x32xf32>
    %c0_49 = arith.constant 0 : index
    %c0_50 = arith.constant 0 : index
    %115 = vector.load %arg9[%c0_49, %c0_50] : memref<1x32xf32, #tpu.memory_space<vmem>>, vector<1x32xf32>
    %116 = vector.broadcast %115 : vector<1x32xf32> to vector<8x32xf32>
    %117 = arith.addf %114, %116 : vector<8x32xf32>
    %118 = arith.addf %105, %117 : vector<8x32xf32>
    %c0_51 = arith.constant 0 : index
    %c0_52 = arith.constant 0 : index
    %119 = vector.load %arg12[%c0_51, %c0_52] : memref<1x32xf32, #tpu.memory_space<vmem>>, vector<1x32xf32>
    %c0_53 = arith.constant 0 : index
    %c0_54 = arith.constant 0 : index
    %120 = vector.load %arg13[%c0_53, %c0_54] : memref<1x32xf32, #tpu.memory_space<vmem>>, vector<1x32xf32>
    %cst_55 = arith.constant dense<0.000000e+00> : vector<8xf32>
    %121 = vector.multi_reduction <add>, %118, %cst_55 [1] : vector<8x32xf32> to vector<8xf32>
    %122 = vector.shape_cast %121 : vector<8xf32> to vector<8x1xf32>
    %cst_56 = arith.constant 3.200000e+01 : f32
    %123 = vector.broadcast %cst_56 : f32 to vector<8x1xf32>
    %124 = arith.divf %122, %123 : vector<8x1xf32>
    %125 = vector.broadcast %124 : vector<8x1xf32> to vector<8x32xf32>
    %126 = arith.subf %118, %125 : vector<8x32xf32>
    %127 = arith.mulf %126, %126 : vector<8x32xf32>
    %cst_57 = arith.constant dense<0.000000e+00> : vector<8xf32>
    %128 = vector.multi_reduction <add>, %127, %cst_57 [1] : vector<8x32xf32> to vector<8xf32>
    %129 = vector.shape_cast %128 : vector<8xf32> to vector<8x1xf32>
    %cst_58 = arith.constant 3.200000e+01 : f32
    %130 = vector.broadcast %cst_58 : f32 to vector<8x1xf32>
    %131 = arith.divf %129, %130 : vector<8x1xf32>
    %132 = vector.broadcast %124 : vector<8x1xf32> to vector<8x32xf32>
    %133 = arith.subf %118, %132 : vector<8x32xf32>
    %cst_59 = arith.constant 9.99999974E-6 : f32
    %134 = vector.broadcast %cst_59 : f32 to vector<8x1xf32>
    %135 = arith.addf %131, %134 : vector<8x1xf32>
    %136 = math.rsqrt %135 : vector<8x1xf32>
    %137 = vector.broadcast %136 : vector<8x1xf32> to vector<8x32xf32>
    %138 = arith.mulf %133, %137 : vector<8x32xf32>
    %139 = vector.broadcast %119 : vector<1x32xf32> to vector<8x32xf32>
    %140 = arith.mulf %138, %139 : vector<8x32xf32>
    %141 = vector.broadcast %120 : vector<1x32xf32> to vector<8x32xf32>
    %142 = arith.addf %140, %141 : vector<8x32xf32>
    %c0_60 = arith.constant 0 : index
    %c0_61 = arith.constant 0 : index
    %c0_62 = arith.constant 0 : index
    %143 = vector.load %arg14[%c0_60, %c0_61, %c0_62] : memref<1x8x32xf32, #tpu.memory_space<vmem>>, vector<1x8x32xf32>
    %144 = vector.shape_cast %143 : vector<1x8x32xf32> to vector<8x32xf32>
    %145 = vector.shape_cast %142 : vector<8x32xf32> to vector<1x8x32xf32>
    tpu.vector_store %arg14[%c0_60, %c0_61, %c0_62], %145 {strides = array<i32>} : memref<1x8x32xf32, #tpu.memory_space<vmem>>, vector<1x8x32xf32>,
    return
  }
  func.func @transform_0(%arg0: i32) -> (i32, i32, i32) {
    %c0_i32 = arith.constant 0 : i32
    %c0_i32_0 = arith.constant 0 : i32
    %c0_i32_1 = arith.constant 0 : i32
    return %arg0, %c0_i32, %c0_i32_0 : i32, i32, i32
  }
  func.func @transform_1(%arg0: i32) -> (i32, i32) {
    %c0_i32 = arith.constant 0 : i32
    %c0_i32_0 = arith.constant 0 : i32
    %c0_i32_1 = arith.constant 0 : i32
    return %c0_i32, %c0_i32_0 : i32, i32
  }
  func.func @transform_2(%arg0: i32) -> (i32, i32) {
    %c0_i32 = arith.constant 0 : i32
    %c0_i32_0 = arith.constant 0 : i32
    %c0_i32_1 = arith.constant 0 : i32
    return %c0_i32, %c0_i32_0 : i32, i32
  }
  func.func @transform_3(%arg0: i32) -> (i32, i32) {
    %c0_i32 = arith.constant 0 : i32
    %c0_i32_0 = arith.constant 0 : i32
    %c0_i32_1 = arith.constant 0 : i32
    return %c0_i32, %c0_i32_0 : i32, i32
  }
  func.func @transform_4(%arg0: i32) -> (i32, i32) {
    %c0_i32 = arith.constant 0 : i32
    %c0_i32_0 = arith.constant 0 : i32
    %c0_i32_1 = arith.constant 0 : i32
    return %c0_i32, %c0_i32_0 : i32, i32
  }
  func.func @transform_5(%arg0: i32) -> (i32, i32) {
    %c0_i32 = arith.constant 0 : i32
    %c0_i32_0 = arith.constant 0 : i32
    %c0_i32_1 = arith.constant 0 : i32
    return %c0_i32, %c0_i32_0 : i32, i32
  }
  func.func @transform_6(%arg0: i32) -> (i32, i32) {
    %c0_i32 = arith.constant 0 : i32
    %c0_i32_0 = arith.constant 0 : i32
    %c0_i32_1 = arith.constant 0 : i32
    return %c0_i32, %c0_i32_0 : i32, i32
  }
  func.func @transform_7(%arg0: i32) -> (i32, i32) {
    %c0_i32 = arith.constant 0 : i32
    %c0_i32_0 = arith.constant 0 : i32
    %c0_i32_1 = arith.constant 0 : i32
    return %c0_i32, %c0_i32_0 : i32, i32
  }
  func.func @transform_8(%arg0: i32) -> (i32, i32) {
    %c0_i32 = arith.constant 0 : i32
    %c0_i32_0 = arith.constant 0 : i32
    %c0_i32_1 = arith.constant 0 : i32
    return %c0_i32, %c0_i32_0 : i32, i32
  }
  func.func @transform_9(%arg0: i32) -> (i32, i32) {
    %c0_i32 = arith.constant 0 : i32
    %c0_i32_0 = arith.constant 0 : i32
    %c0_i32_1 = arith.constant 0 : i32
    return %c0_i32, %c0_i32_0 : i32, i32
  }
  func.func @transform_10(%arg0: i32) -> (i32, i32) {
    %c0_i32 = arith.constant 0 : i32
    %c0_i32_0 = arith.constant 0 : i32
    %c0_i32_1 = arith.constant 0 : i32
    return %c0_i32, %c0_i32_0 : i32, i32
  }
  func.func @transform_11(%arg0: i32) -> (i32, i32) {
    %c0_i32 = arith.constant 0 : i32
    %c0_i32_0 = arith.constant 0 : i32
    %c0_i32_1 = arith.constant 0 : i32
    return %c0_i32, %c0_i32_0 : i32, i32
  }
  func.func @transform_12(%arg0: i32) -> (i32, i32) {
    %c0_i32 = arith.constant 0 : i32
    %c0_i32_0 = arith.constant 0 : i32
    %c0_i32_1 = arith.constant 0 : i32
    return %c0_i32, %c0_i32_0 : i32, i32
  }
  func.func @transform_13(%arg0: i32) -> (i32, i32, i32) {
    %c0_i32 = arith.constant 0 : i32
    %c0_i32_0 = arith.constant 0 : i32
    %c0_i32_1 = arith.constant 0 : i32
    return %arg0, %c0_i32, %c0_i32_0 : i32, i32, i32
  }
}

module attributes {stable_mosaic.version = 11 : i64} {
  func.func @_encoder_layer_kernel(%arg0: i32, %arg1: memref<1x8x32xf32, #tpu.memory_space<vmem>>, %arg2: memref<32x96xf32, #tpu.memory_space<vmem>>, %arg3: memref<1x96xf32, #tpu.memory_space<vmem>>, %arg4: memref<32x32xf32, #tpu.memory_space<vmem>>, %arg5: memref<1x32xf32, #tpu.memory_space<vmem>>, %arg6: memref<32x64xf32, #tpu.memory_space<vmem>>, %arg7: memref<1x64xf32, #tpu.memory_space<vmem>>, %arg8: memref<64x32xf32, #tpu.memory_space<vmem>>, %arg9: memref<1x32xf32, #tpu.memory_space<vmem>>, %arg10: memref<1x32xf32, #tpu.memory_space<vmem>>, %arg11: memref<1x32xf32, #tpu.memory_space<vmem>>, %arg12: memref<1x32xf32, #tpu.memory_space<vmem>>, %arg13: memref<1x32xf32, #tpu.memory_space<vmem>>, %arg14: memref<1x8x32xf32, #tpu.memory_space<vmem>>) attributes {dimension_semantics = [#tpu.dimension_semantics<parallel>], iteration_bounds = array<i64: 2>, scalar_prefetch = 0 : i64, scratch_operands = 0 : i64, tpu.core_type = #tpu.core_type<tc>, window_params = [{transform_indices = @transform_0, window_bounds = array<i64: 1, 8, 32>}, {pipeline_mode = #tpu.pipeline_mode<synchronous>, transform_indices = @transform_1, window_bounds = array<i64: 32, 96>}, {pipeline_mode = #tpu.pipeline_mode<synchronous>, transform_indices = @transform_2, window_bounds = array<i64: 1, 96>}, {pipeline_mode = #tpu.pipeline_mode<synchronous>, transform_indices = @transform_3, window_bounds = array<i64: 32, 32>}, {pipeline_mode = #tpu.pipeline_mode<synchronous>, transform_indices = @transform_4, window_bounds = array<i64: 1, 32>}, {pipeline_mode = #tpu.pipeline_mode<synchronous>, transform_indices = @transform_5, window_bounds = array<i64: 32, 64>}, {pipeline_mode = #tpu.pipeline_mode<synchronous>, transform_indices = @transform_6, window_bounds = array<i64: 1, 64>}, {pipeline_mode = #tpu.pipeline_mode<synchronous>, transform_indices = @transform_7, window_bounds = array<i64: 64, 32>}, {pipeline_mode = #tpu.pipeline_mode<synchronous>, transform_indices = @transform_8, window_bounds = array<i64: 1, 32>}, {pipeline_mode = #tpu.pipeline_mode<synchronous>, transform_indices = @transform_9, window_bounds = array<i64: 1, 32>}, {pipeline_mode = #tpu.pipeline_mode<synchronous>, transform_indices = @transform_10, window_bounds = array<i64: 1, 32>}, {pipeline_mode = #tpu.pipeline_mode<synchronous>, transform_indices = @transform_11, window_bounds = array<i64: 1, 32>}, {pipeline_mode = #tpu.pipeline_mode<synchronous>, transform_indices = @transform_12, window_bounds = array<i64: 1, 32>}, {transform_indices = @transform_13, window_bounds = array<i64: 1, 8, 32>}]} {
    %c0 = arith.constant 0 : index
    %c0_0 = arith.constant 0 : index
    %c0_1 = arith.constant 0 : index
    %0 = vector.load %arg1[%c0, %c0_0, %c0_1] : memref<1x8x32xf32, #tpu.memory_space<vmem>>, vector<1x8x32xf32>
    %1 = vector.shape_cast %0 : vector<1x8x32xf32> to vector<8x32xf32>
    %c0_2 = arith.constant 0 : index
    %c0_3 = arith.constant 0 : index
    %2 = vector.load %arg2[%c0_2, %c0_3] : memref<32x96xf32, #tpu.memory_space<vmem>>, vector<32x96xf32>
    %cst = arith.constant dense<0.000000e+00> : vector<8x96xf32>
    %3 = tpu.matmul %1, %2, %cst {dimension_numbers = #tpu.dot_dimension_numbers<[1], [0], [0], [1], [0, 0, 1, 1], [], []>} : vector<8x32xf32>, vector<32x96xf32>, vector<8x96xf32> -> vector<8x96xf32>
    %c0_4 = arith.constant 0 : index
    %c0_5 = arith.constant 0 : index
    %4 = vector.load %arg3[%c0_4, %c0_5] : memref<1x96xf32, #tpu.memory_space<vmem>>, vector<1x96xf32>
    %5 = vector.broadcast %4 : vector<1x96xf32> to vector<8x96xf32>
    %6 = arith.addf %3, %5 : vector<8x96xf32>
    %7 = vector.extract_strided_slice %6 {offsets = [0, 0], sizes = [8, 8], strides = [1, 1]} : vector<8x96xf32> to vector<8x8xf32>
    %cst_6 = arith.constant 0.353553385 : f32
    %8 = vector.broadcast %cst_6 : f32 to vector<8x8xf32>
    %9 = arith.mulf %7, %8 : vector<8x8xf32>
    %10 = vector.extract_strided_slice %6 {offsets = [0, 32], sizes = [8, 8], strides = [1, 1]} : vector<8x96xf32> to vector<8x8xf32>
    %11 = vector.extract_strided_slice %6 {offsets = [0, 64], sizes = [8, 8], strides = [1, 1]} : vector<8x96xf32> to vector<8x8xf32>
    %cst_7 = arith.constant dense<0.000000e+00> : vector<8x8xf32>
    %12 = tpu.matmul %9, %10, %cst_7 {dimension_numbers = #tpu.dot_dimension_numbers<[1], [1], [0], [0], [0, 0, 1, 0], [], []>} : vector<8x8xf32>, vector<8x8xf32>, vector<8x8xf32> -> vector<8x8xf32>
    %cst_8 = arith.constant dense<0xFF800000> : vector<8xf32>
    %13 = vector.multi_reduction <maximumf>, %12, %cst_8 [1] : vector<8x8xf32> to vector<8xf32>
    %14 = vector.shape_cast %13 : vector<8xf32> to vector<8x1xf32>
    %15 = vector.broadcast %14 : vector<8x1xf32> to vector<8x8xf32>
    %16 = arith.subf %12, %15 : vector<8x8xf32>
    %17 = math.exp %16 : vector<8x8xf32>
    %cst_9 = arith.constant dense<0.000000e+00> : vector<8xf32>
    %18 = vector.multi_reduction <add>, %17, %cst_9 [1] : vector<8x8xf32> to vector<8xf32>
    %19 = vector.shape_cast %18 : vector<8xf32> to vector<8x1xf32>
    %20 = tpu.reciprocal %19 {approx = true} : vector<8x1xf32> -> vector<8x1xf32>
    %21 = vector.broadcast %20 : vector<8x1xf32> to vector<8x8xf32>
    %22 = arith.mulf %17, %21 : vector<8x8xf32>
    %cst_10 = arith.constant dense<0.000000e+00> : vector<8x8xf32>
    %23 = tpu.matmul %22, %11, %cst_10 {dimension_numbers = #tpu.dot_dimension_numbers<[1], [0], [0], [1], [0, 0, 1, 1], [], []>} : vector<8x8xf32>, vector<8x8xf32>, vector<8x8xf32> -> vector<8x8xf32>
    %24 = vector.extract_strided_slice %6 {offsets = [0, 8], sizes = [8, 8], strides = [1, 1]} : vector<8x96xf32> to vector<8x8xf32>
    %cst_11 = arith.constant 0.353553385 : f32
    %25 = vector.broadcast %cst_11 : f32 to vector<8x8xf32>
    %26 = arith.mulf %24, %25 : vector<8x8xf32>
    %27 = vector.extract_strided_slice %6 {offsets = [0, 40], sizes = [8, 8], strides = [1, 1]} : vector<8x96xf32> to vector<8x8xf32>
    %28 = vector.extract_strided_slice %6 {offsets = [0, 72], sizes = [8, 8], strides = [1, 1]} : vector<8x96xf32> to vector<8x8xf32>
    %cst_12 = arith.constant dense<0.000000e+00> : vector<8x8xf32>
    %29 = tpu.matmul %26, %27, %cst_12 {dimension_numbers = #tpu.dot_dimension_numbers<[1], [1], [0], [0], [0, 0, 1, 0], [], []>} : vector<8x8xf32>, vector<8x8xf32>, vector<8x8xf32> -> vector<8x8xf32>
    %cst_13 = arith.constant dense<0xFF800000> : vector<8xf32>
    %30 = vector.multi_reduction <maximumf>, %29, %cst_13 [1] : vector<8x8xf32> to vector<8xf32>
    %31 = vector.shape_cast %30 : vector<8xf32> to vector<8x1xf32>
    %32 = vector.broadcast %31 : vector<8x1xf32> to vector<8x8xf32>
    %33 = arith.subf %29, %32 : vector<8x8xf32>
    %34 = math.exp %33 : vector<8x8xf32>
    %cst_14 = arith.constant dense<0.000000e+00> : vector<8xf32>
    %35 = vector.multi_reduction <add>, %34, %cst_14 [1] : vector<8x8xf32> to vector<8xf32>
    %36 = vector.shape_cast %35 : vector<8xf32> to vector<8x1xf32>
    %37 = tpu.reciprocal %36 {approx = true} : vector<8x1xf32> -> vector<8x1xf32>
    %38 = vector.broadcast %37 : vector<8x1xf32> to vector<8x8xf32>
    %39 = arith.mulf %34, %38 : vector<8x8xf32>
    %cst_15 = arith.constant dense<0.000000e+00> : vector<8x8xf32>
    %40 = tpu.matmul %39, %28, %cst_15 {dimension_numbers = #tpu.dot_dimension_numbers<[1], [0], [0], [1], [0, 0, 1, 1], [], []>} : vector<8x8xf32>, vector<8x8xf32>, vector<8x8xf32> -> vector<8x8xf32>
    %41 = vector.extract_strided_slice %6 {offsets = [0, 16], sizes = [8, 8], strides = [1, 1]} : vector<8x96xf32> to vector<8x8xf32>
    %cst_16 = arith.constant 0.353553385 : f32
    %42 = vector.broadcast %cst_16 : f32 to vector<8x8xf32>
    %43 = arith.mulf %41, %42 : vector<8x8xf32>
    %44 = vector.extract_strided_slice %6 {offsets = [0, 48], sizes = [8, 8], strides = [1, 1]} : vector<8x96xf32> to vector<8x8xf32>
    %45 = vector.extract_strided_slice %6 {offsets = [0, 80], sizes = [8, 8], strides = [1, 1]} : vector<8x96xf32> to vector<8x8xf32>
    %cst_17 = arith.constant dense<0.000000e+00> : vector<8x8xf32>
    %46 = tpu.matmul %43, %44, %cst_17 {dimension_numbers = #tpu.dot_dimension_numbers<[1], [1], [0], [0], [0, 0, 1, 0], [], []>} : vector<8x8xf32>, vector<8x8xf32>, vector<8x8xf32> -> vector<8x8xf32>
    %cst_18 = arith.constant dense<0xFF800000> : vector<8xf32>
    %47 = vector.multi_reduction <maximumf>, %46, %cst_18 [1] : vector<8x8xf32> to vector<8xf32>
    %48 = vector.shape_cast %47 : vector<8xf32> to vector<8x1xf32>
    %49 = vector.broadcast %48 : vector<8x1xf32> to vector<8x8xf32>
    %50 = arith.subf %46, %49 : vector<8x8xf32>
    %51 = math.exp %50 : vector<8x8xf32>
    %cst_19 = arith.constant dense<0.000000e+00> : vector<8xf32>
    %52 = vector.multi_reduction <add>, %51, %cst_19 [1] : vector<8x8xf32> to vector<8xf32>
    %53 = vector.shape_cast %52 : vector<8xf32> to vector<8x1xf32>
    %54 = tpu.reciprocal %53 {approx = true} : vector<8x1xf32> -> vector<8x1xf32>
    %55 = vector.broadcast %54 : vector<8x1xf32> to vector<8x8xf32>
    %56 = arith.mulf %51, %55 : vector<8x8xf32>
    %cst_20 = arith.constant dense<0.000000e+00> : vector<8x8xf32>
    %57 = tpu.matmul %56, %45, %cst_20 {dimension_numbers = #tpu.dot_dimension_numbers<[1], [0], [0], [1], [0, 0, 1, 1], [], []>} : vector<8x8xf32>, vector<8x8xf32>, vector<8x8xf32> -> vector<8x8xf32>
    %58 = vector.extract_strided_slice %6 {offsets = [0, 24], sizes = [8, 8], strides = [1, 1]} : vector<8x96xf32> to vector<8x8xf32>
    %cst_21 = arith.constant 0.353553385 : f32
    %59 = vector.broadcast %cst_21 : f32 to vector<8x8xf32>
    %60 = arith.mulf %58, %59 : vector<8x8xf32>
    %61 = vector.extract_strided_slice %6 {offsets = [0, 56], sizes = [8, 8], strides = [1, 1]} : vector<8x96xf32> to vector<8x8xf32>
    %62 = vector.extract_strided_slice %6 {offsets = [0, 88], sizes = [8, 8], strides = [1, 1]} : vector<8x96xf32> to vector<8x8xf32>
    %cst_22 = arith.constant dense<0.000000e+00> : vector<8x8xf32>
    %63 = tpu.matmul %60, %61, %cst_22 {dimension_numbers = #tpu.dot_dimension_numbers<[1], [1], [0], [0], [0, 0, 1, 0], [], []>} : vector<8x8xf32>, vector<8x8xf32>, vector<8x8xf32> -> vector<8x8xf32>
    %cst_23 = arith.constant dense<0xFF800000> : vector<8xf32>
    %64 = vector.multi_reduction <maximumf>, %63, %cst_23 [1] : vector<8x8xf32> to vector<8xf32>
    %65 = vector.shape_cast %64 : vector<8xf32> to vector<8x1xf32>
    %66 = vector.broadcast %65 : vector<8x1xf32> to vector<8x8xf32>
    %67 = arith.subf %63, %66 : vector<8x8xf32>
    %68 = math.exp %67 : vector<8x8xf32>
    %cst_24 = arith.constant dense<0.000000e+00> : vector<8xf32>
    %69 = vector.multi_reduction <add>, %68, %cst_24 [1] : vector<8x8xf32> to vector<8xf32>
    %70 = vector.shape_cast %69 : vector<8xf32> to vector<8x1xf32>
    %71 = tpu.reciprocal %70 {approx = true} : vector<8x1xf32> -> vector<8x1xf32>
    %72 = vector.broadcast %71 : vector<8x1xf32> to vector<8x8xf32>
    %73 = arith.mulf %68, %72 : vector<8x8xf32>
    %cst_25 = arith.constant dense<0.000000e+00> : vector<8x8xf32>
    %74 = tpu.matmul %73, %62, %cst_25 {dimension_numbers = #tpu.dot_dimension_numbers<[1], [0], [0], [1], [0, 0, 1, 1], [], []>} : vector<8x8xf32>, vector<8x8xf32>, vector<8x8xf32> -> vector<8x8xf32>
    %75 = tpu.concatenate %23, %40, %57, %74 in 1 : vector<8x8xf32>, vector<8x8xf32>, vector<8x8xf32>, vector<8x8xf32> -> vector<8x32xf32>
    %c0_26 = arith.constant 0 : index
    %c0_27 = arith.constant 0 : index
    %76 = vector.load %arg4[%c0_26, %c0_27] : memref<32x32xf32, #tpu.memory_space<vmem>>, vector<32x32xf32>
    %cst_28 = arith.constant dense<0.000000e+00> : vector<8x32xf32>
    %77 = tpu.matmul %75, %76, %cst_28 {dimension_numbers = #tpu.dot_dimension_numbers<[1], [0], [0], [1], [0, 0, 1, 1], [], []>} : vector<8x32xf32>, vector<32x32xf32>, vector<8x32xf32> -> vector<8x32xf32>
    %c0_29 = arith.constant 0 : index
    %c0_30 = arith.constant 0 : index
    %78 = vector.load %arg5[%c0_29, %c0_30] : memref<1x32xf32, #tpu.memory_space<vmem>>, vector<1x32xf32>
    %79 = vector.broadcast %78 : vector<1x32xf32> to vector<8x32xf32>
    %80 = arith.addf %77, %79 : vector<8x32xf32>
    %81 = arith.addf %1, %80 : vector<8x32xf32>
    %c0_31 = arith.constant 0 : index
    %c0_32 = arith.constant 0 : index
    %82 = vector.load %arg10[%c0_31, %c0_32] : memref<1x32xf32, #tpu.memory_space<vmem>>, vector<1x32xf32>
    %c0_33 = arith.constant 0 : index
    %c0_34 = arith.constant 0 : index
    %83 = vector.load %arg11[%c0_33, %c0_34] : memref<1x32xf32, #tpu.memory_space<vmem>>, vector<1x32xf32>
    %cst_35 = arith.constant dense<0.000000e+00> : vector<8xf32>
    %84 = vector.multi_reduction <add>, %81, %cst_35 [1] : vector<8x32xf32> to vector<8xf32>
    %85 = vector.shape_cast %84 : vector<8xf32> to vector<8x1xf32>
    %cst_36 = arith.constant 3.200000e+01 : f32
    %86 = vector.broadcast %cst_36 : f32 to vector<8x1xf32>
    %87 = arith.divf %85, %86 : vector<8x1xf32>
    %88 = vector.broadcast %87 : vector<8x1xf32> to vector<8x32xf32>
    %89 = arith.subf %81, %88 : vector<8x32xf32>
    %90 = arith.mulf %89, %89 : vector<8x32xf32>
    %cst_37 = arith.constant dense<0.000000e+00> : vector<8xf32>
    %91 = vector.multi_reduction <add>, %90, %cst_37 [1] : vector<8x32xf32> to vector<8xf32>
    %92 = vector.shape_cast %91 : vector<8xf32> to vector<8x1xf32>
    %cst_38 = arith.constant 3.200000e+01 : f32
    %93 = vector.broadcast %cst_38 : f32 to vector<8x1xf32>
    %94 = arith.divf %92, %93 : vector<8x1xf32>
    %95 = vector.broadcast %87 : vector<8x1xf32> to vector<8x32xf32>
    %96 = arith.subf %81, %95 : vector<8x32xf32>
    %cst_39 = arith.constant 9.99999974E-6 : f32
    %97 = vector.broadcast %cst_39 : f32 to vector<8x1xf32>
    %98 = arith.addf %94, %97 : vector<8x1xf32>
    %99 = math.rsqrt %98 : vector<8x1xf32>
    %100 = vector.broadcast %99 : vector<8x1xf32> to vector<8x32xf32>
    %101 = arith.mulf %96, %100 : vector<8x32xf32>
    %102 = vector.broadcast %82 : vector<1x32xf32> to vector<8x32xf32>
    %103 = arith.mulf %101, %102 : vector<8x32xf32>
    %104 = vector.broadcast %83 : vector<1x32xf32> to vector<8x32xf32>
    %105 = arith.addf %103, %104 : vector<8x32xf32>
    %c0_40 = arith.constant 0 : index
    %c0_41 = arith.constant 0 : index
    %106 = vector.load %arg6[%c0_40, %c0_41] : memref<32x64xf32, #tpu.memory_space<vmem>>, vector<32x64xf32>
    %cst_42 = arith.constant dense<0.000000e+00> : vector<8x64xf32>
    %107 = tpu.matmul %105, %106, %cst_42 {dimension_numbers = #tpu.dot_dimension_numbers<[1], [0], [0], [1], [0, 0, 1, 1], [], []>} : vector<8x32xf32>, vector<32x64xf32>, vector<8x64xf32> -> vector<8x64xf32>
    %c0_43 = arith.constant 0 : index
    %c0_44 = arith.constant 0 : index
    %108 = vector.load %arg7[%c0_43, %c0_44] : memref<1x64xf32, #tpu.memory_space<vmem>>, vector<1x64xf32>
    %109 = vector.broadcast %108 : vector<1x64xf32> to vector<8x64xf32>
    %110 = arith.addf %107, %109 : vector<8x64xf32>
    %cst_45 = arith.constant 0.000000e+00 : f32
    %111 = vector.broadcast %cst_45 : f32 to vector<8x64xf32>
    %112 = arith.maximumf %110, %111 : vector<8x64xf32>
    %c0_46 = arith.constant 0 : index
    %c0_47 = arith.constant 0 : index
    %113 = vector.load %arg8[%c0_46, %c0_47] : memref<64x32xf32, #tpu.memory_space<vmem>>, vector<64x32xf32>
    %cst_48 = arith.constant dense<0.000000e+00> : vector<8x32xf32>
    %114 = tpu.matmul %112, %113, %cst_48 {dimension_numbers = #tpu.dot_dimension_numbers<[1], [0], [0], [1], [0, 0, 1, 1], [], []>} : vector<8x64xf32>, vector<64x32xf32>, vector<8x32xf32> -> vector<8x32xf32>
    %c0_49 = arith.constant 0 : index
    %c0_50 = arith.constant 0 : index
    %115 = vector.load %arg9[%c0_49, %c0_50] : memref<1x32xf32, #tpu.memory_space<vmem>>, vector<1x32xf32>
    %116 = vector.broadcast %115 : vector<1x32xf32> to vector<8x32xf32>
    %117 = arith.addf %114, %116 : vector<8x32xf32>
    %118 = arith.addf %105, %117 : vector<8x32xf32>
    %c0_51 = arith.constant 0 : index
    %c0_52 = arith.constant 0 : index
    %119 = vector.load %arg12[%c0_51, %c0_52] : memref<1x32xf32, #tpu.memory_space<vmem>>, vector<1x32xf32>
    %c0_53 = arith.constant 0 : index
    %c0_54 = arith.constant 0 : index
    %120 = vector.load %arg13[%c0_53, %c0_54] : memref<1x32xf32, #tpu.memory_space<vmem>>, vector<1x32xf32>
    %cst_55 = arith.constant dense<0.000000e+00> : vector<8xf32>
    %121 = vector.multi_reduction <add>, %118, %cst_55 [1] : vector<8x32xf32> to vector<8xf32>
    %122 = vector.shape_cast %121 : vector<8xf32> to vector<8x1xf32>
    %cst_56 = arith.constant 3.200000e+01 : f32
    %123 = vector.broadcast %cst_56 : f32 to vector<8x1xf32>
    %124 = arith.divf %122, %123 : vector<8x1xf32>
    %125 = vector.broadcast %124 : vector<8x1xf32> to vector<8x32xf32>
    %126 = arith.subf %118, %125 : vector<8x32xf32>
    %127 = arith.mulf %126, %126 : vector<8x32xf32>
    %cst_57 = arith.constant dense<0.000000e+00> : vector<8xf32>
    %128 = vector.multi_reduction <add>, %127, %cst_57 [1] : vector<8x32xf32> to vector<8xf32>
    %129 = vector.shape_cast %128 : vector<8xf32> to vector<8x1xf32>
    %cst_58 = arith.constant 3.200000e+01 : f32
    %130 = vector.broadcast %cst_58 : f32 to vector<8x1xf32>
    %131 = arith.divf %129, %130 : vector<8x1xf32>
    %132 = vector.broadcast %124 : vector<8x1xf32> to vector<8x32xf32>
    %133 = arith.subf %118, %132 : vector<8x32xf32>
    %cst_59 = arith.constant 9.99999974E-6 : f32
    %134 = vector.broadcast %cst_59 : f32 to vector<8x1xf32>
    %135 = arith.addf %131, %134 : vector<8x1xf32>
    %136 = math.rsqrt %135 : vector<8x1xf32>
    %137 = vector.broadcast %136 : vector<8x1xf32> to vector<8x32xf32>
    %138 = arith.mulf %133, %137 : vector<8x32xf32>
    %139 = vector.broadcast %119 : vector<1x32xf32> to vector<8x32xf32>
    %140 = arith.mulf %138, %139 : vector<8x32xf32>
    %141 = vector.broadcast %120 : vector<1x32xf32> to vector<8x32xf32>
    %142 = arith.addf %140, %141 : vector<8x32xf32>
    %c0_60 = arith.constant 0 : index
    %c0_61 = arith.constant 0 : index
    %c0_62 = arith.constant 0 : index
    %143 = vector.load %arg14[%c0_60, %c0_61, %c0_62] : memref<1x8x32xf32, #tpu.memory_space<vmem>>, vector<1x8x32xf32>
    %144 = vector.shape_cast %143 : vector<1x8x32xf32> to vector<8x32xf32>
    %145 = vector.shape_cast %142 : vector<8x32xf32> to vector<1x8x32xf32>
    tpu.vector_store %arg14[%c0_60, %c0_61, %c0_62], %145 {strides = array<i32>} : memref<1x8x32xf32, #tpu.memory_space<vmem>>, vector<1x8x32xf32>,
    return
  }
  func.func @transform_0(%arg0: i32) -> (i32, i32, i32) {
    %c0_i32 = arith.constant 0 : i32
    %c0_i32_0 = arith.constant 0 : i32
    %c0_i32_1 = arith.constant 0 : i32
    return %arg0, %c0_i32, %c0_i32_0 : i32, i32, i32
  }
  func.func @transform_1(%arg0: i32) -> (i32, i32) {
    %c0_i32 = arith.constant 0 : i32
    %c0_i32_0 = arith.constant 0 : i32
    %c0_i32_1 = arith.constant 0 : i32
    return %c0_i32, %c0_i32_0 : i32, i32
  }
  func.func @transform_2(%arg0: i32) -> (i32, i32) {
    %c0_i32 = arith.constant 0 : i32
    %c0_i32_0 = arith.constant 0 : i32
    %c0_i32_1 = arith.constant 0 : i32
    return %c0_i32, %c0_i32_0 : i32, i32
  }
  func.func @transform_3(%arg0: i32) -> (i32, i32) {
    %c0_i32 = arith.constant 0 : i32
    %c0_i32_0 = arith.constant 0 : i32
    %c0_i32_1 = arith.constant 0 : i32
    return %c0_i32, %c0_i32_0 : i32, i32
  }
  func.func @transform_4(%arg0: i32) -> (i32, i32) {
    %c0_i32 = arith.constant 0 : i32
    %c0_i32_0 = arith.constant 0 : i32
    %c0_i32_1 = arith.constant 0 : i32
    return %c0_i32, %c0_i32_0 : i32, i32
  }
  func.func @transform_5(%arg0: i32) -> (i32, i32) {
    %c0_i32 = arith.constant 0 : i32
    %c0_i32_0 = arith.constant 0 : i32
    %c0_i32_1 = arith.constant 0 : i32
    return %c0_i32, %c0_i32_0 : i32, i32
  }
  func.func @transform_6(%arg0: i32) -> (i32, i32) {
    %c0_i32 = arith.constant 0 : i32
    %c0_i32_0 = arith.constant 0 : i32
    %c0_i32_1 = arith.constant 0 : i32
    return %c0_i32, %c0_i32_0 : i32, i32
  }
  func.func @transform_7(%arg0: i32) -> (i32, i32) {
    %c0_i32 = arith.constant 0 : i32
    %c0_i32_0 = arith.constant 0 : i32
    %c0_i32_1 = arith.constant 0 : i32
    return %c0_i32, %c0_i32_0 : i32, i32
  }
  func.func @transform_8(%arg0: i32) -> (i32, i32) {
    %c0_i32 = arith.constant 0 : i32
    %c0_i32_0 = arith.constant 0 : i32
    %c0_i32_1 = arith.constant 0 : i32
    return %c0_i32, %c0_i32_0 : i32, i32
  }
  func.func @transform_9(%arg0: i32) -> (i32, i32) {
    %c0_i32 = arith.constant 0 : i32
    %c0_i32_0 = arith.constant 0 : i32
    %c0_i32_1 = arith.constant 0 : i32
    return %c0_i32, %c0_i32_0 : i32, i32
  }
  func.func @transform_10(%arg0: i32) -> (i32, i32) {
    %c0_i32 = arith.constant 0 : i32
    %c0_i32_0 = arith.constant 0 : i32
    %c0_i32_1 = arith.constant 0 : i32
    return %c0_i32, %c0_i32_0 : i32, i32
  }
  func.func @transform_11(%arg0: i32) -> (i32, i32) {
    %c0_i32 = arith.constant 0 : i32
    %c0_i32_0 = arith.constant 0 : i32
    %c0_i32_1 = arith.constant 0 : i32
    return %c0_i32, %c0_i32_0 : i32, i32
  }
  func.func @transform_12(%arg0: i32) -> (i32, i32) {
    %c0_i32 = arith.constant 0 : i32
    %c0_i32_0 = arith.constant 0 : i32
    %c0_i32_1 = arith.constant 0 : i32
    return %c0_i32, %c0_i32_0 : i32, i32
  }
  func.func @transform_13(%arg0: i32) -> (i32, i32, i32) {
    %c0_i32 = arith.constant 0 : i32
    %c0_i32_0 = arith.constant 0 : i32
    %c0_i32_1 = arith.constant 0 : i32
    return %arg0, %c0_i32, %c0_i32_0 : i32, i32, i32
  }
}

</mosaic_0001>

<llo_original>
// kernel: encoder_forward.2
$region0: #{encoder_forward.2}
  #allocation0 [shape = 'u32[]', space=smem, size = 0x4, offset = 0x4, fixed_abs, tag = 'smem constant byte address 0x4 - core index']
  #allocation1 [shape = 'u32[144,128]{1,0:T(1,128)}', space=vmem, size = 0x12000, scoped, tag = 'internal scratch']
  %s0 = inlined_call_operand.vmem [shape: f32[2,8,32], index: 0, kind: input, shape index: {}]
  %s1 = inlined_call_operand.vmem [shape: f32[32,96], index: 1, kind: input, shape index: {}]
  %s2 = inlined_call_operand.vmem [shape: f32[1,96], index: 2, kind: input, shape index: {}]
  %s3 = inlined_call_operand.vmem [shape: f32[32,32], index: 3, kind: input, shape index: {}]
  %s4 = inlined_call_operand.vmem [shape: f32[1,32], index: 4, kind: input, shape index: {}]
  %s5 = inlined_call_operand.vmem [shape: f32[32,64], index: 5, kind: input, shape index: {}]
  %s6 = inlined_call_operand.vmem [shape: f32[1,64], index: 6, kind: input, shape index: {}]
  %s7 = inlined_call_operand.vmem [shape: f32[64,32], index: 7, kind: input, shape index: {}]
  %s8 = inlined_call_operand.vmem [shape: f32[1,32], index: 8, kind: input, shape index: {}]
  %s9 = inlined_call_operand.vmem [shape: f32[1,32], index: 9, kind: input, shape index: {}]
  %s10 = inlined_call_operand.vmem [shape: f32[1,32], index: 10, kind: input, shape index: {}]
  %s11 = inlined_call_operand.vmem [shape: f32[1,32], index: 11, kind: input, shape index: {}]
  %s12 = inlined_call_operand.vmem [shape: f32[1,32], index: 12, kind: input, shape index: {}]
  %s13 = inlined_call_operand.vmem [shape: f32[2,8,32], index: 13, kind: output, shape index: {}]
  %s14 = sld [smem:[#allocation0]]
  $region85: #{encoder_forward.2} parent=0
    _
  %s16 = ssub.s32 1, %s14
  %s17 = scalar_select 0, %s16, %s14
  loop: start=0, step=1, limit=4
  $region2: #{encoder_forward.2} parent=0 // loop_pre_header
    _
  $region3: #{encoder_forward.2} parent=0 // loop_header
    %s19 = sphi 0, %s23
    %p20 = scmp.ge.s32.totalorder %s19, 4
    %s29 = sphi 0, %s31
    %s32 = sphi 0, %s29
    %s33 = sphi 0, %s32
    %s49 = sphi 0, %s33
    %s53 = sphi 0, %s53
    %s55 = sphi 0, %s53
    %s56 = sphi 0, %s55
    %s70 = sphi 0, %s56
    %s74 = sphi 0, %s74
    %s76 = sphi 0, %s74
    %s77 = sphi 0, %s76
    %s91 = sphi 0, %s77
    %s95 = sphi 0, %s95
    %s97 = sphi 0, %s95
    %s98 = sphi 0, %s97
    %s112 = sphi 0, %s98
    %s116 = sphi 0, %s116
    %s118 = sphi 0, %s116
    %s119 = sphi 0, %s118
    %s133 = sphi 0, %s119
    %s137 = sphi 0, %s137
    %s139 = sphi 0, %s137
    %s140 = sphi 0, %s139
    %s154 = sphi 0, %s140
    %s158 = sphi 0, %s158
    %s160 = sphi 0, %s158
    %s161 = sphi 0, %s160
    %s175 = sphi 0, %s161
    %s179 = sphi 0, %s179
    %s181 = sphi 0, %s179
    %s182 = sphi 0, %s181
    %s196 = sphi 0, %s182
    %s200 = sphi 0, %s200
    %s202 = sphi 0, %s200
    %s203 = sphi 0, %s202
    %s217 = sphi 0, %s203
    %s221 = sphi 0, %s221
    %s223 = sphi 0, %s221
    %s224 = sphi 0, %s223
    %s238 = sphi 0, %s224
    %s242 = sphi 0, %s242
    %s244 = sphi 0, %s242
    %s245 = sphi 0, %s244
    %s259 = sphi 0, %s245
    %s263 = sphi 0, %s263
    %s265 = sphi 0, %s263
    %s266 = sphi 0, %s265
    %s280 = sphi 0, %s266
    %s284 = sphi 0, %s284
    %s286 = sphi 0, %s284
    %s287 = sphi 0, %s286
    %s301 = sphi 0, %s287
    %s307 = sphi 0, %s309
    %s310 = sphi 0, %s307
    %s311 = sphi 0, %s310
    %s327 = sphi 0, %s311
  $region4: #{encoder_forward.2} parent=0 // loop_header_branch
    %22 = sbr.rel (%p20) target = $region8
  $region5: #{encoder_forward.2} parent=0 // loop_body
    %s24 = ssub.s32 %s19, 1
    %s25 = ssub.s32 %s19, 2
    %s26 = sadd.s32 %s19, 1
    %s27 = ssub.s32 %s19, %s26
    %p28 = scmp.eq.s32.totalorder %s27, 0
    %s30 = sadd.s32 %s29, 1
    %s31 = scalar_select %p28, %s29, %s30
    %p34 = pneg %p28
    %p35 = scmp.eq.s32.totalorder %s19, 1
    %p36 = por %p34, %p35
    %p37 = scmp.ne.s32.totalorder %s29, %s32
    %p38 = scmp.eq.s32.totalorder %s19, 0
    %p39 = por %p37, %p38
    %p40 = scmp.ne.s32.totalorder %s29, %s32
    %p41 = scmp.eq.s32.totalorder %s24, 1
    %p42 = por %p40, %p41
    %p43 = scmp.ne.s32.totalorder %s32, %s33
    %p44 = scmp.eq.s32.totalorder %s24, 0
    %p45 = por %p43, %p44
    %p46 = scmp.ne.s32.totalorder %s32, %s33
    %p47 = scmp.eq.s32.totalorder %s25, 1
    %p48 = por %p46, %p47
    %p50 = scmp.ne.s32.totalorder %s33, %s49
    %p51 = scmp.eq.s32.totalorder %s25, 0
    %p52 = por %p50, %p51
    %s54 = sadd.s32 %s53, 1
    %p57 = scmp.eq.s32.totalorder %s19, 1
    %p58 = scmp.ne.s32.totalorder %s53, %s55
    %p59 = scmp.eq.s32.totalorder %s19, 0
    %p60 = por %p58, %p59
    %p61 = scmp.ne.s32.totalorder %s53, %s55
    %p62 = scmp.eq.s32.totalorder %s24, 1
    %p63 = por %p61, %p62
    %p64 = scmp.ne.s32.totalorder %s55, %s56
    %p65 = scmp.eq.s32.totalorder %s24, 0
    %p66 = por %p64, %p65
    %p67 = scmp.ne.s32.totalorder %s55, %s56
    %p68 = scmp.eq.s32.totalorder %s25, 1
    %p69 = por %p67, %p68
    %p71 = scmp.ne.s32.totalorder %s56, %s70
    %p72 = scmp.eq.s32.totalorder %s25, 0
    %p73 = por %p71, %p72
    %s75 = sadd.s32 %s74, 1
    %p78 = scmp.eq.s32.totalorder %s19, 1
    %p79 = scmp.ne.s32.totalorder %s74, %s76
    %p80 = scmp.eq.s32.totalorder %s19, 0
    %p81 = por %p79, %p80
    %p82 = scmp.ne.s32.totalorder %s74, %s76
    %p83 = scmp.eq.s32.totalorder %s24, 1
    %p84 = por %p82, %p83
    %p85 = scmp.ne.s32.totalorder %s76, %s77
    %p86 = scmp.eq.s32.totalorder %s24, 0
    %p87 = por %p85, %p86
    %p88 = scmp.ne.s32.totalorder %s76, %s77
    %p89 = scmp.eq.s32.totalorder %s25, 1
    %p90 = por %p88, %p89
    %p92 = scmp.ne.s32.totalorder %s77, %s91
    %p93 = scmp.eq.s32.totalorder %s25, 0
    %p94 = por %p92, %p93
    %s96 = sadd.s32 %s95, 1
    %p99 = scmp.eq.s32.totalorder %s19, 1
    %p100 = scmp.ne.s32.totalorder %s95, %s97
    %p101 = scmp.eq.s32.totalorder %s19, 0
    %p102 = por %p100, %p101
    %p103 = scmp.ne.s32.totalorder %s95, %s97
    %p104 = scmp.eq.s32.totalorder %s24, 1
    %p105 = por %p103, %p104
    %p106 = scmp.ne.s32.totalorder %s97, %s98
    %p107 = scmp.eq.s32.totalorder %s24, 0
    %p108 = por %p106, %p107
    %p109 = scmp.ne.s32.totalorder %s97, %s98
    %p110 = scmp.eq.s32.totalorder %s25, 1
    %p111 = por %p109, %p110
    %p113 = scmp.ne.s32.totalorder %s98, %s112
    %p114 = scmp.eq.s32.totalorder %s25, 0
    %p115 = por %p113, %p114
    %s117 = sadd.s32 %s116, 1
    %p120 = scmp.eq.s32.totalorder %s19, 1
    %p121 = scmp.ne.s32.totalorder %s116, %s118
    %p122 = scmp.eq.s32.totalorder %s19, 0
    %p123 = por %p121, %p122
    %p124 = scmp.ne.s32.totalorder %s116, %s118
    %p125 = scmp.eq.s32.totalorder %s24, 1
    %p126 = por %p124, %p125
    %p127 = scmp.ne.s32.totalorder %s118, %s119
    %p128 = scmp.eq.s32.totalorder %s24, 0
    %p129 = por %p127, %p128
    %p130 = scmp.ne.s32.totalorder %s118, %s119
    %p131 = scmp.eq.s32.totalorder %s25, 1
    %p132 = por %p130, %p131
    %p134 = scmp.ne.s32.totalorder %s119, %s133
    %p135 = scmp.eq.s32.totalorder %s25, 0
    %p136 = por %p134, %p135
    %s138 = sadd.s32 %s137, 1
    %p141 = scmp.eq.s32.totalorder %s19, 1
    %p142 = scmp.ne.s32.totalorder %s137, %s139
    %p143 = scmp.eq.s32.totalorder %s19, 0
    %p144 = por %p142, %p143
    %p145 = scmp.ne.s32.totalorder %s137, %s139
    %p146 = scmp.eq.s32.totalorder %s24, 1
    %p147 = por %p145, %p146
    %p148 = scmp.ne.s32.totalorder %s139, %s140
    %p149 = scmp.eq.s32.totalorder %s24, 0
    %p150 = por %p148, %p149
    %p151 = scmp.ne.s32.totalorder %s139, %s140
    %p152 = scmp.eq.s32.totalorder %s25, 1
    %p153 = por %p151, %p152
    %p155 = scmp.ne.s32.totalorder %s140, %s154
    %p156 = scmp.eq.s32.totalorder %s25, 0
    %p157 = por %p155, %p156
    %s159 = sadd.s32 %s158, 1
    %p162 = scmp.eq.s32.totalorder %s19, 1
    %p163 = scmp.ne.s32.totalorder %s158, %s160
    %p164 = scmp.eq.s32.totalorder %s19, 0
    %p165 = por %p163, %p164
    %p166 = scmp.ne.s32.totalorder %s158, %s160
    %p167 = scmp.eq.s32.totalorder %s24, 1
    %p168 = por %p166, %p167
    %p169 = scmp.ne.s32.totalorder %s160, %s161
    %p170 = scmp.eq.s32.totalorder %s24, 0
    %p171 = por %p169, %p170
    %p172 = scmp.ne.s32.totalorder %s160, %s161
    %p173 = scmp.eq.s32.totalorder %s25, 1
    %p174 = por %p172, %p173
    %p176 = scmp.ne.s32.totalorder %s161, %s175
    %p177 = scmp.eq.s32.totalorder %s25, 0
    %p178 = por %p176, %p177
    %s180 = sadd.s32 %s179, 1
    %p183 = scmp.eq.s32.totalorder %s19, 1
    %p184 = scmp.ne.s32.totalorder %s179, %s181
    %p185 = scmp.eq.s32.totalorder %s19, 0
    %p186 = por %p184, %p185
    %p187 = scmp.ne.s32.totalorder %s179, %s181
    %p188 = scmp.eq.s32.totalorder %s24, 1
    %p189 = por %p187, %p188
    %p190 = scmp.ne.s32.totalorder %s181, %s182
    %p191 = scmp.eq.s32.totalorder %s24, 0
    %p192 = por %p190, %p191
    %p193 = scmp.ne.s32.totalorder %s181, %s182
    %p194 = scmp.eq.s32.totalorder %s25, 1
    %p195 = por %p193, %p194
    %p197 = scmp.ne.s32.totalorder %s182, %s196
    %p198 = scmp.eq.s32.totalorder %s25, 0
    %p199 = por %p197, %p198
    %s201 = sadd.s32 %s200, 1
    %p204 = scmp.eq.s32.totalorder %s19, 1
    %p205 = scmp.ne.s32.totalorder %s200, %s202
    %p206 = scmp.eq.s32.totalorder %s19, 0
    %p207 = por %p205, %p206
    %p208 = scmp.ne.s32.totalorder %s200, %s202
    %p209 = scmp.eq.s32.totalorder %s24, 1
    %p210 = por %p208, %p209
    %p211 = scmp.ne.s32.totalorder %s202, %s203
    %p212 = scmp.eq.s32.totalorder %s24, 0
    %p213 = por %p211, %p212
    %p214 = scmp.ne.s32.totalorder %s202, %s203
    %p215 = scmp.eq.s32.totalorder %s25, 1
    %p216 = por %p214, %p215
    %p218 = scmp.ne.s32.totalorder %s203, %s217
    %p219 = scmp.eq.s32.totalorder %s25, 0
    %p220 = por %p218, %p219
    %s222 = sadd.s32 %s221, 1
    %p225 = scmp.eq.s32.totalorder %s19, 1
    %p226 = scmp.ne.s32.totalorder %s221, %s223
    %p227 = scmp.eq.s32.totalorder %s19, 0
    %p228 = por %p226, %p227
    %p229 = scmp.ne.s32.totalorder %s221, %s223
    %p230 = scmp.eq.s32.totalorder %s24, 1
    %p231 = por %p229, %p230
    %p232 = scmp.ne.s32.totalorder %s223, %s224
    %p233 = scmp.eq.s32.totalorder %s24, 0
    %p234 = por %p232, %p233
    %p235 = scmp.ne.s32.totalorder %s223, %s224
    %p236 = scmp.eq.s32.totalorder %s25, 1
    %p237 = por %p235, %p236
    %p239 = scmp.ne.s32.totalorder %s224, %s238
    %p240 = scmp.eq.s32.totalorder %s25, 0
    %p241 = por %p239, %p240
    %s243 = sadd.s32 %s242, 1
    %p246 = scmp.eq.s32.totalorder %s19, 1
    %p247 = scmp.ne.s32.totalorder %s242, %s244
    %p248 = scmp.eq.s32.totalorder %s19, 0
    %p249 = por %p247, %p248
    %p250 = scmp.ne.s32.totalorder %s242, %s244
    %p251 = scmp.eq.s32.totalorder %s24, 1
    %p252 = por %p250, %p251
    %p253 = scmp.ne.s32.totalorder %s244, %s245
    %p254 = scmp.eq.s32.totalorder %s24, 0
    %p255 = por %p253, %p254
    %p256 = scmp.ne.s32.totalorder %s244, %s245
    %p257 = scmp.eq.s32.totalorder %s25, 1
    %p258 = por %p256, %p257
    %p260 = scmp.ne.s32.totalorder %s245, %s259
    %p261 = scmp.eq.s32.totalorder %s25, 0
    %p262 = por %p260, %p261
    %s264 = sadd.s32 %s263, 1
    %p267 = scmp.eq.s32.totalorder %s19, 1
    %p268 = scmp.ne.s32.totalorder %s263, %s265
    %p269 = scmp.eq.s32.totalorder %s19, 0
    %p270 = por %p268, %p269
    %p271 = scmp.ne.s32.totalorder %s263, %s265
    %p272 = scmp.eq.s32.totalorder %s24, 1
    %p273 = por %p271, %p272
    %p274 = scmp.ne.s32.totalorder %s265, %s266
    %p275 = scmp.eq.s32.totalorder %s24, 0
    %p276 = por %p274, %p275
    %p277 = scmp.ne.s32.totalorder %s265, %s266
    %p278 = scmp.eq.s32.totalorder %s25, 1
    %p279 = por %p277, %p278
    %p281 = scmp.ne.s32.totalorder %s266, %s280
    %p282 = scmp.eq.s32.totalorder %s25, 0
    %p283 = por %p281, %p282
    %s285 = sadd.s32 %s284, 1
    %p288 = scmp.eq.s32.totalorder %s19, 1
    %p289 = scmp.ne.s32.totalorder %s284, %s286
    %p290 = scmp.eq.s32.totalorder %s19, 0
    %p291 = por %p289, %p290
    %p292 = scmp.ne.s32.totalorder %s284, %s286
    %p293 = scmp.eq.s32.totalorder %s24, 1
    %p294 = por %p292, %p293
    %p295 = scmp.ne.s32.totalorder %s286, %s287
    %p296 = scmp.eq.s32.totalorder %s24, 0
    %p297 = por %p295, %p296
    %p298 = scmp.ne.s32.totalorder %s286, %s287
    %p299 = scmp.eq.s32.totalorder %s25, 1
    %p300 = por %p298, %p299
    %p302 = scmp.ne.s32.totalorder %s287, %s301
    %p303 = scmp.eq.s32.totalorder %s25, 0
    %p304 = por %p302, %p303
    %s305 = ssub.s32 %s19, %s26
    %p306 = scmp.eq.s32.totalorder %s305, 0
    %s308 = sadd.s32 %s307, 1
    %s309 = scalar_select %p306, %s307, %s308
    %p312 = pneg %p306
    %p313 = scmp.eq.s32.totalorder %s19, 1
    %p314 = por %p312, %p313
    %p315 = scmp.ne.s32.totalorder %s307, %s310
    %p316 = scmp.eq.s32.totalorder %s19, 0
    %p317 = por %p315, %p316
    %p318 = scmp.ne.s32.totalorder %s307, %s310
    %p319 = scmp.eq.s32.totalorder %s24, 1
    %p320 = por %p318, %p319
    %p321 = scmp.ne.s32.totalorder %s310, %s311
    %p322 = scmp.eq.s32.totalorder %s24, 0
    %p323 = por %p321, %p322
    %p324 = scmp.ne.s32.totalorder %s310, %s311
    %p325 = scmp.eq.s32.totalorder %s25, 1
    %p326 = por %p324, %p325
    %p328 = scmp.ne.s32.totalorder %s311, %s327
    %p329 = scmp.eq.s32.totalorder %s25, 0
    %p330 = por %p328, %p329
    %p331 = scmp.le.s32.totalorder 1, %s19
    %p332 = scmp.lt.s32.totalorder %s19, 3
    %p333 = pnand %p331, %p332
    %p334 = pneg %p333
    // Predicated region
    $region9: #{encoder_forward.2} parent=5 // pred_check
      _
    $region10: #{encoder_forward.2} parent=5 // pred_check_branch
      %336 = sbr.rel (%p333) target = $region12
    $region11: #{encoder_forward.2} parent=5 // pred_region
      %s337 = ssub.s32 %s19, 1
      // Predicated region
      $region13: #{encoder_forward.2} parent=11 // pred_check
        %p338 = pneg %p66
      $region14: #{encoder_forward.2} parent=11 // pred_check_branch
        %340 = sbr.rel (%p338) target = $region16
      $region15: #{encoder_forward.2} parent=11 // pred_region
        _
      $region16: #{encoder_forward.2} parent=11 // pred_fallthru
        _
      // Predicated region
      $region17: #{encoder_forward.2} parent=11 // pred_check
        %p341 = pneg %p87
      $region18: #{encoder_forward.2} parent=11 // pred_check_branch
        %343 = sbr.rel (%p341) target = $region20
      $region19: #{encoder_forward.2} parent=11 // pred_region
        _
      $region20: #{encoder_forward.2} parent=11 // pred_fallthru
        _
      // Predicated region
      $region21: #{encoder_forward.2} parent=11 // pred_check
        %p344 = pneg %p108
      $region22: #{encoder_forward.2} parent=11 // pred_check_branch
        %346 = sbr.rel (%p344) target = $region24
      $region23: #{encoder_forward.2} parent=11 // pred_region
        _
      $region24: #{encoder_forward.2} parent=11 // pred_fallthru
        _
      // Predicated region
      $region25: #{encoder_forward.2} parent=11 // pred_check
        %p347 = pneg %p129
      $region26: #{encoder_forward.2} parent=11 // pred_check_branch
        %349 = sbr.rel (%p347) target = $region28
      $region27: #{encoder_forward.2} parent=11 // pred_region
        _
      $region28: #{encoder_forward.2} parent=11 // pred_fallthru
        _
      // Predicated region
      $region29: #{encoder_forward.2} parent=11 // pred_check
        %p350 = pneg %p150
      $region30: #{encoder_forward.2} parent=11 // pred_check_branch
        %352 = sbr.rel (%p350) target = $region32
      $region31: #{encoder_forward.2} parent=11 // pred_region
        _
      $region32: #{encoder_forward.2} parent=11 // pred_fallthru
        _
      // Predicated region
      $region33: #{encoder_forward.2} parent=11 // pred_check
        %p353 = pneg %p171
      $region34: #{encoder_forward.2} parent=11 // pred_check_branch
        %355 = sbr.rel (%p353) target = $region36
      $region35: #{encoder_forward.2} parent=11 // pred_region
        _
      $region36: #{encoder_forward.2} parent=11 // pred_fallthru
        _
      // Predicated region
      $region37: #{encoder_forward.2} parent=11 // pred_check
        %p356 = pneg %p192
      $region38: #{encoder_forward.2} parent=11 // pred_check_branch
        %358 = sbr.rel (%p356) target = $region40
      $region39: #{encoder_forward.2} parent=11 // pred_region
        _
      $region40: #{encoder_forward.2} parent=11 // pred_fallthru
        _
      // Predicated region
      $region41: #{encoder_forward.2} parent=11 // pred_check
        %p359 = pneg %p213
      $region42: #{encoder_forward.2} parent=11 // pred_check_branch
        %361 = sbr.rel (%p359) target = $region44
      $region43: #{encoder_forward.2} parent=11 // pred_region
        _
      $region44: #{encoder_forward.2} parent=11 // pred_fallthru
        _
      // Predicated region
      $region45: #{encoder_forward.2} parent=11 // pred_check
        %p362 = pneg %p234
      $region46: #{encoder_forward.2} parent=11 // pred_check_branch
        %364 = sbr.rel (%p362) target = $region48
      $region47: #{encoder_forward.2} parent=11 // pred_region
        _
      $region48: #{encoder_forward.2} parent=11 // pred_fallthru
        _
      // Predicated region
      $region49: #{encoder_forward.2} parent=11 // pred_check
        %p365 = pneg %p255
      $region50: #{encoder_forward.2} parent=11 // pred_check_branch
        %367 = sbr.rel (%p365) target = $region52
      $region51: #{encoder_forward.2} parent=11 // pred_region
        _
      $region52: #{encoder_forward.2} parent=11 // pred_fallthru
        _
      // Predicated region
      $region53: #{encoder_forward.2} parent=11 // pred_check
        %p368 = pneg %p276
      $region54: #{encoder_forward.2} parent=11 // pred_check_branch
        %370 = sbr.rel (%p368) target = $region56
      $region55: #{encoder_forward.2} parent=11 // pred_region
        _
      $region56: #{encoder_forward.2} parent=11 // pred_fallthru
        _
      // Predicated region
      $region57: #{encoder_forward.2} parent=11 // pred_check
        %p371 = pneg %p297
      $region58: #{encoder_forward.2} parent=11 // pred_check_branch
        %373 = sbr.rel (%p371) target = $region60
      $region59: #{encoder_forward.2} parent=11 // pred_region
        _
      $region60: #{encoder_forward.2} parent=11 // pred_fallthru
        _
    $region12: #{encoder_forward.2} parent=5 // pred_fallthru
      _
    %p374 = scmp.lt.s32.totalorder %s19, 2
    // Predicated region
    $region61: #{encoder_forward.2} parent=5 // pred_check
      %p375 = pneg %p374
    $region62: #{encoder_forward.2} parent=5 // pred_check_branch
      %377 = sbr.rel (%p375) target = $region64
    $region63: #{encoder_forward.2} parent=5 // pred_region
      // Predicated region
      $region65: #{encoder_forward.2} parent=63 // pred_check
        %p378 = pneg %p39
      $region66: #{encoder_forward.2} parent=63 // pred_check_branch
        %380 = sbr.rel (%p378) target = $region68
      $region67: #{encoder_forward.2} parent=63 // pred_region
        %p381 = scmp.lt.s32.totalorder %s19, 1
        %s382 = scalar_select %p381, %s19, 1
        %s383 = smul.addr %s382, 8
        %s384 = scalar_lea.vmem %s0, %s383
      $region68: #{encoder_forward.2} parent=63 // pred_fallthru
        _
    $region64: #{encoder_forward.2} parent=5 // pred_fallthru
      _
    %p385 = scmp.le.s32.totalorder 1, %s19
    %p386 = scmp.lt.s32.totalorder %s19, 3
    %p387 = pnand %p385, %p386
    %p388 = pneg %p387
    // Predicated region
    $region69: #{encoder_forward.2} parent=5 // pred_check
      _
    $region70: #{encoder_forward.2} parent=5 // pred_check_branch
      %390 = sbr.rel (%p387) target = $region72
    $region71: #{encoder_forward.2} parent=5 // pred_region
      %s391 = ssub.s32 %s19, 1
      %p392 = scmp.lt.s32.totalorder %s24, 1
      %s393 = scalar_select %p392, %s24, 1
      %s394 = smul.addr %s393, 8
      %s395 = scalar_lea.vmem %s0, %s394
      %p396 = pneg %p45
      %p397 = pneg %p42
      %p398 = pneg %p66
      %p399 = pneg %p63
      %p400 = pneg %p87
      %p401 = pneg %p84
      %p402 = pneg %p108
      %p403 = pneg %p105
      %p404 = pneg %p129
      %p405 = pneg %p126
      %p406 = pneg %p150
      %p407 = pneg %p147
      %p408 = pneg %p171
      %p409 = pneg %p168
      %p410 = pneg %p192
      %p411 = pneg %p189
      %p412 = pneg %p213
      %p413 = pneg %p210
      %p414 = pneg %p234
      %p415 = pneg %p231
      %p416 = pneg %p255
      %p417 = pneg %p252
      %p418 = pneg %p276
      %p419 = pneg %p273
      %p420 = pneg %p297
      %p421 = pneg %p294
      %p422 = pneg %p323
      %p423 = pneg %p320
      %p424 = scmp.lt.s32.totalorder %s24, 1
      %s425 = scalar_select %p424, %s24, 1
      %s426 = smul.addr %s425, 8
      %s427 = scalar_lea.vmem %s13, %s426
      %p428 = scmp.lt.s32.totalorder %s24, 1
      %s429 = scalar_select %p428, %s24, 1
      %s430 = smul.addr %s429, 8
      %s431 = scalar_lea.vmem %s0, %s430
      %p432 = scmp.lt.s32.totalorder %s24, 1
      %s433 = scalar_select %p432, %s24, 1
      %s434 = smul.addr %s433, 8
      %s435 = scalar_lea.vmem %s13, %s434
      %v436 = vld [vmem:[%s431] sm:$0xff]
      %v437 = vld [vmem:[%s1] sm:$0xff]
      %v438 = vld [vmem:[%s1 + $0x8] sm:$0xff]
      %v439 = vld [vmem:[%s1 + $0x10] sm:$0xff]
      %v440 = vld [vmem:[%s1 + $0x18] sm:$0xff]
      %v441 = vld [vmem:[%s2] sm:$0x1]
      %v443 = vlaneseq
      %v444 = vshrl.u32 %v443, 7
      %v445 = vsub.s32 0, %v444
      %v446 = vrot.slane %v441, %v445
      %vm448 = vcmask 261120
      %v450 = vsel %vm448, %v436, 0
      %452 = vmatprep.subr.mxu0 0.0
      %453 = vmatpush1.msra.mxu0 %v437
      %454 = vmatprep.subr.mxu0 0.0
      %455 = vmatpush1.msra.mxu0 %v438
      %456 = vmatprep.subr.mxu0 0.0
      %457 = vmatpush1.msra.mxu0 %v439
      %458 = vmatprep.subr.mxu0 0.0
      %459 = vmatpush1.msra.mxu0 %v440
      %460 = vmatprep.subr.mxu0 0.0
      %461 = vmatpush1.msra.mxu0 0.0
      %462 = vmatprep.subr.mxu0 0.0
      %463 = vmatpush1.msra.mxu0 0.0
      %464 = vmatprep.subr.mxu0 0.0
      %465 = vmatpush1.msra.mxu0 0.0
      %466 = vmatprep.subr.mxu0 0.0
      %467 = vmatpush1.msra.mxu0 0.0
      %468 = vmatprep.subr.mxu0 0.0
      %469 = vmatpush1.msra.mxu0 0.0
      %470 = vmatprep.subr.mxu0 0.0
      %471 = vmatpush1.msra.mxu0 0.0
      %472 = vmatprep.subr.mxu0 0.0
      %473 = vmatpush1.msra.mxu0 0.0
      %474 = vmatprep.subr.mxu0 0.0
      %475 = vmatpush1.msra.mxu0 0.0
      %476 = vmatprep.subr.mxu0 0.0
      %477 = vmatpush1.msra.mxu0 0.0
      %478 = vmatprep.subr.mxu0 0.0
      %479 = vmatpush1.msra.mxu0 0.0
      %480 = vmatprep.subr.mxu0 0.0
      %481 = vmatpush1.msra.mxu0 0.0
      %482 = vmatprep.subr.mxu0 0.0
      %483 = vmatpush1.msra.mxu0 0.0
      %484 = vmatprep.subr.mxu0 0.0
      %485 = vmatpush1.msra.mxu0 0.0
      %486 = vmatprep.subr.mxu0 0.0
      %487 = vmatpush1.msra.mxu0 0.0
      %488 = vmatprep.subr.mxu0 0.0
      %489 = vmatpush1.msra.mxu0 0.0
      %490 = vmatprep.subr.mxu0 0.0
      %491 = vmatpush1.msra.mxu0 0.0
      %492 = vmatprep.subr.mxu0 0.0
      %493 = vmatpush1.msra.mxu0 0.0
      %494 = vmatprep.subr.mxu0 0.0
      %495 = vmatpush1.msra.mxu0 0.0
      %496 = vmatprep.subr.mxu0 0.0
      %497 = vmatpush1.msra.mxu0 0.0
      %498 = vmatprep.subr.mxu0 0.0
      %499 = vmatpush1.msra.mxu0 0.0
      %500 = vmatprep.subr.mxu0 0.0
      %501 = vmatpush1.msra.mxu0 0.0
      %502 = vmatprep.subr.mxu0 0.0
      %503 = vmatpush1.msra.mxu0 0.0
      %504 = vmatprep.subr.mxu0 0.0
      %505 = vmatpush1.msra.mxu0 0.0
      %506 = vmatprep.subr.mxu0 0.0
      %507 = vmatpush1.msra.mxu0 0.0
      %508 = vmatprep.subr.mxu0 0.0
      %509 = vmatpush1.msra.mxu0 0.0
      %510 = vmatprep.subr.mxu0 0.0
      %511 = vmatpush1.msra.mxu0 0.0
      %512 = vmatprep.subr.mxu0 0.0
      %513 = vmatpush1.msra.mxu0 0.0
      %514 = vmatprep.subr.mxu0 0.0
      %515 = vmatpush1.msra.mxu0 0.0
      %516 = vmatprep.mubr.f32.mxu0 0.0
      %517 = vmatmul.mubr.f32.gmra.mrb[0].mxu0 %v450
      %v518 = vpop.f32.mrb[0].mxu0
      %v519 = vadd.f32 %v446, %v518
      %v520 = vpop.f32.mrb[0].mxu0
      %521 = vdwg.mxu0
      %v522 = vmul.f32 %v519, 0.35355338
      %524 = vrot.lane.b32.xlu0 %v519, 96
      %v525 = vpop.permute.xlu0 %524
      %vm526 = vcmask 64512
      %v528 = vsel %vm526, %v522, 0
      %v530 = vsel %vm526, %v525, 0
      %532 = vmatprep.subr.mxu0 0.0
      %533 = vmatpush1.xpose.msra.mxu0 %v530
      %534 = vmatprep.subr.mxu0 0.0
      %535 = vmatpush1.xpose.msra.mxu0 0.0
      %536 = vmatprep.subr.mxu0 0.0
      %537 = vmatpush1.xpose.msra.mxu0 0.0
      %538 = vmatprep.subr.mxu0 0.0
      %539 = vmatpush1.xpose.msra.mxu0 0.0
      %540 = vmatprep.subr.mxu0 0.0
      %541 = vmatpush1.xpose.msra.mxu0 0.0
      %542 = vmatprep.subr.mxu0 0.0
      %543 = vmatpush1.xpose.msra.mxu0 0.0
      %544 = vmatprep.subr.mxu0 0.0
      %545 = vmatpush1.xpose.msra.mxu0 0.0
      %546 = vmatprep.subr.mxu0 0.0
      %547 = vmatpush1.xpose.msra.mxu0 0.0
      %548 = vmatprep.subr.mxu0 0.0
      %549 = vmatpush1.xpose.msra.mxu0 0.0
      %550 = vmatprep.subr.mxu0 0.0
      %551 = vmatpush1.xpose.msra.mxu0 0.0
      %552 = vmatprep.subr.mxu0 0.0
      %553 = vmatpush1.xpose.msra.mxu0 0.0
      %554 = vmatprep.subr.mxu0 0.0
      %555 = vmatpush1.xpose.msra.mxu0 0.0
      %556 = vmatprep.subr.mxu0 0.0
      %557 = vmatpush1.xpose.msra.mxu0 0.0
      %558 = vmatprep.subr.mxu0 0.0
      %559 = vmatpush1.xpose.msra.mxu0 0.0
      %560 = vmatprep.subr.mxu0 0.0
      %561 = vmatpush1.xpose.msra.mxu0 0.0
      %562 = vmatprep.subr.mxu0 0.0
      %563 = vmatpush1.xpose.msra.mxu0 0.0
      %564 = vmatprep.subr.mxu0 0.0
      %565 = vmatpush1.xpose.msra.mxu0 0.0
      %566 = vmatprep.subr.mxu0 0.0
      %567 = vmatpush1.xpose.msra.mxu0 0.0
      %568 = vmatprep.subr.mxu0 0.0
      %569 = vmatpush1.xpose.msra.mxu0 0.0
      %570 = vmatprep.subr.mxu0 0.0
      %571 = vmatpush1.xpose.msra.mxu0 0.0
      %572 = vmatprep.subr.mxu0 0.0
      %573 = vmatpush1.xpose.msra.mxu0 0.0
      %574 = vmatprep.subr.mxu0 0.0
      %575 = vmatpush1.xpose.msra.mxu0 0.0
      %576 = vmatprep.subr.mxu0 0.0
      %577 = vmatpush1.xpose.msra.mxu0 0.0
      %578 = vmatprep.subr.mxu0 0.0
      %579 = vmatpush1.xpose.msra.mxu0 0.0
      %580 = vmatprep.subr.mxu0 0.0
      %581 = vmatpush1.xpose.msra.mxu0 0.0
      %582 = vmatprep.subr.mxu0 0.0
      %583 = vmatpush1.xpose.msra.mxu0 0.0
      %584 = vmatprep.subr.mxu0 0.0
      %585 = vmatpush1.xpose.msra.mxu0 0.0
      %586 = vmatprep.subr.mxu0 0.0
      %587 = vmatpush1.xpose.msra.mxu0 0.0
      %588 = vmatprep.subr.mxu0 0.0
      %589 = vmatpush1.xpose.msra.mxu0 0.0
      %590 = vmatprep.subr.mxu0 0.0
      %591 = vmatpush1.xpose.msra.mxu0 0.0
      %592 = vmatprep.subr.mxu0 0.0
      %593 = vmatpush1.xpose.msra.mxu0 0.0
      %594 = vmatprep.subr.mxu0 0.0
      %595 = vmatpush1.xpose.msra.mxu0 0.0
      %596 = vmatprep.mubr.f32.mxu0 0.0
      %597 = vmatmul.mubr.f32.gmra.mrb[0].mxu0 %v528
      %v598 = vpop.f32.mrb[0].mxu0
      %v599 = vadd.f32 0.0, %v598
      %v600 = vpop.f32.mrb[0].mxu0
      %601 = vdwg.mxu0
      %v602 = vsel %vm526, %v599, -inf
      %603 = vmax.xlane.f32.xlu0 %v602
      %v604 = vpop.xlane.xlu0 %603
      %v605 = vsub.f32 %v599, %v604
      %v606 = vmul.f32 %v605, 1.442695
      %v607 = vpow.pop %v606
      %v608 = vsel %vm526, %v607, 0.0
      %609 = vadd.xlane.f32.xlu0 %v608
      %v610 = vpop.xlane.xlu0 %609
      %v611 = vrcp.pop %v610
      %v612 = vmul.f32 %v607, %v611
      %613 = vrot.lane.b32.xlu0 %v519, 64
      %v614 = vpop.permute.xlu0 %613
      %v617 = vsel %vm526, %v612, 0
      %619 = vmatprep.subr.mxu0 0.0
      %620 = vmatpush1.msra.mxu0 %v614
      %621 = vmatprep.subr.mxu0 0.0
      %622 = vmatpush1.msra.mxu0 0.0
      %623 = vmatprep.subr.mxu0 0.0
      %624 = vmatpush1.msra.mxu0 0.0
      %625 = vmatprep.subr.mxu0 0.0
      %626 = vmatpush1.msra.mxu0 0.0
      %627 = vmatprep.subr.mxu0 0.0
      %628 = vmatpush1.msra.mxu0 0.0
      %629 = vmatprep.subr.mxu0 0.0
      %630 = vmatpush1.msra.mxu0 0.0
      %631 = vmatprep.subr.mxu0 0.0
      %632 = vmatpush1.msra.mxu0 0.0
      %633 = vmatprep.subr.mxu0 0.0
      %634 = vmatpush1.msra.mxu0 0.0
      %635 = vmatprep.subr.mxu0 0.0
      %636 = vmatpush1.msra.mxu0 0.0
      %637 = vmatprep.subr.mxu0 0.0
      %638 = vmatpush1.msra.mxu0 0.0
      %639 = vmatprep.subr.mxu0 0.0
      %640 = vmatpush1.msra.mxu0 0.0
      %641 = vmatprep.subr.mxu0 0.0
      %642 = vmatpush1.msra.mxu0 0.0
      %643 = vmatprep.subr.mxu0 0.0
      %644 = vmatpush1.msra.mxu0 0.0
      %645 = vmatprep.subr.mxu0 0.0
      %646 = vmatpush1.msra.mxu0 0.0
      %647 = vmatprep.subr.mxu0 0.0
      %648 = vmatpush1.msra.mxu0 0.0
      %649 = vmatprep.subr.mxu0 0.0
      %650 = vmatpush1.msra.mxu0 0.0
      %651 = vmatprep.subr.mxu0 0.0
      %652 = vmatpush1.msra.mxu0 0.0
      %653 = vmatprep.subr.mxu0 0.0
      %654 = vmatpush1.msra.mxu0 0.0
      %655 = vmatprep.subr.mxu0 0.0
      %656 = vmatpush1.msra.mxu0 0.0
      %657 = vmatprep.subr.mxu0 0.0
      %658 = vmatpush1.msra.mxu0 0.0
      %659 = vmatprep.subr.mxu0 0.0
      %660 = vmatpush1.msra.mxu0 0.0
      %661 = vmatprep.subr.mxu0 0.0
      %662 = vmatpush1.msra.mxu0 0.0
      %663 = vmatprep.subr.mxu0 0.0
      %664 = vmatpush1.msra.mxu0 0.0
      %665 = vmatprep.subr.mxu0 0.0
      %666 = vmatpush1.msra.mxu0 0.0
      %667 = vmatprep.subr.mxu0 0.0
      %668 = vmatpush1.msra.mxu0 0.0
      %669 = vmatprep.subr.mxu0 0.0
      %670 = vmatpush1.msra.mxu0 0.0
      %671 = vmatprep.subr.mxu0 0.0
      %672 = vmatpush1.msra.mxu0 0.0
      %673 = vmatprep.subr.mxu0 0.0
      %674 = vmatpush1.msra.mxu0 0.0
      %675 = vmatprep.subr.mxu0 0.0
      %676 = vmatpush1.msra.mxu0 0.0
      %677 = vmatprep.subr.mxu0 0.0
      %678 = vmatpush1.msra.mxu0 0.0
      %679 = vmatprep.subr.mxu0 0.0
      %680 = vmatpush1.msra.mxu0 0.0
      %681 = vmatprep.subr.mxu0 0.0
      %682 = vmatpush1.msra.mxu0 0.0
      %683 = vmatprep.mubr.f32.mxu0 0.0
      %684 = vmatmul.mubr.f32.gmra.mrb[0].mxu0 %v617
      %v685 = vpop.f32.mrb[0].mxu0
      %v686 = vadd.f32 0.0, %v685
      %v687 = vpop.f32.mrb[0].mxu0
      %688 = vdwg.mxu0
      %689 = vrot.lane.b32.xlu0 %v522, 120
      %v690 = vpop.permute.xlu0 %689
      %691 = vrot.lane.b32.xlu0 %v519, 88
      %v692 = vpop.permute.xlu0 %691
      %v693 = vsel %vm526, %v690, 0
      %v695 = vsel %vm526, %v692, 0
      %697 = vmatprep.subr.mxu0 0.0
      %698 = vmatpush1.xpose.msra.mxu0 %v695
      %699 = vmatprep.subr.mxu0 0.0
      %700 = vmatpush1.xpose.msra.mxu0 0.0
      %701 = vmatprep.subr.mxu0 0.0
      %702 = vmatpush1.xpose.msra.mxu0 0.0
      %703 = vmatprep.subr.mxu0 0.0
      %704 = vmatpush1.xpose.msra.mxu0 0.0
      %705 = vmatprep.subr.mxu0 0.0
      %706 = vmatpush1.xpose.msra.mxu0 0.0
      %707 = vmatprep.subr.mxu0 0.0
      %708 = vmatpush1.xpose.msra.mxu0 0.0
      %709 = vmatprep.subr.mxu0 0.0
      %710 = vmatpush1.xpose.msra.mxu0 0.0
      %711 = vmatprep.subr.mxu0 0.0
      %712 = vmatpush1.xpose.msra.mxu0 0.0
      %713 = vmatprep.subr.mxu0 0.0
      %714 = vmatpush1.xpose.msra.mxu0 0.0
      %715 = vmatprep.subr.mxu0 0.0
      %716 = vmatpush1.xpose.msra.mxu0 0.0
      %717 = vmatprep.subr.mxu0 0.0
      %718 = vmatpush1.xpose.msra.mxu0 0.0
      %719 = vmatprep.subr.mxu0 0.0
      %720 = vmatpush1.xpose.msra.mxu0 0.0
      %721 = vmatprep.subr.mxu0 0.0
      %722 = vmatpush1.xpose.msra.mxu0 0.0
      %723 = vmatprep.subr.mxu0 0.0
      %724 = vmatpush1.xpose.msra.mxu0 0.0
      %725 = vmatprep.subr.mxu0 0.0
      %726 = vmatpush1.xpose.msra.mxu0 0.0
      %727 = vmatprep.subr.mxu0 0.0
      %728 = vmatpush1.xpose.msra.mxu0 0.0
      %729 = vmatprep.subr.mxu0 0.0
      %730 = vmatpush1.xpose.msra.mxu0 0.0
      %731 = vmatprep.subr.mxu0 0.0
      %732 = vmatpush1.xpose.msra.mxu0 0.0
      %733 = vmatprep.subr.mxu0 0.0
      %734 = vmatpush1.xpose.msra.mxu0 0.0
      %735 = vmatprep.subr.mxu0 0.0
      %736 = vmatpush1.xpose.msra.mxu0 0.0
      %737 = vmatprep.subr.mxu0 0.0
      %738 = vmatpush1.xpose.msra.mxu0 0.0
      %739 = vmatprep.subr.mxu0 0.0
      %740 = vmatpush1.xpose.msra.mxu0 0.0
      %741 = vmatprep.subr.mxu0 0.0
      %742 = vmatpush1.xpose.msra.mxu0 0.0
      %743 = vmatprep.subr.mxu0 0.0
      %744 = vmatpush1.xpose.msra.mxu0 0.0
      %745 = vmatprep.subr.mxu0 0.0
      %746 = vmatpush1.xpose.msra.mxu0 0.0
      %747 = vmatprep.subr.mxu0 0.0
      %748 = vmatpush1.xpose.msra.mxu0 0.0
      %749 = vmatprep.subr.mxu0 0.0
      %750 = vmatpush1.xpose.msra.mxu0 0.0
      %751 = vmatprep.subr.mxu0 0.0
      %752 = vmatpush1.xpose.msra.mxu0 0.0
      %753 = vmatprep.subr.mxu0 0.0
      %754 = vmatpush1.xpose.msra.mxu0 0.0
      %755 = vmatprep.subr.mxu0 0.0
      %756 = vmatpush1.xpose.msra.mxu0 0.0
      %757 = vmatprep.subr.mxu0 0.0
      %758 = vmatpush1.xpose.msra.mxu0 0.0
      %759 = vmatprep.subr.mxu0 0.0
      %760 = vmatpush1.xpose.msra.mxu0 0.0
      %761 = vmatprep.mubr.f32.mxu0 0.0
      %762 = vmatmul.mubr.f32.gmra.mrb[0].mxu0 %v693
      %v763 = vpop.f32.mrb[0].mxu0
      %v764 = vadd.f32 0.0, %v763
      %v765 = vpop.f32.mrb[0].mxu0
      %766 = vdwg.mxu0
      %v767 = vsel %vm526, %v764, -inf
      %768 = vmax.xlane.f32.xlu0 %v767
      %v769 = vpop.xlane.xlu0 %768
      %v770 = vsub.f32 %v764, %v769
      %v771 = vmul.f32 %v770, 1.442695
      %v772 = vpow.pop %v771
      %v773 = vsel %vm526, %v772, 0.0
      %774 = vadd.xlane.f32.xlu0 %v773
      %v775 = vpop.xlane.xlu0 %774
      %v776 = vrcp.pop %v775
      %v777 = vmul.f32 %v772, %v776
      %778 = vrot.lane.b32.xlu0 %v519, 56
      %v779 = vpop.permute.xlu0 %778
      %v782 = vsel %vm526, %v777, 0
      %784 = vmatprep.subr.mxu0 0.0
      %785 = vmatpush1.msra.mxu0 %v779
      %786 = vmatprep.subr.mxu0 0.0
      %787 = vmatpush1.msra.mxu0 0.0
      %788 = vmatprep.subr.mxu0 0.0
      %789 = vmatpush1.msra.mxu0 0.0
      %790 = vmatprep.subr.mxu0 0.0
      %791 = vmatpush1.msra.mxu0 0.0
      %792 = vmatprep.subr.mxu0 0.0
      %793 = vmatpush1.msra.mxu0 0.0
      %794 = vmatprep.subr.mxu0 0.0
      %795 = vmatpush1.msra.mxu0 0.0
      %796 = vmatprep.subr.mxu0 0.0
      %797 = vmatpush1.msra.mxu0 0.0
      %798 = vmatprep.subr.mxu0 0.0
      %799 = vmatpush1.msra.mxu0 0.0
      %800 = vmatprep.subr.mxu0 0.0
      %801 = vmatpush1.msra.mxu0 0.0
      %802 = vmatprep.subr.mxu0 0.0
      %803 = vmatpush1.msra.mxu0 0.0
      %804 = vmatprep.subr.mxu0 0.0
      %805 = vmatpush1.msra.mxu0 0.0
      %806 = vmatprep.subr.mxu0 0.0
      %807 = vmatpush1.msra.mxu0 0.0
      %808 = vmatprep.subr.mxu0 0.0
      %809 = vmatpush1.msra.mxu0 0.0
      %810 = vmatprep.subr.mxu0 0.0
      %811 = vmatpush1.msra.mxu0 0.0
      %812 = vmatprep.subr.mxu0 0.0
      %813 = vmatpush1.msra.mxu0 0.0
      %814 = vmatprep.subr.mxu0 0.0
      %815 = vmatpush1.msra.mxu0 0.0
      %816 = vmatprep.subr.mxu0 0.0
      %817 = vmatpush1.msra.mxu0 0.0
      %818 = vmatprep.subr.mxu0 0.0
      %819 = vmatpush1.msra.mxu0 0.0
      %820 = vmatprep.subr.mxu0 0.0
      %821 = vmatpush1.msra.mxu0 0.0
      %822 = vmatprep.subr.mxu0 0.0
      %823 = vmatpush1.msra.mxu0 0.0
      %824 = vmatprep.subr.mxu0 0.0
      %825 = vmatpush1.msra.mxu0 0.0
      %826 = vmatprep.subr.mxu0 0.0
      %827 = vmatpush1.msra.mxu0 0.0
      %828 = vmatprep.subr.mxu0 0.0
      %829 = vmatpush1.msra.mxu0 0.0
      %830 = vmatprep.subr.mxu0 0.0
      %831 = vmatpush1.msra.mxu0 0.0
      %832 = vmatprep.subr.mxu0 0.0
      %833 = vmatpush1.msra.mxu0 0.0
      %834 = vmatprep.subr.mxu0 0.0
      %835 = vmatpush1.msra.mxu0 0.0
      %836 = vmatprep.subr.mxu0 0.0
      %837 = vmatpush1.msra.mxu0 0.0
      %838 = vmatprep.subr.mxu0 0.0
      %839 = vmatpush1.msra.mxu0 0.0
      %840 = vmatprep.subr.mxu0 0.0
      %841 = vmatpush1.msra.mxu0 0.0
      %842 = vmatprep.subr.mxu0 0.0
      %843 = vmatpush1.msra.mxu0 0.0
      %844 = vmatprep.subr.mxu0 0.0
      %845 = vmatpush1.msra.mxu0 0.0
      %846 = vmatprep.subr.mxu0 0.0
      %847 = vmatpush1.msra.mxu0 0.0
      %848 = vmatprep.mubr.f32.mxu0 0.0
      %849 = vmatmul.mubr.f32.gmra.mrb[0].mxu0 %v782
      %v850 = vpop.f32.mrb[0].mxu0
      %v851 = vadd.f32 0.0, %v850
      %v852 = vpop.f32.mrb[0].mxu0
      %853 = vdwg.mxu0
      %854 = vrot.lane.b32.xlu0 %v522, 112
      %v855 = vpop.permute.xlu0 %854
      %856 = vrot.lane.b32.xlu0 %v519, 80
      %v857 = vpop.permute.xlu0 %856
      %v858 = vsel %vm526, %v855, 0
      %v860 = vsel %vm526, %v857, 0
      %862 = vmatprep.subr.mxu0 0.0
      %863 = vmatpush1.xpose.msra.mxu0 %v860
      %864 = vmatprep.subr.mxu0 0.0
      %865 = vmatpush1.xpose.msra.mxu0 0.0
      %866 = vmatprep.subr.mxu0 0.0
      %867 = vmatpush1.xpose.msra.mxu0 0.0
      %868 = vmatprep.subr.mxu0 0.0
      %869 = vmatpush1.xpose.msra.mxu0 0.0
      %870 = vmatprep.subr.mxu0 0.0
      %871 = vmatpush1.xpose.msra.mxu0 0.0
      %872 = vmatprep.subr.mxu0 0.0
      %873 = vmatpush1.xpose.msra.mxu0 0.0
      %874 = vmatprep.subr.mxu0 0.0
      %875 = vmatpush1.xpose.msra.mxu0 0.0
      %876 = vmatprep.subr.mxu0 0.0
      %877 = vmatpush1.xpose.msra.mxu0 0.0
      %878 = vmatprep.subr.mxu0 0.0
      %879 = vmatpush1.xpose.msra.mxu0 0.0
      %880 = vmatprep.subr.mxu0 0.0
      %881 = vmatpush1.xpose.msra.mxu0 0.0
      %882 = vmatprep.subr.mxu0 0.0
      %883 = vmatpush1.xpose.msra.mxu0 0.0
      %884 = vmatprep.subr.mxu0 0.0
      %885 = vmatpush1.xpose.msra.mxu0 0.0
      %886 = vmatprep.subr.mxu0 0.0
      %887 = vmatpush1.xpose.msra.mxu0 0.0
      %888 = vmatprep.subr.mxu0 0.0
      %889 = vmatpush1.xpose.msra.mxu0 0.0
      %890 = vmatprep.subr.mxu0 0.0
      %891 = vmatpush1.xpose.msra.mxu0 0.0
      %892 = vmatprep.subr.mxu0 0.0
      %893 = vmatpush1.xpose.msra.mxu0 0.0
      %894 = vmatprep.subr.mxu0 0.0
      %895 = vmatpush1.xpose.msra.mxu0 0.0
      %896 = vmatprep.subr.mxu0 0.0
      %897 = vmatpush1.xpose.msra.mxu0 0.0
      %898 = vmatprep.subr.mxu0 0.0
      %899 = vmatpush1.xpose.msra.mxu0 0.0
      %900 = vmatprep.subr.mxu0 0.0
      %901 = vmatpush1.xpose.msra.mxu0 0.0
      %902 = vmatprep.subr.mxu0 0.0
      %903 = vmatpush1.xpose.msra.mxu0 0.0
      %904 = vmatprep.subr.mxu0 0.0
      %905 = vmatpush1.xpose.msra.mxu0 0.0
      %906 = vmatprep.subr.mxu0 0.0
      %907 = vmatpush1.xpose.msra.mxu0 0.0
      %908 = vmatprep.subr.mxu0 0.0
      %909 = vmatpush1.xpose.msra.mxu0 0.0
      %910 = vmatprep.subr.mxu0 0.0
      %911 = vmatpush1.xpose.msra.mxu0 0.0
      %912 = vmatprep.subr.mxu0 0.0
      %913 = vmatpush1.xpose.msra.mxu0 0.0
      %914 = vmatprep.subr.mxu0 0.0
      %915 = vmatpush1.xpose.msra.mxu0 0.0
      %916 = vmatprep.subr.mxu0 0.0
      %917 = vmatpush1.xpose.msra.mxu0 0.0
      %918 = vmatprep.subr.mxu0 0.0
      %919 = vmatpush1.xpose.msra.mxu0 0.0
      %920 = vmatprep.subr.mxu0 0.0
      %921 = vmatpush1.xpose.msra.mxu0 0.0
      %922 = vmatprep.subr.mxu0 0.0
      %923 = vmatpush1.xpose.msra.mxu0 0.0
      %924 = vmatprep.subr.mxu0 0.0
      %925 = vmatpush1.xpose.msra.mxu0 0.0
      %926 = vmatprep.mubr.f32.mxu0 0.0
      %927 = vmatmul.mubr.f32.gmra.mrb[0].mxu0 %v858
      %v928 = vpop.f32.mrb[0].mxu0
      %v929 = vadd.f32 0.0, %v928
      %v930 = vpop.f32.mrb[0].mxu0
      %931 = vdwg.mxu0
      %v932 = vsel %vm526, %v929, -inf
      %933 = vmax.xlane.f32.xlu0 %v932
      %v934 = vpop.xlane.xlu0 %933
      %v935 = vsub.f32 %v929, %v934
      %v936 = vmul.f32 %v935, 1.442695
      %v937 = vpow.pop %v936
      %v938 = vsel %vm526, %v937, 0.0
      %939 = vadd.xlane.f32.xlu0 %v938
      %v940 = vpop.xlane.xlu0 %939
      %v941 = vrcp.pop %v940
      %v942 = vmul.f32 %v937, %v941
      %943 = vrot.lane.b32.xlu0 %v519, 48
      %v944 = vpop.permute.xlu0 %943
      %v947 = vsel %vm526, %v942, 0
      %949 = vmatprep.subr.mxu0 0.0
      %950 = vmatpush1.msra.mxu0 %v944
      %951 = vmatprep.subr.mxu0 0.0
      %952 = vmatpush1.msra.mxu0 0.0
      %953 = vmatprep.subr.mxu0 0.0
      %954 = vmatpush1.msra.mxu0 0.0
      %955 = vmatprep.subr.mxu0 0.0
      %956 = vmatpush1.msra.mxu0 0.0
      %957 = vmatprep.subr.mxu0 0.0
      %958 = vmatpush1.msra.mxu0 0.0
      %959 = vmatprep.subr.mxu0 0.0
      %960 = vmatpush1.msra.mxu0 0.0
      %961 = vmatprep.subr.mxu0 0.0
      %962 = vmatpush1.msra.mxu0 0.0
      %963 = vmatprep.subr.mxu0 0.0
      %964 = vmatpush1.msra.mxu0 0.0
      %965 = vmatprep.subr.mxu0 0.0
      %966 = vmatpush1.msra.mxu0 0.0
      %967 = vmatprep.subr.mxu0 0.0
      %968 = vmatpush1.msra.mxu0 0.0
      %969 = vmatprep.subr.mxu0 0.0
      %970 = vmatpush1.msra.mxu0 0.0
      %971 = vmatprep.subr.mxu0 0.0
      %972 = vmatpush1.msra.mxu0 0.0
      %973 = vmatprep.subr.mxu0 0.0
      %974 = vmatpush1.msra.mxu0 0.0
      %975 = vmatprep.subr.mxu0 0.0
      %976 = vmatpush1.msra.mxu0 0.0
      %977 = vmatprep.subr.mxu0 0.0
      %978 = vmatpush1.msra.mxu0 0.0
      %979 = vmatprep.subr.mxu0 0.0
      %980 = vmatpush1.msra.mxu0 0.0
      %981 = vmatprep.subr.mxu0 0.0
      %982 = vmatpush1.msra.mxu0 0.0
      %983 = vmatprep.subr.mxu0 0.0
      %984 = vmatpush1.msra.mxu0 0.0
      %985 = vmatprep.subr.mxu0 0.0
      %986 = vmatpush1.msra.mxu0 0.0
      %987 = vmatprep.subr.mxu0 0.0
      %988 = vmatpush1.msra.mxu0 0.0
      %989 = vmatprep.subr.mxu0 0.0
      %990 = vmatpush1.msra.mxu0 0.0
      %991 = vmatprep.subr.mxu0 0.0
      %992 = vmatpush1.msra.mxu0 0.0
      %993 = vmatprep.subr.mxu0 0.0
      %994 = vmatpush1.msra.mxu0 0.0
      %995 = vmatprep.subr.mxu0 0.0
      %996 = vmatpush1.msra.mxu0 0.0
      %997 = vmatprep.subr.mxu0 0.0
      %998 = vmatpush1.msra.mxu0 0.0
      %999 = vmatprep.subr.mxu0 0.0
      %1000 = vmatpush1.msra.mxu0 0.0
      %1001 = vmatprep.subr.mxu0 0.0
      %1002 = vmatpush1.msra.mxu0 0.0
      %1003 = vmatprep.subr.mxu0 0.0
      %1004 = vmatpush1.msra.mxu0 0.0
      %1005 = vmatprep.subr.mxu0 0.0
      %1006 = vmatpush1.msra.mxu0 0.0
      %1007 = vmatprep.subr.mxu0 0.0
      %1008 = vmatpush1.msra.mxu0 0.0
      %1009 = vmatprep.subr.mxu0 0.0
      %1010 = vmatpush1.msra.mxu0 0.0
      %1011 = vmatprep.subr.mxu0 0.0
      %1012 = vmatpush1.msra.mxu0 0.0
      %1013 = vmatprep.mubr.f32.mxu0 0.0
      %1014 = vmatmul.mubr.f32.gmra.mrb[0].mxu0 %v947
      %v1015 = vpop.f32.mrb[0].mxu0
      %v1016 = vadd.f32 0.0, %v1015
      %v1017 = vpop.f32.mrb[0].mxu0
      %1018 = vdwg.mxu0
      %1019 = vrot.lane.b32.xlu0 %v522, 104
      %v1020 = vpop.permute.xlu0 %1019
      %1021 = vrot.lane.b32.xlu0 %v519, 72
      %v1022 = vpop.permute.xlu0 %1021
      %v1023 = vsel %vm526, %v1020, 0
      %v1025 = vsel %vm526, %v1022, 0
      %1027 = vmatprep.subr.mxu0 0.0
      %1028 = vmatpush1.xpose.msra.mxu0 %v1025
      %1029 = vmatprep.subr.mxu0 0.0
      %1030 = vmatpush1.xpose.msra.mxu0 0.0
      %1031 = vmatprep.subr.mxu0 0.0
      %1032 = vmatpush1.xpose.msra.mxu0 0.0
      %1033 = vmatprep.subr.mxu0 0.0
      %1034 = vmatpush1.xpose.msra.mxu0 0.0
      %1035 = vmatprep.subr.mxu0 0.0
      %1036 = vmatpush1.xpose.msra.mxu0 0.0
      %1037 = vmatprep.subr.mxu0 0.0
      %1038 = vmatpush1.xpose.msra.mxu0 0.0
      %1039 = vmatprep.subr.mxu0 0.0
      %1040 = vmatpush1.xpose.msra.mxu0 0.0
      %1041 = vmatprep.subr.mxu0 0.0
      %1042 = vmatpush1.xpose.msra.mxu0 0.0
      %1043 = vmatprep.subr.mxu0 0.0
      %1044 = vmatpush1.xpose.msra.mxu0 0.0
      %1045 = vmatprep.subr.mxu0 0.0
      %1046 = vmatpush1.xpose.msra.mxu0 0.0
      %1047 = vmatprep.subr.mxu0 0.0
      %1048 = vmatpush1.xpose.msra.mxu0 0.0
      %1049 = vmatprep.subr.mxu0 0.0
      %1050 = vmatpush1.xpose.msra.mxu0 0.0
      %1051 = vmatprep.subr.mxu0 0.0
      %1052 = vmatpush1.xpose.msra.mxu0 0.0
      %1053 = vmatprep.subr.mxu0 0.0
      %1054 = vmatpush1.xpose.msra.mxu0 0.0
      %1055 = vmatprep.subr.mxu0 0.0
      %1056 = vmatpush1.xpose.msra.mxu0 0.0
      %1057 = vmatprep.subr.mxu0 0.0
      %1058 = vmatpush1.xpose.msra.mxu0 0.0
      %1059 = vmatprep.subr.mxu0 0.0
      %1060 = vmatpush1.xpose.msra.mxu0 0.0
      %1061 = vmatprep.subr.mxu0 0.0
      %1062 = vmatpush1.xpose.msra.mxu0 0.0
      %1063 = vmatprep.subr.mxu0 0.0
      %1064 = vmatpush1.xpose.msra.mxu0 0.0
      %1065 = vmatprep.subr.mxu0 0.0
      %1066 = vmatpush1.xpose.msra.mxu0 0.0
      %1067 = vmatprep.subr.mxu0 0.0
      %1068 = vmatpush1.xpose.msra.mxu0 0.0
      %1069 = vmatprep.subr.mxu0 0.0
      %1070 = vmatpush1.xpose.msra.mxu0 0.0
      %1071 = vmatprep.subr.mxu0 0.0
      %1072 = vmatpush1.xpose.msra.mxu0 0.0
      %1073 = vmatprep.subr.mxu0 0.0
      %1074 = vmatpush1.xpose.msra.mxu0 0.0
      %1075 = vmatprep.subr.mxu0 0.0
      %1076 = vmatpush1.xpose.msra.mxu0 0.0
      %1077 = vmatprep.subr.mxu0 0.0
      %1078 = vmatpush1.xpose.msra.mxu0 0.0
      %1079 = vmatprep.subr.mxu0 0.0
      %1080 = vmatpush1.xpose.msra.mxu0 0.0
      %1081 = vmatprep.subr.mxu0 0.0
      %1082 = vmatpush1.xpose.msra.mxu0 0.0
      %1083 = vmatprep.subr.mxu0 0.0
      %1084 = vmatpush1.xpose.msra.mxu0 0.0
      %1085 = vmatprep.subr.mxu0 0.0
      %1086 = vmatpush1.xpose.msra.mxu0 0.0
      %1087 = vmatprep.subr.mxu0 0.0
      %1088 = vmatpush1.xpose.msra.mxu0 0.0
      %1089 = vmatprep.subr.mxu0 0.0
      %1090 = vmatpush1.xpose.msra.mxu0 0.0
      %1091 = vmatprep.mubr.f32.mxu0 0.0
      %1092 = vmatmul.mubr.f32.gmra.mrb[0].mxu0 %v1023
      %v1093 = vpop.f32.mrb[0].mxu0
      %v1094 = vadd.f32 0.0, %v1093
      %v1095 = vpop.f32.mrb[0].mxu0
      %1096 = vdwg.mxu0
      %v1097 = vsel %vm526, %v1094, -inf
      %1098 = vmax.xlane.f32.xlu0 %v1097
      %v1099 = vpop.xlane.xlu0 %1098
      %v1100 = vsub.f32 %v1094, %v1099
      %v1101 = vmul.f32 %v1100, 1.442695
      %v1102 = vpow.pop %v1101
      %v1103 = vsel %vm526, %v1102, 0.0
      %1104 = vadd.xlane.f32.xlu0 %v1103
      %v1105 = vpop.xlane.xlu0 %1104
      %v1106 = vrcp.pop %v1105
      %v1107 = vmul.f32 %v1102, %v1106
      %1108 = vrot.lane.b32.xlu0 %v519, 40
      %v1109 = vpop.permute.xlu0 %1108
      %v1112 = vsel %vm526, %v1107, 0
      %1114 = vmatprep.subr.mxu0 0.0
      %1115 = vmatpush1.msra.mxu0 %v1109
      %1116 = vmatprep.subr.mxu0 0.0
      %1117 = vmatpush1.msra.mxu0 0.0
      %1118 = vmatprep.subr.mxu0 0.0
      %1119 = vmatpush1.msra.mxu0 0.0
      %1120 = vmatprep.subr.mxu0 0.0
      %1121 = vmatpush1.msra.mxu0 0.0
      %1122 = vmatprep.subr.mxu0 0.0
      %1123 = vmatpush1.msra.mxu0 0.0
      %1124 = vmatprep.subr.mxu0 0.0
      %1125 = vmatpush1.msra.mxu0 0.0
      %1126 = vmatprep.subr.mxu0 0.0
      %1127 = vmatpush1.msra.mxu0 0.0
      %1128 = vmatprep.subr.mxu0 0.0
      %1129 = vmatpush1.msra.mxu0 0.0
      %1130 = vmatprep.subr.mxu0 0.0
      %1131 = vmatpush1.msra.mxu0 0.0
      %1132 = vmatprep.subr.mxu0 0.0
      %1133 = vmatpush1.msra.mxu0 0.0
      %1134 = vmatprep.subr.mxu0 0.0
      %1135 = vmatpush1.msra.mxu0 0.0
      %1136 = vmatprep.subr.mxu0 0.0
      %1137 = vmatpush1.msra.mxu0 0.0
      %1138 = vmatprep.subr.mxu0 0.0
      %1139 = vmatpush1.msra.mxu0 0.0
      %1140 = vmatprep.subr.mxu0 0.0
      %1141 = vmatpush1.msra.mxu0 0.0
      %1142 = vmatprep.subr.mxu0 0.0
      %1143 = vmatpush1.msra.mxu0 0.0
      %1144 = vmatprep.subr.mxu0 0.0
      %1145 = vmatpush1.msra.mxu0 0.0
      %1146 = vmatprep.subr.mxu0 0.0
      %1147 = vmatpush1.msra.mxu0 0.0
      %1148 = vmatprep.subr.mxu0 0.0
      %1149 = vmatpush1.msra.mxu0 0.0
      %1150 = vmatprep.subr.mxu0 0.0
      %1151 = vmatpush1.msra.mxu0 0.0
      %1152 = vmatprep.subr.mxu0 0.0
      %1153 = vmatpush1.msra.mxu0 0.0
      %1154 = vmatprep.subr.mxu0 0.0
      %1155 = vmatpush1.msra.mxu0 0.0
      %1156 = vmatprep.subr.mxu0 0.0
      %1157 = vmatpush1.msra.mxu0 0.0
      %1158 = vmatprep.subr.mxu0 0.0
      %1159 = vmatpush1.msra.mxu0 0.0
      %1160 = vmatprep.subr.mxu0 0.0
      %1161 = vmatpush1.msra.mxu0 0.0
      %1162 = vmatprep.subr.mxu0 0.0
      %1163 = vmatpush1.msra.mxu0 0.0
      %1164 = vmatprep.subr.mxu0 0.0
      %1165 = vmatpush1.msra.mxu0 0.0
      %1166 = vmatprep.subr.mxu0 0.0
      %1167 = vmatpush1.msra.mxu0 0.0
      %1168 = vmatprep.subr.mxu0 0.0
      %1169 = vmatpush1.msra.mxu0 0.0
      %1170 = vmatprep.subr.mxu0 0.0
      %1171 = vmatpush1.msra.mxu0 0.0
      %1172 = vmatprep.subr.mxu0 0.0
      %1173 = vmatpush1.msra.mxu0 0.0
      %1174 = vmatprep.subr.mxu0 0.0
      %1175 = vmatpush1.msra.mxu0 0.0
      %1176 = vmatprep.subr.mxu0 0.0
      %1177 = vmatpush1.msra.mxu0 0.0
      %1178 = vmatprep.mubr.f32.mxu0 0.0
      %1179 = vmatmul.mubr.f32.gmra.mrb[0].mxu0 %v1112
      %v1180 = vpop.f32.mrb[0].mxu0
      %v1181 = vadd.f32 0.0, %v1180
      %v1182 = vpop.f32.mrb[0].mxu0
      %1183 = vdwg.mxu0
      %1185 = vrot.lane.b32.xlu0 %v851, 8
      %v1186 = vpop.permute.xlu0 %1185
      %1189 = vrot.lane.b32.xlu0 %v1016, 16
      %v1190 = vpop.permute.xlu0 %1189
      %1193 = vrot.lane.b32.xlu0 %v1181, 24
      %v1194 = vpop.permute.xlu0 %1193
      %v1196 = vsel %vm526, %v686, %v1186
      %vm1197 = vcmask 130048
      %v1198 = vsel %vm1197, %v1196, %v1190
      %vm1199 = vcmask 195584
      %v1200 = vsel %vm1199, %v1198, %v1194
      %v1201 = vld [vmem:[%s3] sm:$0xff]
      %v1202 = vld [vmem:[%s3 + $0x8] sm:$0xff]
      %v1203 = vld [vmem:[%s3 + $0x10] sm:$0xff]
      %v1204 = vld [vmem:[%s3 + $0x18] sm:$0xff]
      %v1205 = vld [vmem:[%s4] sm:$0x1]
      %v1207 = vlaneseq
      %v1208 = vshrl.u32 %v1207, 7
      %v1209 = vsub.s32 0, %v1208
      %v1210 = vrot.slane %v1205, %v1209
      %v1213 = vsel %vm448, %v1200, 0
      %1215 = vmatprep.subr.mxu0 0.0
      %1216 = vmatpush1.msra.mxu0 %v1201
      %1217 = vmatprep.subr.mxu0 0.0
      %1218 = vmatpush1.msra.mxu0 %v1202
      %1219 = vmatprep.subr.mxu0 0.0
      %1220 = vmatpush1.msra.mxu0 %v1203
      %1221 = vmatprep.subr.mxu0 0.0
      %1222 = vmatpush1.msra.mxu0 %v1204
      %1223 = vmatprep.subr.mxu0 0.0
      %1224 = vmatpush1.msra.mxu0 0.0
      %1225 = vmatprep.subr.mxu0 0.0
      %1226 = vmatpush1.msra.mxu0 0.0
      %1227 = vmatprep.subr.mxu0 0.0
      %1228 = vmatpush1.msra.mxu0 0.0
      %1229 = vmatprep.subr.mxu0 0.0
      %1230 = vmatpush1.msra.mxu0 0.0
      %1231 = vmatprep.subr.mxu0 0.0
      %1232 = vmatpush1.msra.mxu0 0.0
      %1233 = vmatprep.subr.mxu0 0.0
      %1234 = vmatpush1.msra.mxu0 0.0
      %1235 = vmatprep.subr.mxu0 0.0
      %1236 = vmatpush1.msra.mxu0 0.0
      %1237 = vmatprep.subr.mxu0 0.0
      %1238 = vmatpush1.msra.mxu0 0.0
      %1239 = vmatprep.subr.mxu0 0.0
      %1240 = vmatpush1.msra.mxu0 0.0
      %1241 = vmatprep.subr.mxu0 0.0
      %1242 = vmatpush1.msra.mxu0 0.0
      %1243 = vmatprep.subr.mxu0 0.0
      %1244 = vmatpush1.msra.mxu0 0.0
      %1245 = vmatprep.subr.mxu0 0.0
      %1246 = vmatpush1.msra.mxu0 0.0
      %1247 = vmatprep.subr.mxu0 0.0
      %1248 = vmatpush1.msra.mxu0 0.0
      %1249 = vmatprep.subr.mxu0 0.0
      %1250 = vmatpush1.msra.mxu0 0.0
      %1251 = vmatprep.subr.mxu0 0.0
      %1252 = vmatpush1.msra.mxu0 0.0
      %1253 = vmatprep.subr.mxu0 0.0
      %1254 = vmatpush1.msra.mxu0 0.0
      %1255 = vmatprep.subr.mxu0 0.0
      %1256 = vmatpush1.msra.mxu0 0.0
      %1257 = vmatprep.subr.mxu0 0.0
      %1258 = vmatpush1.msra.mxu0 0.0
      %1259 = vmatprep.subr.mxu0 0.0
      %1260 = vmatpush1.msra.mxu0 0.0
      %1261 = vmatprep.subr.mxu0 0.0
      %1262 = vmatpush1.msra.mxu0 0.0
      %1263 = vmatprep.subr.mxu0 0.0
      %1264 = vmatpush1.msra.mxu0 0.0
      %1265 = vmatprep.subr.mxu0 0.0
      %1266 = vmatpush1.msra.mxu0 0.0
      %1267 = vmatprep.subr.mxu0 0.0
      %1268 = vmatpush1.msra.mxu0 0.0
      %1269 = vmatprep.subr.mxu0 0.0
      %1270 = vmatpush1.msra.mxu0 0.0
      %1271 = vmatprep.subr.mxu0 0.0
      %1272 = vmatpush1.msra.mxu0 0.0
      %1273 = vmatprep.subr.mxu0 0.0
      %1274 = vmatpush1.msra.mxu0 0.0
      %1275 = vmatprep.subr.mxu0 0.0
      %1276 = vmatpush1.msra.mxu0 0.0
      %1277 = vmatprep.subr.mxu0 0.0
      %1278 = vmatpush1.msra.mxu0 0.0
      %1279 = vmatprep.mubr.f32.mxu0 0.0
      %1280 = vmatmul.mubr.f32.gmra.mrb[0].mxu0 %v1213
      %v1281 = vpop.f32.mrb[0].mxu0
      %v1282 = vadd.f32 %v1210, %v1281
      %v1283 = vpop.f32.mrb[0].mxu0
      %1284 = vdwg.mxu0
      %v1285 = vadd.f32 %v436, %v1282
      %v1286 = vld [vmem:[%s9] sm:$0x1]
      %v1287 = vld [vmem:[%s10] sm:$0x1]
      %v1288 = vsel %vm448, %v1285, 0.0
      %1289 = vadd.xlane.f32.xlu0 %v1288
      %v1290 = vpop.xlane.xlu0 %1289
      %v1291 = vrcp.pop 32.0
      %v1292 = vmul.f32 %v1290, %v1291
      %v1293 = vsub.f32 %v1285, %v1292
      %v1294 = vmul.f32 %v1293, %v1293
      %v1295 = vsel %vm448, %v1294, 0.0
      %1296 = vadd.xlane.f32.xlu0 %v1295
      %v1297 = vpop.xlane.xlu0 %1296
      %v1298 = vmul.f32 %v1297, %v1291
      %v1299 = vadd.f32 %v1298, 1e-05
      %v1300 = vrsqrt.pop %v1299
      %v1301 = vmul.f32 %v1293, %v1300
      %v1303 = vlaneseq
      %v1304 = vshrl.u32 %v1303, 7
      %v1305 = vsub.s32 0, %v1304
      %v1306 = vrot.slane %v1286, %v1305
      %v1308 = vmul.f32 %v1301, %v1306
      %v1310 = vlaneseq
      %v1311 = vshrl.u32 %v1310, 7
      %v1312 = vsub.s32 0, %v1311
      %v1313 = vrot.slane %v1287, %v1312
      %v1315 = vadd.f32 %v1308, %v1313
      %v1316 = vld [vmem:[%s5] sm:$0xff]
      %v1317 = vld [vmem:[%s5 + $0x8] sm:$0xff]
      %v1318 = vld [vmem:[%s5 + $0x10] sm:$0xff]
      %v1319 = vld [vmem:[%s5 + $0x18] sm:$0xff]
      %v1320 = vld [vmem:[%s6] sm:$0x1]
      %v1322 = vlaneseq
      %v1323 = vshrl.u32 %v1322, 7
      %v1324 = vsub.s32 0, %v1323
      %v1325 = vrot.slane %v1320, %v1324
      %v1328 = vsel %vm448, %v1315, 0
      %1330 = vmatprep.subr.mxu0 0.0
      %1331 = vmatpush1.msra.mxu0 %v1316
      %1332 = vmatprep.subr.mxu0 0.0
      %1333 = vmatpush1.msra.mxu0 %v1317
      %1334 = vmatprep.subr.mxu0 0.0
      %1335 = vmatpush1.msra.mxu0 %v1318
      %1336 = vmatprep.subr.mxu0 0.0
      %1337 = vmatpush1.msra.mxu0 %v1319
      %1338 = vmatprep.subr.mxu0 0.0
      %1339 = vmatpush1.msra.mxu0 0.0
      %1340 = vmatprep.subr.mxu0 0.0
      %1341 = vmatpush1.msra.mxu0 0.0
      %1342 = vmatprep.subr.mxu0 0.0
      %1343 = vmatpush1.msra.mxu0 0.0
      %1344 = vmatprep.subr.mxu0 0.0
      %1345 = vmatpush1.msra.mxu0 0.0
      %1346 = vmatprep.subr.mxu0 0.0
      %1347 = vmatpush1.msra.mxu0 0.0
      %1348 = vmatprep.subr.mxu0 0.0
      %1349 = vmatpush1.msra.mxu0 0.0
      %1350 = vmatprep.subr.mxu0 0.0
      %1351 = vmatpush1.msra.mxu0 0.0
      %1352 = vmatprep.subr.mxu0 0.0
      %1353 = vmatpush1.msra.mxu0 0.0
      %1354 = vmatprep.subr.mxu0 0.0
      %1355 = vmatpush1.msra.mxu0 0.0
      %1356 = vmatprep.subr.mxu0 0.0
      %1357 = vmatpush1.msra.mxu0 0.0
      %1358 = vmatprep.subr.mxu0 0.0
      %1359 = vmatpush1.msra.mxu0 0.0
      %1360 = vmatprep.subr.mxu0 0.0
      %1361 = vmatpush1.msra.mxu0 0.0
      %1362 = vmatprep.subr.mxu0 0.0
      %1363 = vmatpush1.msra.mxu0 0.0
      %1364 = vmatprep.subr.mxu0 0.0
      %1365 = vmatpush1.msra.mxu0 0.0
      %1366 = vmatprep.subr.mxu0 0.0
      %1367 = vmatpush1.msra.mxu0 0.0
      %1368 = vmatprep.subr.mxu0 0.0
      %1369 = vmatpush1.msra.mxu0 0.0
      %1370 = vmatprep.subr.mxu0 0.0
      %1371 = vmatpush1.msra.mxu0 0.0
      %1372 = vmatprep.subr.mxu0 0.0
      %1373 = vmatpush1.msra.mxu0 0.0
      %1374 = vmatprep.subr.mxu0 0.0
      %1375 = vmatpush1.msra.mxu0 0.0
      %1376 = vmatprep.subr.mxu0 0.0
      %1377 = vmatpush1.msra.mxu0 0.0
      %1378 = vmatprep.subr.mxu0 0.0
      %1379 = vmatpush1.msra.mxu0 0.0
      %1380 = vmatprep.subr.mxu0 0.0
      %1381 = vmatpush1.msra.mxu0 0.0
      %1382 = vmatprep.subr.mxu0 0.0
      %1383 = vmatpush1.msra.mxu0 0.0
      %1384 = vmatprep.subr.mxu0 0.0
      %1385 = vmatpush1.msra.mxu0 0.0
      %1386 = vmatprep.subr.mxu0 0.0
      %1387 = vmatpush1.msra.mxu0 0.0
      %1388 = vmatprep.subr.mxu0 0.0
      %1389 = vmatpush1.msra.mxu0 0.0
      %1390 = vmatprep.subr.mxu0 0.0
      %1391 = vmatpush1.msra.mxu0 0.0
      %1392 = vmatprep.subr.mxu0 0.0
      %1393 = vmatpush1.msra.mxu0 0.0
      %1394 = vmatprep.mubr.f32.mxu0 0.0
      %1395 = vmatmul.mubr.f32.gmra.mrb[0].mxu0 %v1328
      %v1396 = vpop.f32.mrb[0].mxu0
      %v1397 = vadd.f32 %v1325, %v1396
      %v1398 = vpop.f32.mrb[0].mxu0
      %1399 = vdwg.mxu0
      %v1400 = vmax.f32 %v1397, 0.0
      %v1401 = vld [vmem:[%s7] sm:$0xff]
      %v1402 = vld [vmem:[%s7 + $0x8] sm:$0xff]
      %v1403 = vld [vmem:[%s7 + $0x10] sm:$0xff]
      %v1404 = vld [vmem:[%s7 + $0x18] sm:$0xff]
      %v1405 = vld [vmem:[%s7 + $0x20] sm:$0xff]
      %v1406 = vld [vmem:[%s7 + $0x28] sm:$0xff]
      %v1407 = vld [vmem:[%s7 + $0x30] sm:$0xff]
      %v1408 = vld [vmem:[%s7 + $0x38] sm:$0xff]
      %v1409 = vld [vmem:[%s8] sm:$0x1]
      %v1411 = vlaneseq
      %v1412 = vshrl.u32 %v1411, 7
      %v1413 = vsub.s32 0, %v1412
      %v1414 = vrot.slane %v1409, %v1413
      %vm1416 = vcmask 523264
      %v1418 = vsel %vm1416, %v1400, 0
      %1420 = vmatprep.subr.mxu0 0.0
      %1421 = vmatpush1.msra.mxu0 %v1401
      %1422 = vmatprep.subr.mxu0 0.0
      %1423 = vmatpush1.msra.mxu0 %v1402
      %1424 = vmatprep.subr.mxu0 0.0
      %1425 = vmatpush1.msra.mxu0 %v1403
      %1426 = vmatprep.subr.mxu0 0.0
      %1427 = vmatpush1.msra.mxu0 %v1404
      %1428 = vmatprep.subr.mxu0 0.0
      %1429 = vmatpush1.msra.mxu0 %v1405
      %1430 = vmatprep.subr.mxu0 0.0
      %1431 = vmatpush1.msra.mxu0 %v1406
      %1432 = vmatprep.subr.mxu0 0.0
      %1433 = vmatpush1.msra.mxu0 %v1407
      %1434 = vmatprep.subr.mxu0 0.0
      %1435 = vmatpush1.msra.mxu0 %v1408
      %1436 = vmatprep.subr.mxu0 0.0
      %1437 = vmatpush1.msra.mxu0 0.0
      %1438 = vmatprep.subr.mxu0 0.0
      %1439 = vmatpush1.msra.mxu0 0.0
      %1440 = vmatprep.subr.mxu0 0.0
      %1441 = vmatpush1.msra.mxu0 0.0
      %1442 = vmatprep.subr.mxu0 0.0
      %1443 = vmatpush1.msra.mxu0 0.0
      %1444 = vmatprep.subr.mxu0 0.0
      %1445 = vmatpush1.msra.mxu0 0.0
      %1446 = vmatprep.subr.mxu0 0.0
      %1447 = vmatpush1.msra.mxu0 0.0
      %1448 = vmatprep.subr.mxu0 0.0
      %1449 = vmatpush1.msra.mxu0 0.0
      %1450 = vmatprep.subr.mxu0 0.0
      %1451 = vmatpush1.msra.mxu0 0.0
      %1452 = vmatprep.subr.mxu0 0.0
      %1453 = vmatpush1.msra.mxu0 0.0
      %1454 = vmatprep.subr.mxu0 0.0
      %1455 = vmatpush1.msra.mxu0 0.0
      %1456 = vmatprep.subr.mxu0 0.0
      %1457 = vmatpush1.msra.mxu0 0.0
      %1458 = vmatprep.subr.mxu0 0.0
      %1459 = vmatpush1.msra.mxu0 0.0
      %1460 = vmatprep.subr.mxu0 0.0
      %1461 = vmatpush1.msra.mxu0 0.0
      %1462 = vmatprep.subr.mxu0 0.0
      %1463 = vmatpush1.msra.mxu0 0.0
      %1464 = vmatprep.subr.mxu0 0.0
      %1465 = vmatpush1.msra.mxu0 0.0
      %1466 = vmatprep.subr.mxu0 0.0
      %1467 = vmatpush1.msra.mxu0 0.0
      %1468 = vmatprep.subr.mxu0 0.0
      %1469 = vmatpush1.msra.mxu0 0.0
      %1470 = vmatprep.subr.mxu0 0.0
      %1471 = vmatpush1.msra.mxu0 0.0
      %1472 = vmatprep.subr.mxu0 0.0
      %1473 = vmatpush1.msra.mxu0 0.0
      %1474 = vmatprep.subr.mxu0 0.0
      %1475 = vmatpush1.msra.mxu0 0.0
      %1476 = vmatprep.subr.mxu0 0.0
      %1477 = vmatpush1.msra.mxu0 0.0
      %1478 = vmatprep.subr.mxu0 0.0
      %1479 = vmatpush1.msra.mxu0 0.0
      %1480 = vmatprep.subr.mxu0 0.0
      %1481 = vmatpush1.msra.mxu0 0.0
      %1482 = vmatprep.subr.mxu0 0.0
      %1483 = vmatpush1.msra.mxu0 0.0
      %1484 = vmatprep.mubr.f32.mxu0 0.0
      %1485 = vmatmul.mubr.f32.gmra.mrb[0].mxu0 %v1418
      %v1486 = vpop.f32.mrb[0].mxu0
      %v1487 = vadd.f32 %v1414, %v1486
      %v1488 = vpop.f32.mrb[0].mxu0
      %1489 = vdwg.mxu0
      %v1490 = vadd.f32 %v1315, %v1487
      %v1491 = vld [vmem:[%s11] sm:$0x1]
      %v1492 = vld [vmem:[%s12] sm:$0x1]
      %v1493 = vsel %vm448, %v1490, 0.0
      %1494 = vadd.xlane.f32.xlu0 %v1493
      %v1495 = vpop.xlane.xlu0 %1494
      %v1496 = vmul.f32 %v1495, %v1291
      %v1497 = vsub.f32 %v1490, %v1496
      %v1498 = vmul.f32 %v1497, %v1497
      %v1499 = vsel %vm448, %v1498, 0.0
      %1500 = vadd.xlane.f32.xlu0 %v1499
      %v1501 = vpop.xlane.xlu0 %1500
      %v1502 = vmul.f32 %v1501, %v1291
      %v1503 = vadd.f32 %v1502, 1e-05
      %v1504 = vrsqrt.pop %v1503
      %v1505 = vmul.f32 %v1497, %v1504
      %v1507 = vlaneseq
      %v1508 = vshrl.u32 %v1507, 7
      %v1509 = vsub.s32 0, %v1508
      %v1510 = vrot.slane %v1491, %v1509
      %v1512 = vmul.f32 %v1505, %v1510
      %v1514 = vlaneseq
      %v1515 = vshrl.u32 %v1514, 7
      %v1516 = vsub.s32 0, %v1515
      %v1517 = vrot.slane %v1492, %v1516
      %v1519 = vadd.f32 %v1512, %v1517
      %1520 = vst.msk [vmem:[%s435] sm:$0xff] %vm448, %v1519
      %p1521 = scmp.lt.s32.totalorder %s24, 1
      %s1522 = scalar_select %p1521, %s24, 1
      %s1523 = smul.addr %s1522, 8
      %s1524 = scalar_lea.vmem %s13, %s1523
      // Predicated region
      $region73: #{encoder_forward.2} parent=71 // pred_check
        %p1525 = pneg %p320
      $region74: #{encoder_forward.2} parent=71 // pred_check_branch
        %1527 = sbr.rel (%p1525) target = $region76
      $region75: #{encoder_forward.2} parent=71 // pred_region
        _
      $region76: #{encoder_forward.2} parent=71 // pred_fallthru
        _
    $region72: #{encoder_forward.2} parent=5 // pred_fallthru
      _
    %p1528 = scmp.le.s32.totalorder 2, %s19
    // Predicated region
    $region77: #{encoder_forward.2} parent=5 // pred_check
      %p1529 = pneg %p1528
    $region78: #{encoder_forward.2} parent=5 // pred_check_branch
      %1531 = sbr.rel (%p1529) target = $region80
    $region79: #{encoder_forward.2} parent=5 // pred_region
      %s1532 = ssub.s32 %s19, 2
      // Predicated region
      $region81: #{encoder_forward.2} parent=79 // pred_check
        %p1533 = pneg %p326
      $region82: #{encoder_forward.2} parent=79 // pred_check_branch
        %1535 = sbr.rel (%p1533) target = $region84
      $region83: #{encoder_forward.2} parent=79 // pred_region
        %p1536 = scmp.lt.s32.totalorder %s25, 1
        %s1537 = scalar_select %p1536, %s25, 1
        %s1538 = smul.addr %s1537, 8
        %s1539 = scalar_lea.vmem %s13, %s1538
      $region84: #{encoder_forward.2} parent=79 // pred_fallthru
        _
    $region80: #{encoder_forward.2} parent=5 // pred_fallthru
      _
  $region6: #{encoder_forward.2} parent=0 // loop_footer
    %s23 = sadd.s32 1, %s19
  $region7: #{encoder_forward.2} parent=0 // loop_footer_branch
    %18 = sbr.rel target = $region3
  $region8: #{encoder_forward.2} parent=0 // loop_exit
    _

// kernel: encoder_forward.3
$region0: #{encoder_forward.3}
  #allocation0 [shape = 'u32[]', space=smem, size = 0x4, offset = 0x4, fixed_abs, tag = 'smem constant byte address 0x4 - core index']
  #allocation1 [shape = 'u32[144,128]{1,0:T(1,128)}', space=vmem, size = 0x12000, scoped, tag = 'internal scratch']
  %s0 = inlined_call_operand.vmem [shape: f32[2,8,32], index: 0, kind: input, shape index: {}]
  %s1 = inlined_call_operand.vmem [shape: f32[32,96], index: 1, kind: input, shape index: {}]
  %s2 = inlined_call_operand.vmem [shape: f32[1,96], index: 2, kind: input, shape index: {}]
  %s3 = inlined_call_operand.vmem [shape: f32[32,32], index: 3, kind: input, shape index: {}]
  %s4 = inlined_call_operand.vmem [shape: f32[1,32], index: 4, kind: input, shape index: {}]
  %s5 = inlined_call_operand.vmem [shape: f32[32,64], index: 5, kind: input, shape index: {}]
  %s6 = inlined_call_operand.vmem [shape: f32[1,64], index: 6, kind: input, shape index: {}]
  %s7 = inlined_call_operand.vmem [shape: f32[64,32], index: 7, kind: input, shape index: {}]
  %s8 = inlined_call_operand.vmem [shape: f32[1,32], index: 8, kind: input, shape index: {}]
  %s9 = inlined_call_operand.vmem [shape: f32[1,32], index: 9, kind: input, shape index: {}]
  %s10 = inlined_call_operand.vmem [shape: f32[1,32], index: 10, kind: input, shape index: {}]
  %s11 = inlined_call_operand.vmem [shape: f32[1,32], index: 11, kind: input, shape index: {}]
  %s12 = inlined_call_operand.vmem [shape: f32[1,32], index: 12, kind: input, shape index: {}]
  %s13 = inlined_call_operand.hbm [shape: f32[2,8,32], index: 13, kind: output, shape index: {}]
  %s14 = sld [smem:[#allocation0]]
  $region85: #{encoder_forward.3} parent=0
    _
  %s16 = ssub.s32 1, %s14
  %s17 = scalar_select 0, %s16, %s14
  $region1: #{encoder_forward.3} parent=0
    #allocation2 [shape = 'u8[8192]{0}', space=vmem, size = 0x2000, scoped, tag = 'output window, operand 0']
    #allocation3 [shape = 's32[2]{0}', space=sflag, size = 0x8, scoped, tag = 'scoped memory for encoder_forward.3']
    %18 = vsyncpa [#allocation3], 0
    %s19 = scalar_lea.sflag [#allocation3], 1
    %20 = vsyncpa %s19, 0
    loop: start=0, step=1, limit=4
    $region2: #{encoder_forward.3} parent=1 // loop_pre_header
      _
    $region3: #{encoder_forward.3} parent=1 // loop_header
      %s22 = sphi 0, %s26
      %p23 = scmp.ge.s32.totalorder %s22, 4
      %s32 = sphi 0, %s34
      %s35 = sphi 0, %s32
      %s36 = sphi 0, %s35
      %s52 = sphi 0, %s36
      %s56 = sphi 0, %s56
      %s58 = sphi 0, %s56
      %s59 = sphi 0, %s58
      %s73 = sphi 0, %s59
      %s77 = sphi 0, %s77
      %s79 = sphi 0, %s77
      %s80 = sphi 0, %s79
      %s94 = sphi 0, %s80
      %s98 = sphi 0, %s98
      %s100 = sphi 0, %s98
      %s101 = sphi 0, %s100
      %s115 = sphi 0, %s101
      %s119 = sphi 0, %s119
      %s121 = sphi 0, %s119
      %s122 = sphi 0, %s121
      %s136 = sphi 0, %s122
      %s140 = sphi 0, %s140
      %s142 = sphi 0, %s140
      %s143 = sphi 0, %s142
      %s157 = sphi 0, %s143
      %s161 = sphi 0, %s161
      %s163 = sphi 0, %s161
      %s164 = sphi 0, %s163
      %s178 = sphi 0, %s164
      %s182 = sphi 0, %s182
      %s184 = sphi 0, %s182
      %s185 = sphi 0, %s184
      %s199 = sphi 0, %s185
      %s203 = sphi 0, %s203
      %s205 = sphi 0, %s203
      %s206 = sphi 0, %s205
      %s220 = sphi 0, %s206
      %s224 = sphi 0, %s224
      %s226 = sphi 0, %s224
      %s227 = sphi 0, %s226
      %s241 = sphi 0, %s227
      %s245 = sphi 0, %s245
      %s247 = sphi 0, %s245
      %s248 = sphi 0, %s247
      %s262 = sphi 0, %s248
      %s266 = sphi 0, %s266
      %s268 = sphi 0, %s266
      %s269 = sphi 0, %s268
      %s283 = sphi 0, %s269
      %s287 = sphi 0, %s287
      %s289 = sphi 0, %s287
      %s290 = sphi 0, %s289
      %s304 = sphi 0, %s290
      %s310 = sphi 0, %s312
      %s313 = sphi 0, %s310
      %s314 = sphi 0, %s313
      %s330 = sphi 0, %s314
    $region4: #{encoder_forward.3} parent=1 // loop_header_branch
      %25 = sbr.rel (%p23) target = $region8
    $region5: #{encoder_forward.3} parent=1 // loop_body
      %s27 = ssub.s32 %s22, 1
      %s28 = ssub.s32 %s22, 2
      %s29 = sadd.s32 %s22, 1
      %s30 = ssub.s32 %s22, %s29
      %p31 = scmp.eq.s32.totalorder %s30, 0
      %s33 = sadd.s32 %s32, 1
      %s34 = scalar_select %p31, %s32, %s33
      %p37 = pneg %p31
      %p38 = scmp.eq.s32.totalorder %s22, 1
      %p39 = por %p37, %p38
      %p40 = scmp.ne.s32.totalorder %s32, %s35
      %p41 = scmp.eq.s32.totalorder %s22, 0
      %p42 = por %p40, %p41
      %p43 = scmp.ne.s32.totalorder %s32, %s35
      %p44 = scmp.eq.s32.totalorder %s27, 1
      %p45 = por %p43, %p44
      %p46 = scmp.ne.s32.totalorder %s35, %s36
      %p47 = scmp.eq.s32.totalorder %s27, 0
      %p48 = por %p46, %p47
      %p49 = scmp.ne.s32.totalorder %s35, %s36
      %p50 = scmp.eq.s32.totalorder %s28, 1
      %p51 = por %p49, %p50
      %p53 = scmp.ne.s32.totalorder %s36, %s52
      %p54 = scmp.eq.s32.totalorder %s28, 0
      %p55 = por %p53, %p54
      %s57 = sadd.s32 %s56, 1
      %p60 = scmp.eq.s32.totalorder %s22, 1
      %p61 = scmp.ne.s32.totalorder %s56, %s58
      %p62 = scmp.eq.s32.totalorder %s22, 0
      %p63 = por %p61, %p62
      %p64 = scmp.ne.s32.totalorder %s56, %s58
      %p65 = scmp.eq.s32.totalorder %s27, 1
      %p66 = por %p64, %p65
      %p67 = scmp.ne.s32.totalorder %s58, %s59
      %p68 = scmp.eq.s32.totalorder %s27, 0
      %p69 = por %p67, %p68
      %p70 = scmp.ne.s32.totalorder %s58, %s59
      %p71 = scmp.eq.s32.totalorder %s28, 1
      %p72 = por %p70, %p71
      %p74 = scmp.ne.s32.totalorder %s59, %s73
      %p75 = scmp.eq.s32.totalorder %s28, 0
      %p76 = por %p74, %p75
      %s78 = sadd.s32 %s77, 1
      %p81 = scmp.eq.s32.totalorder %s22, 1
      %p82 = scmp.ne.s32.totalorder %s77, %s79
      %p83 = scmp.eq.s32.totalorder %s22, 0
      %p84 = por %p82, %p83
      %p85 = scmp.ne.s32.totalorder %s77, %s79
      %p86 = scmp.eq.s32.totalorder %s27, 1
      %p87 = por %p85, %p86
      %p88 = scmp.ne.s32.totalorder %s79, %s80
      %p89 = scmp.eq.s32.totalorder %s27, 0
      %p90 = por %p88, %p89
      %p91 = scmp.ne.s32.totalorder %s79, %s80
      %p92 = scmp.eq.s32.totalorder %s28, 1
      %p93 = por %p91, %p92
      %p95 = scmp.ne.s32.totalorder %s80, %s94
      %p96 = scmp.eq.s32.totalorder %s28, 0
      %p97 = por %p95, %p96
      %s99 = sadd.s32 %s98, 1
      %p102 = scmp.eq.s32.totalorder %s22, 1
      %p103 = scmp.ne.s32.totalorder %s98, %s100
      %p104 = scmp.eq.s32.totalorder %s22, 0
      %p105 = por %p103, %p104
      %p106 = scmp.ne.s32.totalorder %s98, %s100
      %p107 = scmp.eq.s32.totalorder %s27, 1
      %p108 = por %p106, %p107
      %p109 = scmp.ne.s32.totalorder %s100, %s101
      %p110 = scmp.eq.s32.totalorder %s27, 0
      %p111 = por %p109, %p110
      %p112 = scmp.ne.s32.totalorder %s100, %s101
      %p113 = scmp.eq.s32.totalorder %s28, 1
      %p114 = por %p112, %p113
      %p116 = scmp.ne.s32.totalorder %s101, %s115
      %p117 = scmp.eq.s32.totalorder %s28, 0
      %p118 = por %p116, %p117
      %s120 = sadd.s32 %s119, 1
      %p123 = scmp.eq.s32.totalorder %s22, 1
      %p124 = scmp.ne.s32.totalorder %s119, %s121
      %p125 = scmp.eq.s32.totalorder %s22, 0
      %p126 = por %p124, %p125
      %p127 = scmp.ne.s32.totalorder %s119, %s121
      %p128 = scmp.eq.s32.totalorder %s27, 1
      %p129 = por %p127, %p128
      %p130 = scmp.ne.s32.totalorder %s121, %s122
      %p131 = scmp.eq.s32.totalorder %s27, 0
      %p132 = por %p130, %p131
      %p133 = scmp.ne.s32.totalorder %s121, %s122
      %p134 = scmp.eq.s32.totalorder %s28, 1
      %p135 = por %p133, %p134
      %p137 = scmp.ne.s32.totalorder %s122, %s136
      %p138 = scmp.eq.s32.totalorder %s28, 0
      %p139 = por %p137, %p138
      %s141 = sadd.s32 %s140, 1
      %p144 = scmp.eq.s32.totalorder %s22, 1
      %p145 = scmp.ne.s32.totalorder %s140, %s142
      %p146 = scmp.eq.s32.totalorder %s22, 0
      %p147 = por %p145, %p146
      %p148 = scmp.ne.s32.totalorder %s140, %s142
      %p149 = scmp.eq.s32.totalorder %s27, 1
      %p150 = por %p148, %p149
      %p151 = scmp.ne.s32.totalorder %s142, %s143
      %p152 = scmp.eq.s32.totalorder %s27, 0
      %p153 = por %p151, %p152
      %p154 = scmp.ne.s32.totalorder %s142, %s143
      %p155 = scmp.eq.s32.totalorder %s28, 1
      %p156 = por %p154, %p155
      %p158 = scmp.ne.s32.totalorder %s143, %s157
      %p159 = scmp.eq.s32.totalorder %s28, 0
      %p160 = por %p158, %p159
      %s162 = sadd.s32 %s161, 1
      %p165 = scmp.eq.s32.totalorder %s22, 1
      %p166 = scmp.ne.s32.totalorder %s161, %s163
      %p167 = scmp.eq.s32.totalorder %s22, 0
      %p168 = por %p166, %p167
      %p169 = scmp.ne.s32.totalorder %s161, %s163
      %p170 = scmp.eq.s32.totalorder %s27, 1
      %p171 = por %p169, %p170
      %p172 = scmp.ne.s32.totalorder %s163, %s164
      %p173 = scmp.eq.s32.totalorder %s27, 0
      %p174 = por %p172, %p173
      %p175 = scmp.ne.s32.totalorder %s163, %s164
      %p176 = scmp.eq.s32.totalorder %s28, 1
      %p177 = por %p175, %p176
      %p179 = scmp.ne.s32.totalorder %s164, %s178
      %p180 = scmp.eq.s32.totalorder %s28, 0
      %p181 = por %p179, %p180
      %s183 = sadd.s32 %s182, 1
      %p186 = scmp.eq.s32.totalorder %s22, 1
      %p187 = scmp.ne.s32.totalorder %s182, %s184
      %p188 = scmp.eq.s32.totalorder %s22, 0
      %p189 = por %p187, %p188
      %p190 = scmp.ne.s32.totalorder %s182, %s184
      %p191 = scmp.eq.s32.totalorder %s27, 1
      %p192 = por %p190, %p191
      %p193 = scmp.ne.s32.totalorder %s184, %s185
      %p194 = scmp.eq.s32.totalorder %s27, 0
      %p195 = por %p193, %p194
      %p196 = scmp.ne.s32.totalorder %s184, %s185
      %p197 = scmp.eq.s32.totalorder %s28, 1
      %p198 = por %p196, %p197
      %p200 = scmp.ne.s32.totalorder %s185, %s199
      %p201 = scmp.eq.s32.totalorder %s28, 0
      %p202 = por %p200, %p201
      %s204 = sadd.s32 %s203, 1
      %p207 = scmp.eq.s32.totalorder %s22, 1
      %p208 = scmp.ne.s32.totalorder %s203, %s205
      %p209 = scmp.eq.s32.totalorder %s22, 0
      %p210 = por %p208, %p209
      %p211 = scmp.ne.s32.totalorder %s203, %s205
      %p212 = scmp.eq.s32.totalorder %s27, 1
      %p213 = por %p211, %p212
      %p214 = scmp.ne.s32.totalorder %s205, %s206
      %p215 = scmp.eq.s32.totalorder %s27, 0
      %p216 = por %p214, %p215
      %p217 = scmp.ne.s32.totalorder %s205, %s206
      %p218 = scmp.eq.s32.totalorder %s28, 1
      %p219 = por %p217, %p218
      %p221 = scmp.ne.s32.totalorder %s206, %s220
      %p222 = scmp.eq.s32.totalorder %s28, 0
      %p223 = por %p221, %p222
      %s225 = sadd.s32 %s224, 1
      %p228 = scmp.eq.s32.totalorder %s22, 1
      %p229 = scmp.ne.s32.totalorder %s224, %s226
      %p230 = scmp.eq.s32.totalorder %s22, 0
      %p231 = por %p229, %p230
      %p232 = scmp.ne.s32.totalorder %s224, %s226
      %p233 = scmp.eq.s32.totalorder %s27, 1
      %p234 = por %p232, %p233
      %p235 = scmp.ne.s32.totalorder %s226, %s227
      %p236 = scmp.eq.s32.totalorder %s27, 0
      %p237 = por %p235, %p236
      %p238 = scmp.ne.s32.totalorder %s226, %s227
      %p239 = scmp.eq.s32.totalorder %s28, 1
      %p240 = por %p238, %p239
      %p242 = scmp.ne.s32.totalorder %s227, %s241
      %p243 = scmp.eq.s32.totalorder %s28, 0
      %p244 = por %p242, %p243
      %s246 = sadd.s32 %s245, 1
      %p249 = scmp.eq.s32.totalorder %s22, 1
      %p250 = scmp.ne.s32.totalorder %s245, %s247
      %p251 = scmp.eq.s32.totalorder %s22, 0
      %p252 = por %p250, %p251
      %p253 = scmp.ne.s32.totalorder %s245, %s247
      %p254 = scmp.eq.s32.totalorder %s27, 1
      %p255 = por %p253, %p254
      %p256 = scmp.ne.s32.totalorder %s247, %s248
      %p257 = scmp.eq.s32.totalorder %s27, 0
      %p258 = por %p256, %p257
      %p259 = scmp.ne.s32.totalorder %s247, %s248
      %p260 = scmp.eq.s32.totalorder %s28, 1
      %p261 = por %p259, %p260
      %p263 = scmp.ne.s32.totalorder %s248, %s262
      %p264 = scmp.eq.s32.totalorder %s28, 0
      %p265 = por %p263, %p264
      %s267 = sadd.s32 %s266, 1
      %p270 = scmp.eq.s32.totalorder %s22, 1
      %p271 = scmp.ne.s32.totalorder %s266, %s268
      %p272 = scmp.eq.s32.totalorder %s22, 0
      %p273 = por %p271, %p272
      %p274 = scmp.ne.s32.totalorder %s266, %s268
      %p275 = scmp.eq.s32.totalorder %s27, 1
      %p276 = por %p274, %p275
      %p277 = scmp.ne.s32.totalorder %s268, %s269
      %p278 = scmp.eq.s32.totalorder %s27, 0
      %p279 = por %p277, %p278
      %p280 = scmp.ne.s32.totalorder %s268, %s269
      %p281 = scmp.eq.s32.totalorder %s28, 1
      %p282 = por %p280, %p281
      %p284 = scmp.ne.s32.totalorder %s269, %s283
      %p285 = scmp.eq.s32.totalorder %s28, 0
      %p286 = por %p284, %p285
      %s288 = sadd.s32 %s287, 1
      %p291 = scmp.eq.s32.totalorder %s22, 1
      %p292 = scmp.ne.s32.totalorder %s287, %s289
      %p293 = scmp.eq.s32.totalorder %s22, 0
      %p294 = por %p292, %p293
      %p295 = scmp.ne.s32.totalorder %s287, %s289
      %p296 = scmp.eq.s32.totalorder %s27, 1
      %p297 = por %p295, %p296
      %p298 = scmp.ne.s32.totalorder %s289, %s290
      %p299 = scmp.eq.s32.totalorder %s27, 0
      %p300 = por %p298, %p299
      %p301 = scmp.ne.s32.totalorder %s289, %s290
      %p302 = scmp.eq.s32.totalorder %s28, 1
      %p303 = por %p301, %p302
      %p305 = scmp.ne.s32.totalorder %s290, %s304
      %p306 = scmp.eq.s32.totalorder %s28, 0
      %p307 = por %p305, %p306
      %s308 = ssub.s32 %s22, %s29
      %p309 = scmp.eq.s32.totalorder %s308, 0
      %s311 = sadd.s32 %s310, 1
      %s312 = scalar_select %p309, %s310, %s311
      %p315 = pneg %p309
      %p316 = scmp.eq.s32.totalorder %s22, 1
      %p317 = por %p315, %p316
      %p318 = scmp.ne.s32.totalorder %s310, %s313
      %p319 = scmp.eq.s32.totalorder %s22, 0
      %p320 = por %p318, %p319
      %p321 = scmp.ne.s32.totalorder %s310, %s313
      %p322 = scmp.eq.s32.totalorder %s27, 1
      %p323 = por %p321, %p322
      %p324 = scmp.ne.s32.totalorder %s313, %s314
      %p325 = scmp.eq.s32.totalorder %s27, 0
      %p326 = por %p324, %p325
      %p327 = scmp.ne.s32.totalorder %s313, %s314
      %p328 = scmp.eq.s32.totalorder %s28, 1
      %p329 = por %p327, %p328
      %p331 = scmp.ne.s32.totalorder %s314, %s330
      %p332 = scmp.eq.s32.totalorder %s28, 0
      %p333 = por %p331, %p332
      %p334 = scmp.le.s32.totalorder 1, %s22
      %p335 = scmp.lt.s32.totalorder %s22, 3
      %p336 = pnand %p334, %p335
      %p337 = pneg %p336
      // Predicated region
      $region9: #{encoder_forward.3} parent=5 // pred_check
        _
      $region10: #{encoder_forward.3} parent=5 // pred_check_branch
        %339 = sbr.rel (%p336) target = $region12
      $region11: #{encoder_forward.3} parent=5 // pred_region
        %s340 = ssub.s32 %s22, 1
        // Predicated region
        $region13: #{encoder_forward.3} parent=11 // pred_check
          %p341 = pneg %p69
        $region14: #{encoder_forward.3} parent=11 // pred_check_branch
          %343 = sbr.rel (%p341) target = $region16
        $region15: #{encoder_forward.3} parent=11 // pred_region
          _
        $region16: #{encoder_forward.3} parent=11 // pred_fallthru
          _
        // Predicated region
        $region17: #{encoder_forward.3} parent=11 // pred_check
          %p344 = pneg %p90
        $region18: #{encoder_forward.3} parent=11 // pred_check_branch
          %346 = sbr.rel (%p344) target = $region20
        $region19: #{encoder_forward.3} parent=11 // pred_region
          _
        $region20: #{encoder_forward.3} parent=11 // pred_fallthru
          _
        // Predicated region
        $region21: #{encoder_forward.3} parent=11 // pred_check
          %p347 = pneg %p111
        $region22: #{encoder_forward.3} parent=11 // pred_check_branch
          %349 = sbr.rel (%p347) target = $region24
        $region23: #{encoder_forward.3} parent=11 // pred_region
          _
        $region24: #{encoder_forward.3} parent=11 // pred_fallthru
          _
        // Predicated region
        $region25: #{encoder_forward.3} parent=11 // pred_check
          %p350 = pneg %p132
        $region26: #{encoder_forward.3} parent=11 // pred_check_branch
          %352 = sbr.rel (%p350) target = $region28
        $region27: #{encoder_forward.3} parent=11 // pred_region
          _
        $region28: #{encoder_forward.3} parent=11 // pred_fallthru
          _
        // Predicated region
        $region29: #{encoder_forward.3} parent=11 // pred_check
          %p353 = pneg %p153
        $region30: #{encoder_forward.3} parent=11 // pred_check_branch
          %355 = sbr.rel (%p353) target = $region32
        $region31: #{encoder_forward.3} parent=11 // pred_region
          _
        $region32: #{encoder_forward.3} parent=11 // pred_fallthru
          _
        // Predicated region
        $region33: #{encoder_forward.3} parent=11 // pred_check
          %p356 = pneg %p174
        $region34: #{encoder_forward.3} parent=11 // pred_check_branch
          %358 = sbr.rel (%p356) target = $region36
        $region35: #{encoder_forward.3} parent=11 // pred_region
          _
        $region36: #{encoder_forward.3} parent=11 // pred_fallthru
          _
        // Predicated region
        $region37: #{encoder_forward.3} parent=11 // pred_check
          %p359 = pneg %p195
        $region38: #{encoder_forward.3} parent=11 // pred_check_branch
          %361 = sbr.rel (%p359) target = $region40
        $region39: #{encoder_forward.3} parent=11 // pred_region
          _
        $region40: #{encoder_forward.3} parent=11 // pred_fallthru
          _
        // Predicated region
        $region41: #{encoder_forward.3} parent=11 // pred_check
          %p362 = pneg %p216
        $region42: #{encoder_forward.3} parent=11 // pred_check_branch
          %364 = sbr.rel (%p362) target = $region44
        $region43: #{encoder_forward.3} parent=11 // pred_region
          _
        $region44: #{encoder_forward.3} parent=11 // pred_fallthru
          _
        // Predicated region
        $region45: #{encoder_forward.3} parent=11 // pred_check
          %p365 = pneg %p237
        $region46: #{encoder_forward.3} parent=11 // pred_check_branch
          %367 = sbr.rel (%p365) target = $region48
        $region47: #{encoder_forward.3} parent=11 // pred_region
          _
        $region48: #{encoder_forward.3} parent=11 // pred_fallthru
          _
        // Predicated region
        $region49: #{encoder_forward.3} parent=11 // pred_check
          %p368 = pneg %p258
        $region50: #{encoder_forward.3} parent=11 // pred_check_branch
          %370 = sbr.rel (%p368) target = $region52
        $region51: #{encoder_forward.3} parent=11 // pred_region
          _
        $region52: #{encoder_forward.3} parent=11 // pred_fallthru
          _
        // Predicated region
        $region53: #{encoder_forward.3} parent=11 // pred_check
          %p371 = pneg %p279
        $region54: #{encoder_forward.3} parent=11 // pred_check_branch
          %373 = sbr.rel (%p371) target = $region56
        $region55: #{encoder_forward.3} parent=11 // pred_region
          _
        $region56: #{encoder_forward.3} parent=11 // pred_fallthru
          _
        // Predicated region
        $region57: #{encoder_forward.3} parent=11 // pred_check
          %p374 = pneg %p300
        $region58: #{encoder_forward.3} parent=11 // pred_check_branch
          %376 = sbr.rel (%p374) target = $region60
        $region59: #{encoder_forward.3} parent=11 // pred_region
          _
        $region60: #{encoder_forward.3} parent=11 // pred_fallthru
          _
      $region12: #{encoder_forward.3} parent=5 // pred_fallthru
        _
      %p377 = scmp.lt.s32.totalorder %s22, 2
      // Predicated region
      $region61: #{encoder_forward.3} parent=5 // pred_check
        %p378 = pneg %p377
      $region62: #{encoder_forward.3} parent=5 // pred_check_branch
        %380 = sbr.rel (%p378) target = $region64
      $region63: #{encoder_forward.3} parent=5 // pred_region
        // Predicated region
        $region65: #{encoder_forward.3} parent=63 // pred_check
          %p381 = pneg %p42
        $region66: #{encoder_forward.3} parent=63 // pred_check_branch
          %383 = sbr.rel (%p381) target = $region68
        $region67: #{encoder_forward.3} parent=63 // pred_region
          %p384 = scmp.lt.s32.totalorder %s22, 1
          %s385 = scalar_select %p384, %s22, 1
          %s386 = smul.addr %s385, 8
          %s387 = scalar_lea.vmem %s0, %s386
        $region68: #{encoder_forward.3} parent=63 // pred_fallthru
          _
      $region64: #{encoder_forward.3} parent=5 // pred_fallthru
        _
      %p388 = scmp.le.s32.totalorder 1, %s22
      %p389 = scmp.lt.s32.totalorder %s22, 3
      %p390 = pnand %p388, %p389
      %p391 = pneg %p390
      // Predicated region
      $region69: #{encoder_forward.3} parent=5 // pred_check
        _
      $region70: #{encoder_forward.3} parent=5 // pred_check_branch
        %393 = sbr.rel (%p390) target = $region72
      $region71: #{encoder_forward.3} parent=5 // pred_region
        %s394 = ssub.s32 %s22, 1
        %p395 = scmp.lt.s32.totalorder %s27, 1
        %s396 = scalar_select %p395, %s27, 1
        %s397 = smul.addr %s396, 8
        %s398 = scalar_lea.vmem %s0, %s397
        %p399 = pneg %p48
        %p400 = pneg %p45
        %p401 = pneg %p69
        %p402 = pneg %p66
        %p403 = pneg %p90
        %p404 = pneg %p87
        %p405 = pneg %p111
        %p406 = pneg %p108
        %p407 = pneg %p132
        %p408 = pneg %p129
        %p409 = pneg %p153
        %p410 = pneg %p150
        %p411 = pneg %p174
        %p412 = pneg %p171
        %p413 = pneg %p195
        %p414 = pneg %p192
        %p415 = pneg %p216
        %p416 = pneg %p213
        %p417 = pneg %p237
        %p418 = pneg %p234
        %p419 = pneg %p258
        %p420 = pneg %p255
        %p421 = pneg %p279
        %p422 = pneg %p276
        %p423 = pneg %p300
        %p424 = pneg %p297
        %p425 = pneg %p326
        %p426 = pneg %p323
        %s427 = sand.u32 %s313, 1
        %s428 = scalar_lea.sflag [#allocation3], %s427
        %s429 = sand.u32 %s313, 1
        %s430 = smul.addr %s429, 8
        %s431 = scalar_lea.vmem [#allocation2], %s430
        %p432 = scmp.lt.s32.totalorder %s27, 1
        %s433 = scalar_select %p432, %s27, 1
        %s434 = smul.addr %s433, 8
        %s435 = scalar_lea.vmem %s0, %s434
        %v436 = vld [vmem:[%s435] sm:$0xff]
        %v437 = vld [vmem:[%s1] sm:$0xff]
        %v438 = vld [vmem:[%s1 + $0x8] sm:$0xff]
        %v439 = vld [vmem:[%s1 + $0x10] sm:$0xff]
        %v440 = vld [vmem:[%s1 + $0x18] sm:$0xff]
        %v441 = vld [vmem:[%s2] sm:$0x1]
        %v443 = vlaneseq
        %v444 = vshrl.u32 %v443, 7
        %v445 = vsub.s32 0, %v444
        %v446 = vrot.slane %v441, %v445
        %vm448 = vcmask 261120
        %v450 = vsel %vm448, %v436, 0
        %452 = vmatprep.subr.mxu0 0.0
        %453 = vmatpush1.msra.mxu0 %v437
        %454 = vmatprep.subr.mxu0 0.0
        %455 = vmatpush1.msra.mxu0 %v438
        %456 = vmatprep.subr.mxu0 0.0
        %457 = vmatpush1.msra.mxu0 %v439
        %458 = vmatprep.subr.mxu0 0.0
        %459 = vmatpush1.msra.mxu0 %v440
        %460 = vmatprep.subr.mxu0 0.0
        %461 = vmatpush1.msra.mxu0 0.0
        %462 = vmatprep.subr.mxu0 0.0
        %463 = vmatpush1.msra.mxu0 0.0
        %464 = vmatprep.subr.mxu0 0.0
        %465 = vmatpush1.msra.mxu0 0.0
        %466 = vmatprep.subr.mxu0 0.0
        %467 = vmatpush1.msra.mxu0 0.0
        %468 = vmatprep.subr.mxu0 0.0
        %469 = vmatpush1.msra.mxu0 0.0
        %470 = vmatprep.subr.mxu0 0.0
        %471 = vmatpush1.msra.mxu0 0.0
        %472 = vmatprep.subr.mxu0 0.0
        %473 = vmatpush1.msra.mxu0 0.0
        %474 = vmatprep.subr.mxu0 0.0
        %475 = vmatpush1.msra.mxu0 0.0
        %476 = vmatprep.subr.mxu0 0.0
        %477 = vmatpush1.msra.mxu0 0.0
        %478 = vmatprep.subr.mxu0 0.0
        %479 = vmatpush1.msra.mxu0 0.0
        %480 = vmatprep.subr.mxu0 0.0
        %481 = vmatpush1.msra.mxu0 0.0
        %482 = vmatprep.subr.mxu0 0.0
        %483 = vmatpush1.msra.mxu0 0.0
        %484 = vmatprep.subr.mxu0 0.0
        %485 = vmatpush1.msra.mxu0 0.0
        %486 = vmatprep.subr.mxu0 0.0
        %487 = vmatpush1.msra.mxu0 0.0
        %488 = vmatprep.subr.mxu0 0.0
        %489 = vmatpush1.msra.mxu0 0.0
        %490 = vmatprep.subr.mxu0 0.0
        %491 = vmatpush1.msra.mxu0 0.0
        %492 = vmatprep.subr.mxu0 0.0
        %493 = vmatpush1.msra.mxu0 0.0
        %494 = vmatprep.subr.mxu0 0.0
        %495 = vmatpush1.msra.mxu0 0.0
        %496 = vmatprep.subr.mxu0 0.0
        %497 = vmatpush1.msra.mxu0 0.0
        %498 = vmatprep.subr.mxu0 0.0
        %499 = vmatpush1.msra.mxu0 0.0
        %500 = vmatprep.subr.mxu0 0.0
        %501 = vmatpush1.msra.mxu0 0.0
        %502 = vmatprep.subr.mxu0 0.0
        %503 = vmatpush1.msra.mxu0 0.0
        %504 = vmatprep.subr.mxu0 0.0
        %505 = vmatpush1.msra.mxu0 0.0
        %506 = vmatprep.subr.mxu0 0.0
        %507 = vmatpush1.msra.mxu0 0.0
        %508 = vmatprep.subr.mxu0 0.0
        %509 = vmatpush1.msra.mxu0 0.0
        %510 = vmatprep.subr.mxu0 0.0
        %511 = vmatpush1.msra.mxu0 0.0
        %512 = vmatprep.subr.mxu0 0.0
        %513 = vmatpush1.msra.mxu0 0.0
        %514 = vmatprep.subr.mxu0 0.0
        %515 = vmatpush1.msra.mxu0 0.0
        %516 = vmatprep.mubr.f32.mxu0 0.0
        %517 = vmatmul.mubr.f32.gmra.mrb[0].mxu0 %v450
        %v518 = vpop.f32.mrb[0].mxu0
        %v519 = vadd.f32 %v446, %v518
        %v520 = vpop.f32.mrb[0].mxu0
        %521 = vdwg.mxu0
        %v522 = vmul.f32 %v519, 0.35355338
        %524 = vrot.lane.b32.xlu0 %v519, 96
        %v525 = vpop.permute.xlu0 %524
        %vm526 = vcmask 64512
        %v528 = vsel %vm526, %v522, 0
        %v530 = vsel %vm526, %v525, 0
        %532 = vmatprep.subr.mxu0 0.0
        %533 = vmatpush1.xpose.msra.mxu0 %v530
        %534 = vmatprep.subr.mxu0 0.0
        %535 = vmatpush1.xpose.msra.mxu0 0.0
        %536 = vmatprep.subr.mxu0 0.0
        %537 = vmatpush1.xpose.msra.mxu0 0.0
        %538 = vmatprep.subr.mxu0 0.0
        %539 = vmatpush1.xpose.msra.mxu0 0.0
        %540 = vmatprep.subr.mxu0 0.0
        %541 = vmatpush1.xpose.msra.mxu0 0.0
        %542 = vmatprep.subr.mxu0 0.0
        %543 = vmatpush1.xpose.msra.mxu0 0.0
        %544 = vmatprep.subr.mxu0 0.0
        %545 = vmatpush1.xpose.msra.mxu0 0.0
        %546 = vmatprep.subr.mxu0 0.0
        %547 = vmatpush1.xpose.msra.mxu0 0.0
        %548 = vmatprep.subr.mxu0 0.0
        %549 = vmatpush1.xpose.msra.mxu0 0.0
        %550 = vmatprep.subr.mxu0 0.0
        %551 = vmatpush1.xpose.msra.mxu0 0.0
        %552 = vmatprep.subr.mxu0 0.0
        %553 = vmatpush1.xpose.msra.mxu0 0.0
        %554 = vmatprep.subr.mxu0 0.0
        %555 = vmatpush1.xpose.msra.mxu0 0.0
        %556 = vmatprep.subr.mxu0 0.0
        %557 = vmatpush1.xpose.msra.mxu0 0.0
        %558 = vmatprep.subr.mxu0 0.0
        %559 = vmatpush1.xpose.msra.mxu0 0.0
        %560 = vmatprep.subr.mxu0 0.0
        %561 = vmatpush1.xpose.msra.mxu0 0.0
        %562 = vmatprep.subr.mxu0 0.0
        %563 = vmatpush1.xpose.msra.mxu0 0.0
        %564 = vmatprep.subr.mxu0 0.0
        %565 = vmatpush1.xpose.msra.mxu0 0.0
        %566 = vmatprep.subr.mxu0 0.0
        %567 = vmatpush1.xpose.msra.mxu0 0.0
        %568 = vmatprep.subr.mxu0 0.0
        %569 = vmatpush1.xpose.msra.mxu0 0.0
        %570 = vmatprep.subr.mxu0 0.0
        %571 = vmatpush1.xpose.msra.mxu0 0.0
        %572 = vmatprep.subr.mxu0 0.0
        %573 = vmatpush1.xpose.msra.mxu0 0.0
        %574 = vmatprep.subr.mxu0 0.0
        %575 = vmatpush1.xpose.msra.mxu0 0.0
        %576 = vmatprep.subr.mxu0 0.0
        %577 = vmatpush1.xpose.msra.mxu0 0.0
        %578 = vmatprep.subr.mxu0 0.0
        %579 = vmatpush1.xpose.msra.mxu0 0.0
        %580 = vmatprep.subr.mxu0 0.0
        %581 = vmatpush1.xpose.msra.mxu0 0.0
        %582 = vmatprep.subr.mxu0 0.0
        %583 = vmatpush1.xpose.msra.mxu0 0.0
        %584 = vmatprep.subr.mxu0 0.0
        %585 = vmatpush1.xpose.msra.mxu0 0.0
        %586 = vmatprep.subr.mxu0 0.0
        %587 = vmatpush1.xpose.msra.mxu0 0.0
        %588 = vmatprep.subr.mxu0 0.0
        %589 = vmatpush1.xpose.msra.mxu0 0.0
        %590 = vmatprep.subr.mxu0 0.0
        %591 = vmatpush1.xpose.msra.mxu0 0.0
        %592 = vmatprep.subr.mxu0 0.0
        %593 = vmatpush1.xpose.msra.mxu0 0.0
        %594 = vmatprep.subr.mxu0 0.0
        %595 = vmatpush1.xpose.msra.mxu0 0.0
        %596 = vmatprep.mubr.f32.mxu0 0.0
        %597 = vmatmul.mubr.f32.gmra.mrb[0].mxu0 %v528
        %v598 = vpop.f32.mrb[0].mxu0
        %v599 = vadd.f32 0.0, %v598
        %v600 = vpop.f32.mrb[0].mxu0
        %601 = vdwg.mxu0
        %v602 = vsel %vm526, %v599, -inf
        %603 = vmax.xlane.f32.xlu0 %v602
        %v604 = vpop.xlane.xlu0 %603
        %v605 = vsub.f32 %v599, %v604
        %v606 = vmul.f32 %v605, 1.442695
        %v607 = vpow.pop %v606
        %v608 = vsel %vm526, %v607, 0.0
        %609 = vadd.xlane.f32.xlu0 %v608
        %v610 = vpop.xlane.xlu0 %609
        %v611 = vrcp.pop %v610
        %v612 = vmul.f32 %v607, %v611
        %613 = vrot.lane.b32.xlu0 %v519, 64
        %v614 = vpop.permute.xlu0 %613
        %v617 = vsel %vm526, %v612, 0
        %619 = vmatprep.subr.mxu0 0.0
        %620 = vmatpush1.msra.mxu0 %v614
        %621 = vmatprep.subr.mxu0 0.0
        %622 = vmatpush1.msra.mxu0 0.0
        %623 = vmatprep.subr.mxu0 0.0
        %624 = vmatpush1.msra.mxu0 0.0
        %625 = vmatprep.subr.mxu0 0.0
        %626 = vmatpush1.msra.mxu0 0.0
        %627 = vmatprep.subr.mxu0 0.0
        %628 = vmatpush1.msra.mxu0 0.0
        %629 = vmatprep.subr.mxu0 0.0
        %630 = vmatpush1.msra.mxu0 0.0
        %631 = vmatprep.subr.mxu0 0.0
        %632 = vmatpush1.msra.mxu0 0.0
        %633 = vmatprep.subr.mxu0 0.0
        %634 = vmatpush1.msra.mxu0 0.0
        %635 = vmatprep.subr.mxu0 0.0
        %636 = vmatpush1.msra.mxu0 0.0
        %637 = vmatprep.subr.mxu0 0.0
        %638 = vmatpush1.msra.mxu0 0.0
        %639 = vmatprep.subr.mxu0 0.0
        %640 = vmatpush1.msra.mxu0 0.0
        %641 = vmatprep.subr.mxu0 0.0
        %642 = vmatpush1.msra.mxu0 0.0
        %643 = vmatprep.subr.mxu0 0.0
        %644 = vmatpush1.msra.mxu0 0.0
        %645 = vmatprep.subr.mxu0 0.0
        %646 = vmatpush1.msra.mxu0 0.0
        %647 = vmatprep.subr.mxu0 0.0
        %648 = vmatpush1.msra.mxu0 0.0
        %649 = vmatprep.subr.mxu0 0.0
        %650 = vmatpush1.msra.mxu0 0.0
        %651 = vmatprep.subr.mxu0 0.0
        %652 = vmatpush1.msra.mxu0 0.0
        %653 = vmatprep.subr.mxu0 0.0
        %654 = vmatpush1.msra.mxu0 0.0
        %655 = vmatprep.subr.mxu0 0.0
        %656 = vmatpush1.msra.mxu0 0.0
        %657 = vmatprep.subr.mxu0 0.0
        %658 = vmatpush1.msra.mxu0 0.0
        %659 = vmatprep.subr.mxu0 0.0
        %660 = vmatpush1.msra.mxu0 0.0
        %661 = vmatprep.subr.mxu0 0.0
        %662 = vmatpush1.msra.mxu0 0.0
        %663 = vmatprep.subr.mxu0 0.0
        %664 = vmatpush1.msra.mxu0 0.0
        %665 = vmatprep.subr.mxu0 0.0
        %666 = vmatpush1.msra.mxu0 0.0
        %667 = vmatprep.subr.mxu0 0.0
        %668 = vmatpush1.msra.mxu0 0.0
        %669 = vmatprep.subr.mxu0 0.0
        %670 = vmatpush1.msra.mxu0 0.0
        %671 = vmatprep.subr.mxu0 0.0
        %672 = vmatpush1.msra.mxu0 0.0
        %673 = vmatprep.subr.mxu0 0.0
        %674 = vmatpush1.msra.mxu0 0.0
        %675 = vmatprep.subr.mxu0 0.0
        %676 = vmatpush1.msra.mxu0 0.0
        %677 = vmatprep.subr.mxu0 0.0
        %678 = vmatpush1.msra.mxu0 0.0
        %679 = vmatprep.subr.mxu0 0.0
        %680 = vmatpush1.msra.mxu0 0.0
        %681 = vmatprep.subr.mxu0 0.0
        %682 = vmatpush1.msra.mxu0 0.0
        %683 = vmatprep.mubr.f32.mxu0 0.0
        %684 = vmatmul.mubr.f32.gmra.mrb[0].mxu0 %v617
        %v685 = vpop.f32.mrb[0].mxu0
        %v686 = vadd.f32 0.0, %v685
        %v687 = vpop.f32.mrb[0].mxu0
        %688 = vdwg.mxu0
        %689 = vrot.lane.b32.xlu0 %v522, 120
        %v690 = vpop.permute.xlu0 %689
        %691 = vrot.lane.b32.xlu0 %v519, 88
        %v692 = vpop.permute.xlu0 %691
        %v693 = vsel %vm526, %v690, 0
        %v695 = vsel %vm526, %v692, 0
        %697 = vmatprep.subr.mxu0 0.0
        %698 = vmatpush1.xpose.msra.mxu0 %v695
        %699 = vmatprep.subr.mxu0 0.0
        %700 = vmatpush1.xpose.msra.mxu0 0.0
        %701 = vmatprep.subr.mxu0 0.0
        %702 = vmatpush1.xpose.msra.mxu0 0.0
        %703 = vmatprep.subr.mxu0 0.0
        %704 = vmatpush1.xpose.msra.mxu0 0.0
        %705 = vmatprep.subr.mxu0 0.0
        %706 = vmatpush1.xpose.msra.mxu0 0.0
        %707 = vmatprep.subr.mxu0 0.0
        %708 = vmatpush1.xpose.msra.mxu0 0.0
        %709 = vmatprep.subr.mxu0 0.0
        %710 = vmatpush1.xpose.msra.mxu0 0.0
        %711 = vmatprep.subr.mxu0 0.0
        %712 = vmatpush1.xpose.msra.mxu0 0.0
        %713 = vmatprep.subr.mxu0 0.0
        %714 = vmatpush1.xpose.msra.mxu0 0.0
        %715 = vmatprep.subr.mxu0 0.0
        %716 = vmatpush1.xpose.msra.mxu0 0.0
        %717 = vmatprep.subr.mxu0 0.0
        %718 = vmatpush1.xpose.msra.mxu0 0.0
        %719 = vmatprep.subr.mxu0 0.0
        %720 = vmatpush1.xpose.msra.mxu0 0.0
        %721 = vmatprep.subr.mxu0 0.0
        %722 = vmatpush1.xpose.msra.mxu0 0.0
        %723 = vmatprep.subr.mxu0 0.0
        %724 = vmatpush1.xpose.msra.mxu0 0.0
        %725 = vmatprep.subr.mxu0 0.0
        %726 = vmatpush1.xpose.msra.mxu0 0.0
        %727 = vmatprep.subr.mxu0 0.0
        %728 = vmatpush1.xpose.msra.mxu0 0.0
        %729 = vmatprep.subr.mxu0 0.0
        %730 = vmatpush1.xpose.msra.mxu0 0.0
        %731 = vmatprep.subr.mxu0 0.0
        %732 = vmatpush1.xpose.msra.mxu0 0.0
        %733 = vmatprep.subr.mxu0 0.0
        %734 = vmatpush1.xpose.msra.mxu0 0.0
        %735 = vmatprep.subr.mxu0 0.0
        %736 = vmatpush1.xpose.msra.mxu0 0.0
        %737 = vmatprep.subr.mxu0 0.0
        %738 = vmatpush1.xpose.msra.mxu0 0.0
        %739 = vmatprep.subr.mxu0 0.0
        %740 = vmatpush1.xpose.msra.mxu0 0.0
        %741 = vmatprep.subr.mxu0 0.0
        %742 = vmatpush1.xpose.msra.mxu0 0.0
        %743 = vmatprep.subr.mxu0 0.0
        %744 = vmatpush1.xpose.msra.mxu0 0.0
        %745 = vmatprep.subr.mxu0 0.0
        %746 = vmatpush1.xpose.msra.mxu0 0.0
        %747 = vmatprep.subr.mxu0 0.0
        %748 = vmatpush1.xpose.msra.mxu0 0.0
        %749 = vmatprep.subr.mxu0 0.0
        %750 = vmatpush1.xpose.msra.mxu0 0.0
        %751 = vmatprep.subr.mxu0 0.0
        %752 = vmatpush1.xpose.msra.mxu0 0.0
        %753 = vmatprep.subr.mxu0 0.0
        %754 = vmatpush1.xpose.msra.mxu0 0.0
        %755 = vmatprep.subr.mxu0 0.0
        %756 = vmatpush1.xpose.msra.mxu0 0.0
        %757 = vmatprep.subr.mxu0 0.0
        %758 = vmatpush1.xpose.msra.mxu0 0.0
        %759 = vmatprep.subr.mxu0 0.0
        %760 = vmatpush1.xpose.msra.mxu0 0.0
        %761 = vmatprep.mubr.f32.mxu0 0.0
        %762 = vmatmul.mubr.f32.gmra.mrb[0].mxu0 %v693
        %v763 = vpop.f32.mrb[0].mxu0
        %v764 = vadd.f32 0.0, %v763
        %v765 = vpop.f32.mrb[0].mxu0
        %766 = vdwg.mxu0
        %v767 = vsel %vm526, %v764, -inf
        %768 = vmax.xlane.f32.xlu0 %v767
        %v769 = vpop.xlane.xlu0 %768
        %v770 = vsub.f32 %v764, %v769
        %v771 = vmul.f32 %v770, 1.442695
        %v772 = vpow.pop %v771
        %v773 = vsel %vm526, %v772, 0.0
        %774 = vadd.xlane.f32.xlu0 %v773
        %v775 = vpop.xlane.xlu0 %774
        %v776 = vrcp.pop %v775
        %v777 = vmul.f32 %v772, %v776
        %778 = vrot.lane.b32.xlu0 %v519, 56
        %v779 = vpop.permute.xlu0 %778
        %v782 = vsel %vm526, %v777, 0
        %784 = vmatprep.subr.mxu0 0.0
        %785 = vmatpush1.msra.mxu0 %v779
        %786 = vmatprep.subr.mxu0 0.0
        %787 = vmatpush1.msra.mxu0 0.0
        %788 = vmatprep.subr.mxu0 0.0
        %789 = vmatpush1.msra.mxu0 0.0
        %790 = vmatprep.subr.mxu0 0.0
        %791 = vmatpush1.msra.mxu0 0.0
        %792 = vmatprep.subr.mxu0 0.0
        %793 = vmatpush1.msra.mxu0 0.0
        %794 = vmatprep.subr.mxu0 0.0
        %795 = vmatpush1.msra.mxu0 0.0
        %796 = vmatprep.subr.mxu0 0.0
        %797 = vmatpush1.msra.mxu0 0.0
        %798 = vmatprep.subr.mxu0 0.0
        %799 = vmatpush1.msra.mxu0 0.0
        %800 = vmatprep.subr.mxu0 0.0
        %801 = vmatpush1.msra.mxu0 0.0
        %802 = vmatprep.subr.mxu0 0.0
        %803 = vmatpush1.msra.mxu0 0.0
        %804 = vmatprep.subr.mxu0 0.0
        %805 = vmatpush1.msra.mxu0 0.0
        %806 = vmatprep.subr.mxu0 0.0
        %807 = vmatpush1.msra.mxu0 0.0
        %808 = vmatprep.subr.mxu0 0.0
        %809 = vmatpush1.msra.mxu0 0.0
        %810 = vmatprep.subr.mxu0 0.0
        %811 = vmatpush1.msra.mxu0 0.0
        %812 = vmatprep.subr.mxu0 0.0
        %813 = vmatpush1.msra.mxu0 0.0
        %814 = vmatprep.subr.mxu0 0.0
        %815 = vmatpush1.msra.mxu0 0.0
        %816 = vmatprep.subr.mxu0 0.0
        %817 = vmatpush1.msra.mxu0 0.0
        %818 = vmatprep.subr.mxu0 0.0
        %819 = vmatpush1.msra.mxu0 0.0
        %820 = vmatprep.subr.mxu0 0.0
        %821 = vmatpush1.msra.mxu0 0.0
        %822 = vmatprep.subr.mxu0 0.0
        %823 = vmatpush1.msra.mxu0 0.0
        %824 = vmatprep.subr.mxu0 0.0
        %825 = vmatpush1.msra.mxu0 0.0
        %826 = vmatprep.subr.mxu0 0.0
        %827 = vmatpush1.msra.mxu0 0.0
        %828 = vmatprep.subr.mxu0 0.0
        %829 = vmatpush1.msra.mxu0 0.0
        %830 = vmatprep.subr.mxu0 0.0
        %831 = vmatpush1.msra.mxu0 0.0
        %832 = vmatprep.subr.mxu0 0.0
        %833 = vmatpush1.msra.mxu0 0.0
        %834 = vmatprep.subr.mxu0 0.0
        %835 = vmatpush1.msra.mxu0 0.0
        %836 = vmatprep.subr.mxu0 0.0
        %837 = vmatpush1.msra.mxu0 0.0
        %838 = vmatprep.subr.mxu0 0.0
        %839 = vmatpush1.msra.mxu0 0.0
        %840 = vmatprep.subr.mxu0 0.0
        %841 = vmatpush1.msra.mxu0 0.0
        %842 = vmatprep.subr.mxu0 0.0
        %843 = vmatpush1.msra.mxu0 0.0
        %844 = vmatprep.subr.mxu0 0.0
        %845 = vmatpush1.msra.mxu0 0.0
        %846 = vmatprep.subr.mxu0 0.0
        %847 = vmatpush1.msra.mxu0 0.0
        %848 = vmatprep.mubr.f32.mxu0 0.0
        %849 = vmatmul.mubr.f32.gmra.mrb[0].mxu0 %v782
        %v850 = vpop.f32.mrb[0].mxu0
        %v851 = vadd.f32 0.0, %v850
        %v852 = vpop.f32.mrb[0].mxu0
        %853 = vdwg.mxu0
        %854 = vrot.lane.b32.xlu0 %v522, 112
        %v855 = vpop.permute.xlu0 %854
        %856 = vrot.lane.b32.xlu0 %v519, 80
        %v857 = vpop.permute.xlu0 %856
        %v858 = vsel %vm526, %v855, 0
        %v860 = vsel %vm526, %v857, 0
        %862 = vmatprep.subr.mxu0 0.0
        %863 = vmatpush1.xpose.msra.mxu0 %v860
        %864 = vmatprep.subr.mxu0 0.0
        %865 = vmatpush1.xpose.msra.mxu0 0.0
        %866 = vmatprep.subr.mxu0 0.0
        %867 = vmatpush1.xpose.msra.mxu0 0.0
        %868 = vmatprep.subr.mxu0 0.0
        %869 = vmatpush1.xpose.msra.mxu0 0.0
        %870 = vmatprep.subr.mxu0 0.0
        %871 = vmatpush1.xpose.msra.mxu0 0.0
        %872 = vmatprep.subr.mxu0 0.0
        %873 = vmatpush1.xpose.msra.mxu0 0.0
        %874 = vmatprep.subr.mxu0 0.0
        %875 = vmatpush1.xpose.msra.mxu0 0.0
        %876 = vmatprep.subr.mxu0 0.0
        %877 = vmatpush1.xpose.msra.mxu0 0.0
        %878 = vmatprep.subr.mxu0 0.0
        %879 = vmatpush1.xpose.msra.mxu0 0.0
        %880 = vmatprep.subr.mxu0 0.0
        %881 = vmatpush1.xpose.msra.mxu0 0.0
        %882 = vmatprep.subr.mxu0 0.0
        %883 = vmatpush1.xpose.msra.mxu0 0.0
        %884 = vmatprep.subr.mxu0 0.0
        %885 = vmatpush1.xpose.msra.mxu0 0.0
        %886 = vmatprep.subr.mxu0 0.0
        %887 = vmatpush1.xpose.msra.mxu0 0.0
        %888 = vmatprep.subr.mxu0 0.0
        %889 = vmatpush1.xpose.msra.mxu0 0.0
        %890 = vmatprep.subr.mxu0 0.0
        %891 = vmatpush1.xpose.msra.mxu0 0.0
        %892 = vmatprep.subr.mxu0 0.0
        %893 = vmatpush1.xpose.msra.mxu0 0.0
        %894 = vmatprep.subr.mxu0 0.0
        %895 = vmatpush1.xpose.msra.mxu0 0.0
        %896 = vmatprep.subr.mxu0 0.0
        %897 = vmatpush1.xpose.msra.mxu0 0.0
        %898 = vmatprep.subr.mxu0 0.0
        %899 = vmatpush1.xpose.msra.mxu0 0.0
        %900 = vmatprep.subr.mxu0 0.0
        %901 = vmatpush1.xpose.msra.mxu0 0.0
        %902 = vmatprep.subr.mxu0 0.0
        %903 = vmatpush1.xpose.msra.mxu0 0.0
        %904 = vmatprep.subr.mxu0 0.0
        %905 = vmatpush1.xpose.msra.mxu0 0.0
        %906 = vmatprep.subr.mxu0 0.0
        %907 = vmatpush1.xpose.msra.mxu0 0.0
        %908 = vmatprep.subr.mxu0 0.0
        %909 = vmatpush1.xpose.msra.mxu0 0.0
        %910 = vmatprep.subr.mxu0 0.0
        %911 = vmatpush1.xpose.msra.mxu0 0.0
        %912 = vmatprep.subr.mxu0 0.0
        %913 = vmatpush1.xpose.msra.mxu0 0.0
        %914 = vmatprep.subr.mxu0 0.0
        %915 = vmatpush1.xpose.msra.mxu0 0.0
        %916 = vmatprep.subr.mxu0 0.0
        %917 = vmatpush1.xpose.msra.mxu0 0.0
        %918 = vmatprep.subr.mxu0 0.0
        %919 = vmatpush1.xpose.msra.mxu0 0.0
        %920 = vmatprep.subr.mxu0 0.0
        %921 = vmatpush1.xpose.msra.mxu0 0.0
        %922 = vmatprep.subr.mxu0 0.0
        %923 = vmatpush1.xpose.msra.mxu0 0.0
        %924 = vmatprep.subr.mxu0 0.0
        %925 = vmatpush1.xpose.msra.mxu0 0.0
        %926 = vmatprep.mubr.f32.mxu0 0.0
        %927 = vmatmul.mubr.f32.gmra.mrb[0].mxu0 %v858
        %v928 = vpop.f32.mrb[0].mxu0
        %v929 = vadd.f32 0.0, %v928
        %v930 = vpop.f32.mrb[0].mxu0
        %931 = vdwg.mxu0
        %v932 = vsel %vm526, %v929, -inf
        %933 = vmax.xlane.f32.xlu0 %v932
        %v934 = vpop.xlane.xlu0 %933
        %v935 = vsub.f32 %v929, %v934
        %v936 = vmul.f32 %v935, 1.442695
        %v937 = vpow.pop %v936
        %v938 = vsel %vm526, %v937, 0.0
        %939 = vadd.xlane.f32.xlu0 %v938
        %v940 = vpop.xlane.xlu0 %939
        %v941 = vrcp.pop %v940
        %v942 = vmul.f32 %v937, %v941
        %943 = vrot.lane.b32.xlu0 %v519, 48
        %v944 = vpop.permute.xlu0 %943
        %v947 = vsel %vm526, %v942, 0
        %949 = vmatprep.subr.mxu0 0.0
        %950 = vmatpush1.msra.mxu0 %v944
        %951 = vmatprep.subr.mxu0 0.0
        %952 = vmatpush1.msra.mxu0 0.0
        %953 = vmatprep.subr.mxu0 0.0
        %954 = vmatpush1.msra.mxu0 0.0
        %955 = vmatprep.subr.mxu0 0.0
        %956 = vmatpush1.msra.mxu0 0.0
        %957 = vmatprep.subr.mxu0 0.0
        %958 = vmatpush1.msra.mxu0 0.0
        %959 = vmatprep.subr.mxu0 0.0
        %960 = vmatpush1.msra.mxu0 0.0
        %961 = vmatprep.subr.mxu0 0.0
        %962 = vmatpush1.msra.mxu0 0.0
        %963 = vmatprep.subr.mxu0 0.0
        %964 = vmatpush1.msra.mxu0 0.0
        %965 = vmatprep.subr.mxu0 0.0
        %966 = vmatpush1.msra.mxu0 0.0
        %967 = vmatprep.subr.mxu0 0.0
        %968 = vmatpush1.msra.mxu0 0.0
        %969 = vmatprep.subr.mxu0 0.0
        %970 = vmatpush1.msra.mxu0 0.0
        %971 = vmatprep.subr.mxu0 0.0
        %972 = vmatpush1.msra.mxu0 0.0
        %973 = vmatprep.subr.mxu0 0.0
        %974 = vmatpush1.msra.mxu0 0.0
        %975 = vmatprep.subr.mxu0 0.0
        %976 = vmatpush1.msra.mxu0 0.0
        %977 = vmatprep.subr.mxu0 0.0
        %978 = vmatpush1.msra.mxu0 0.0
        %979 = vmatprep.subr.mxu0 0.0
        %980 = vmatpush1.msra.mxu0 0.0
        %981 = vmatprep.subr.mxu0 0.0
        %982 = vmatpush1.msra.mxu0 0.0
        %983 = vmatprep.subr.mxu0 0.0
        %984 = vmatpush1.msra.mxu0 0.0
        %985 = vmatprep.subr.mxu0 0.0
        %986 = vmatpush1.msra.mxu0 0.0
        %987 = vmatprep.subr.mxu0 0.0
        %988 = vmatpush1.msra.mxu0 0.0
        %989 = vmatprep.subr.mxu0 0.0
        %990 = vmatpush1.msra.mxu0 0.0
        %991 = vmatprep.subr.mxu0 0.0
        %992 = vmatpush1.msra.mxu0 0.0
        %993 = vmatprep.subr.mxu0 0.0
        %994 = vmatpush1.msra.mxu0 0.0
        %995 = vmatprep.subr.mxu0 0.0
        %996 = vmatpush1.msra.mxu0 0.0
        %997 = vmatprep.subr.mxu0 0.0
        %998 = vmatpush1.msra.mxu0 0.0
        %999 = vmatprep.subr.mxu0 0.0
        %1000 = vmatpush1.msra.mxu0 0.0
        %1001 = vmatprep.subr.mxu0 0.0
        %1002 = vmatpush1.msra.mxu0 0.0
        %1003 = vmatprep.subr.mxu0 0.0
        %1004 = vmatpush1.msra.mxu0 0.0
        %1005 = vmatprep.subr.mxu0 0.0
        %1006 = vmatpush1.msra.mxu0 0.0
        %1007 = vmatprep.subr.mxu0 0.0
        %1008 = vmatpush1.msra.mxu0 0.0
        %1009 = vmatprep.subr.mxu0 0.0
        %1010 = vmatpush1.msra.mxu0 0.0
        %1011 = vmatprep.subr.mxu0 0.0
        %1012 = vmatpush1.msra.mxu0 0.0
        %1013 = vmatprep.mubr.f32.mxu0 0.0
        %1014 = vmatmul.mubr.f32.gmra.mrb[0].mxu0 %v947
        %v1015 = vpop.f32.mrb[0].mxu0
        %v1016 = vadd.f32 0.0, %v1015
        %v1017 = vpop.f32.mrb[0].mxu0
        %1018 = vdwg.mxu0
        %1019 = vrot.lane.b32.xlu0 %v522, 104
        %v1020 = vpop.permute.xlu0 %1019
        %1021 = vrot.lane.b32.xlu0 %v519, 72
        %v1022 = vpop.permute.xlu0 %1021
        %v1023 = vsel %vm526, %v1020, 0
        %v1025 = vsel %vm526, %v1022, 0
        %1027 = vmatprep.subr.mxu0 0.0
        %1028 = vmatpush1.xpose.msra.mxu0 %v1025
        %1029 = vmatprep.subr.mxu0 0.0
        %1030 = vmatpush1.xpose.msra.mxu0 0.0
        %1031 = vmatprep.subr.mxu0 0.0
        %1032 = vmatpush1.xpose.msra.mxu0 0.0
        %1033 = vmatprep.subr.mxu0 0.0
        %1034 = vmatpush1.xpose.msra.mxu0 0.0
        %1035 = vmatprep.subr.mxu0 0.0
        %1036 = vmatpush1.xpose.msra.mxu0 0.0
        %1037 = vmatprep.subr.mxu0 0.0
        %1038 = vmatpush1.xpose.msra.mxu0 0.0
        %1039 = vmatprep.subr.mxu0 0.0
        %1040 = vmatpush1.xpose.msra.mxu0 0.0
        %1041 = vmatprep.subr.mxu0 0.0
        %1042 = vmatpush1.xpose.msra.mxu0 0.0
        %1043 = vmatprep.subr.mxu0 0.0
        %1044 = vmatpush1.xpose.msra.mxu0 0.0
        %1045 = vmatprep.subr.mxu0 0.0
        %1046 = vmatpush1.xpose.msra.mxu0 0.0
        %1047 = vmatprep.subr.mxu0 0.0
        %1048 = vmatpush1.xpose.msra.mxu0 0.0
        %1049 = vmatprep.subr.mxu0 0.0
        %1050 = vmatpush1.xpose.msra.mxu0 0.0
        %1051 = vmatprep.subr.mxu0 0.0
        %1052 = vmatpush1.xpose.msra.mxu0 0.0
        %1053 = vmatprep.subr.mxu0 0.0
        %1054 = vmatpush1.xpose.msra.mxu0 0.0
        %1055 = vmatprep.subr.mxu0 0.0
        %1056 = vmatpush1.xpose.msra.mxu0 0.0
        %1057 = vmatprep.subr.mxu0 0.0
        %1058 = vmatpush1.xpose.msra.mxu0 0.0
        %1059 = vmatprep.subr.mxu0 0.0
        %1060 = vmatpush1.xpose.msra.mxu0 0.0
        %1061 = vmatprep.subr.mxu0 0.0
        %1062 = vmatpush1.xpose.msra.mxu0 0.0
        %1063 = vmatprep.subr.mxu0 0.0
        %1064 = vmatpush1.xpose.msra.mxu0 0.0
        %1065 = vmatprep.subr.mxu0 0.0
        %1066 = vmatpush1.xpose.msra.mxu0 0.0
        %1067 = vmatprep.subr.mxu0 0.0
        %1068 = vmatpush1.xpose.msra.mxu0 0.0
        %1069 = vmatprep.subr.mxu0 0.0
        %1070 = vmatpush1.xpose.msra.mxu0 0.0
        %1071 = vmatprep.subr.mxu0 0.0
        %1072 = vmatpush1.xpose.msra.mxu0 0.0
        %1073 = vmatprep.subr.mxu0 0.0
        %1074 = vmatpush1.xpose.msra.mxu0 0.0
        %1075 = vmatprep.subr.mxu0 0.0
        %1076 = vmatpush1.xpose.msra.mxu0 0.0
        %1077 = vmatprep.subr.mxu0 0.0
        %1078 = vmatpush1.xpose.msra.mxu0 0.0
        %1079 = vmatprep.subr.mxu0 0.0
        %1080 = vmatpush1.xpose.msra.mxu0 0.0
        %1081 = vmatprep.subr.mxu0 0.0
        %1082 = vmatpush1.xpose.msra.mxu0 0.0
        %1083 = vmatprep.subr.mxu0 0.0
        %1084 = vmatpush1.xpose.msra.mxu0 0.0
        %1085 = vmatprep.subr.mxu0 0.0
        %1086 = vmatpush1.xpose.msra.mxu0 0.0
        %1087 = vmatprep.subr.mxu0 0.0
        %1088 = vmatpush1.xpose.msra.mxu0 0.0
        %1089 = vmatprep.subr.mxu0 0.0
        %1090 = vmatpush1.xpose.msra.mxu0 0.0
        %1091 = vmatprep.mubr.f32.mxu0 0.0
        %1092 = vmatmul.mubr.f32.gmra.mrb[0].mxu0 %v1023
        %v1093 = vpop.f32.mrb[0].mxu0
        %v1094 = vadd.f32 0.0, %v1093
        %v1095 = vpop.f32.mrb[0].mxu0
        %1096 = vdwg.mxu0
        %v1097 = vsel %vm526, %v1094, -inf
        %1098 = vmax.xlane.f32.xlu0 %v1097
        %v1099 = vpop.xlane.xlu0 %1098
        %v1100 = vsub.f32 %v1094, %v1099
        %v1101 = vmul.f32 %v1100, 1.442695
        %v1102 = vpow.pop %v1101
        %v1103 = vsel %vm526, %v1102, 0.0
        %1104 = vadd.xlane.f32.xlu0 %v1103
        %v1105 = vpop.xlane.xlu0 %1104
        %v1106 = vrcp.pop %v1105
        %v1107 = vmul.f32 %v1102, %v1106
        %1108 = vrot.lane.b32.xlu0 %v519, 40
        %v1109 = vpop.permute.xlu0 %1108
        %v1112 = vsel %vm526, %v1107, 0
        %1114 = vmatprep.subr.mxu0 0.0
        %1115 = vmatpush1.msra.mxu0 %v1109
        %1116 = vmatprep.subr.mxu0 0.0
        %1117 = vmatpush1.msra.mxu0 0.0
        %1118 = vmatprep.subr.mxu0 0.0
        %1119 = vmatpush1.msra.mxu0 0.0
        %1120 = vmatprep.subr.mxu0 0.0
        %1121 = vmatpush1.msra.mxu0 0.0
        %1122 = vmatprep.subr.mxu0 0.0
        %1123 = vmatpush1.msra.mxu0 0.0
        %1124 = vmatprep.subr.mxu0 0.0
        %1125 = vmatpush1.msra.mxu0 0.0
        %1126 = vmatprep.subr.mxu0 0.0
        %1127 = vmatpush1.msra.mxu0 0.0
        %1128 = vmatprep.subr.mxu0 0.0
        %1129 = vmatpush1.msra.mxu0 0.0
        %1130 = vmatprep.subr.mxu0 0.0
        %1131 = vmatpush1.msra.mxu0 0.0
        %1132 = vmatprep.subr.mxu0 0.0
        %1133 = vmatpush1.msra.mxu0 0.0
        %1134 = vmatprep.subr.mxu0 0.0
        %1135 = vmatpush1.msra.mxu0 0.0
        %1136 = vmatprep.subr.mxu0 0.0
        %1137 = vmatpush1.msra.mxu0 0.0
        %1138 = vmatprep.subr.mxu0 0.0
        %1139 = vmatpush1.msra.mxu0 0.0
        %1140 = vmatprep.subr.mxu0 0.0
        %1141 = vmatpush1.msra.mxu0 0.0
        %1142 = vmatprep.subr.mxu0 0.0
        %1143 = vmatpush1.msra.mxu0 0.0
        %1144 = vmatprep.subr.mxu0 0.0
        %1145 = vmatpush1.msra.mxu0 0.0
        %1146 = vmatprep.subr.mxu0 0.0
        %1147 = vmatpush1.msra.mxu0 0.0
        %1148 = vmatprep.subr.mxu0 0.0
        %1149 = vmatpush1.msra.mxu0 0.0
        %1150 = vmatprep.subr.mxu0 0.0
        %1151 = vmatpush1.msra.mxu0 0.0
        %1152 = vmatprep.subr.mxu0 0.0
        %1153 = vmatpush1.msra.mxu0 0.0
        %1154 = vmatprep.subr.mxu0 0.0
        %1155 = vmatpush1.msra.mxu0 0.0
        %1156 = vmatprep.subr.mxu0 0.0
        %1157 = vmatpush1.msra.mxu0 0.0
        %1158 = vmatprep.subr.mxu0 0.0
        %1159 = vmatpush1.msra.mxu0 0.0
        %1160 = vmatprep.subr.mxu0 0.0
        %1161 = vmatpush1.msra.mxu0 0.0
        %1162 = vmatprep.subr.mxu0 0.0
        %1163 = vmatpush1.msra.mxu0 0.0
        %1164 = vmatprep.subr.mxu0 0.0
        %1165 = vmatpush1.msra.mxu0 0.0
        %1166 = vmatprep.subr.mxu0 0.0
        %1167 = vmatpush1.msra.mxu0 0.0
        %1168 = vmatprep.subr.mxu0 0.0
        %1169 = vmatpush1.msra.mxu0 0.0
        %1170 = vmatprep.subr.mxu0 0.0
        %1171 = vmatpush1.msra.mxu0 0.0
        %1172 = vmatprep.subr.mxu0 0.0
        %1173 = vmatpush1.msra.mxu0 0.0
        %1174 = vmatprep.subr.mxu0 0.0
        %1175 = vmatpush1.msra.mxu0 0.0
        %1176 = vmatprep.subr.mxu0 0.0
        %1177 = vmatpush1.msra.mxu0 0.0
        %1178 = vmatprep.mubr.f32.mxu0 0.0
        %1179 = vmatmul.mubr.f32.gmra.mrb[0].mxu0 %v1112
        %v1180 = vpop.f32.mrb[0].mxu0
        %v1181 = vadd.f32 0.0, %v1180
        %v1182 = vpop.f32.mrb[0].mxu0
        %1183 = vdwg.mxu0
        %1185 = vrot.lane.b32.xlu0 %v851, 8
        %v1186 = vpop.permute.xlu0 %1185
        %1189 = vrot.lane.b32.xlu0 %v1016, 16
        %v1190 = vpop.permute.xlu0 %1189
        %1193 = vrot.lane.b32.xlu0 %v1181, 24
        %v1194 = vpop.permute.xlu0 %1193
        %v1196 = vsel %vm526, %v686, %v1186
        %vm1197 = vcmask 130048
        %v1198 = vsel %vm1197, %v1196, %v1190
        %vm1199 = vcmask 195584
        %v1200 = vsel %vm1199, %v1198, %v1194
        %v1201 = vld [vmem:[%s3] sm:$0xff]
        %v1202 = vld [vmem:[%s3 + $0x8] sm:$0xff]
        %v1203 = vld [vmem:[%s3 + $0x10] sm:$0xff]
        %v1204 = vld [vmem:[%s3 + $0x18] sm:$0xff]
        %v1205 = vld [vmem:[%s4] sm:$0x1]
        %v1207 = vlaneseq
        %v1208 = vshrl.u32 %v1207, 7
        %v1209 = vsub.s32 0, %v1208
        %v1210 = vrot.slane %v1205, %v1209
        %v1213 = vsel %vm448, %v1200, 0
        %1215 = vmatprep.subr.mxu0 0.0
        %1216 = vmatpush1.msra.mxu0 %v1201
        %1217 = vmatprep.subr.mxu0 0.0
        %1218 = vmatpush1.msra.mxu0 %v1202
        %1219 = vmatprep.subr.mxu0 0.0
        %1220 = vmatpush1.msra.mxu0 %v1203
        %1221 = vmatprep.subr.mxu0 0.0
        %1222 = vmatpush1.msra.mxu0 %v1204
        %1223 = vmatprep.subr.mxu0 0.0
        %1224 = vmatpush1.msra.mxu0 0.0
        %1225 = vmatprep.subr.mxu0 0.0
        %1226 = vmatpush1.msra.mxu0 0.0
        %1227 = vmatprep.subr.mxu0 0.0
        %1228 = vmatpush1.msra.mxu0 0.0
        %1229 = vmatprep.subr.mxu0 0.0
        %1230 = vmatpush1.msra.mxu0 0.0
        %1231 = vmatprep.subr.mxu0 0.0
        %1232 = vmatpush1.msra.mxu0 0.0
        %1233 = vmatprep.subr.mxu0 0.0
        %1234 = vmatpush1.msra.mxu0 0.0
        %1235 = vmatprep.subr.mxu0 0.0
        %1236 = vmatpush1.msra.mxu0 0.0
        %1237 = vmatprep.subr.mxu0 0.0
        %1238 = vmatpush1.msra.mxu0 0.0
        %1239 = vmatprep.subr.mxu0 0.0
        %1240 = vmatpush1.msra.mxu0 0.0
        %1241 = vmatprep.subr.mxu0 0.0
        %1242 = vmatpush1.msra.mxu0 0.0
        %1243 = vmatprep.subr.mxu0 0.0
        %1244 = vmatpush1.msra.mxu0 0.0
        %1245 = vmatprep.subr.mxu0 0.0
        %1246 = vmatpush1.msra.mxu0 0.0
        %1247 = vmatprep.subr.mxu0 0.0
        %1248 = vmatpush1.msra.mxu0 0.0
        %1249 = vmatprep.subr.mxu0 0.0
        %1250 = vmatpush1.msra.mxu0 0.0
        %1251 = vmatprep.subr.mxu0 0.0
        %1252 = vmatpush1.msra.mxu0 0.0
        %1253 = vmatprep.subr.mxu0 0.0
        %1254 = vmatpush1.msra.mxu0 0.0
        %1255 = vmatprep.subr.mxu0 0.0
        %1256 = vmatpush1.msra.mxu0 0.0
        %1257 = vmatprep.subr.mxu0 0.0
        %1258 = vmatpush1.msra.mxu0 0.0
        %1259 = vmatprep.subr.mxu0 0.0
        %1260 = vmatpush1.msra.mxu0 0.0
        %1261 = vmatprep.subr.mxu0 0.0
        %1262 = vmatpush1.msra.mxu0 0.0
        %1263 = vmatprep.subr.mxu0 0.0
        %1264 = vmatpush1.msra.mxu0 0.0
        %1265 = vmatprep.subr.mxu0 0.0
        %1266 = vmatpush1.msra.mxu0 0.0
        %1267 = vmatprep.subr.mxu0 0.0
        %1268 = vmatpush1.msra.mxu0 0.0
        %1269 = vmatprep.subr.mxu0 0.0
        %1270 = vmatpush1.msra.mxu0 0.0
        %1271 = vmatprep.subr.mxu0 0.0
        %1272 = vmatpush1.msra.mxu0 0.0
        %1273 = vmatprep.subr.mxu0 0.0
        %1274 = vmatpush1.msra.mxu0 0.0
        %1275 = vmatprep.subr.mxu0 0.0
        %1276 = vmatpush1.msra.mxu0 0.0
        %1277 = vmatprep.subr.mxu0 0.0
        %1278 = vmatpush1.msra.mxu0 0.0
        %1279 = vmatprep.mubr.f32.mxu0 0.0
        %1280 = vmatmul.mubr.f32.gmra.mrb[0].mxu0 %v1213
        %v1281 = vpop.f32.mrb[0].mxu0
        %v1282 = vadd.f32 %v1210, %v1281
        %v1283 = vpop.f32.mrb[0].mxu0
        %1284 = vdwg.mxu0
        %v1285 = vadd.f32 %v436, %v1282
        %v1286 = vld [vmem:[%s9] sm:$0x1]
        %v1287 = vld [vmem:[%s10] sm:$0x1]
        %v1288 = vsel %vm448, %v1285, 0.0
        %1289 = vadd.xlane.f32.xlu0 %v1288
        %v1290 = vpop.xlane.xlu0 %1289
        %v1291 = vrcp.pop 32.0
        %v1292 = vmul.f32 %v1290, %v1291
        %v1293 = vsub.f32 %v1285, %v1292
        %v1294 = vmul.f32 %v1293, %v1293
        %v1295 = vsel %vm448, %v1294, 0.0
        %1296 = vadd.xlane.f32.xlu0 %v1295
        %v1297 = vpop.xlane.xlu0 %1296
        %v1298 = vmul.f32 %v1297, %v1291
        %v1299 = vadd.f32 %v1298, 1e-05
        %v1300 = vrsqrt.pop %v1299
        %v1301 = vmul.f32 %v1293, %v1300
        %v1303 = vlaneseq
        %v1304 = vshrl.u32 %v1303, 7
        %v1305 = vsub.s32 0, %v1304
        %v1306 = vrot.slane %v1286, %v1305
        %v1308 = vmul.f32 %v1301, %v1306
        %v1310 = vlaneseq
        %v1311 = vshrl.u32 %v1310, 7
        %v1312 = vsub.s32 0, %v1311
        %v1313 = vrot.slane %v1287, %v1312
        %v1315 = vadd.f32 %v1308, %v1313
        %v1316 = vld [vmem:[%s5] sm:$0xff]
        %v1317 = vld [vmem:[%s5 + $0x8] sm:$0xff]
        %v1318 = vld [vmem:[%s5 + $0x10] sm:$0xff]
        %v1319 = vld [vmem:[%s5 + $0x18] sm:$0xff]
        %v1320 = vld [vmem:[%s6] sm:$0x1]
        %v1322 = vlaneseq
        %v1323 = vshrl.u32 %v1322, 7
        %v1324 = vsub.s32 0, %v1323
        %v1325 = vrot.slane %v1320, %v1324
        %v1328 = vsel %vm448, %v1315, 0
        %1330 = vmatprep.subr.mxu0 0.0
        %1331 = vmatpush1.msra.mxu0 %v1316
        %1332 = vmatprep.subr.mxu0 0.0
        %1333 = vmatpush1.msra.mxu0 %v1317
        %1334 = vmatprep.subr.mxu0 0.0
        %1335 = vmatpush1.msra.mxu0 %v1318
        %1336 = vmatprep.subr.mxu0 0.0
        %1337 = vmatpush1.msra.mxu0 %v1319
        %1338 = vmatprep.subr.mxu0 0.0
        %1339 = vmatpush1.msra.mxu0 0.0
        %1340 = vmatprep.subr.mxu0 0.0
        %1341 = vmatpush1.msra.mxu0 0.0
        %1342 = vmatprep.subr.mxu0 0.0
        %1343 = vmatpush1.msra.mxu0 0.0
        %1344 = vmatprep.subr.mxu0 0.0
        %1345 = vmatpush1.msra.mxu0 0.0
        %1346 = vmatprep.subr.mxu0 0.0
        %1347 = vmatpush1.msra.mxu0 0.0
        %1348 = vmatprep.subr.mxu0 0.0
        %1349 = vmatpush1.msra.mxu0 0.0
        %1350 = vmatprep.subr.mxu0 0.0
        %1351 = vmatpush1.msra.mxu0 0.0
        %1352 = vmatprep.subr.mxu0 0.0
        %1353 = vmatpush1.msra.mxu0 0.0
        %1354 = vmatprep.subr.mxu0 0.0
        %1355 = vmatpush1.msra.mxu0 0.0
        %1356 = vmatprep.subr.mxu0 0.0
        %1357 = vmatpush1.msra.mxu0 0.0
        %1358 = vmatprep.subr.mxu0 0.0
        %1359 = vmatpush1.msra.mxu0 0.0
        %1360 = vmatprep.subr.mxu0 0.0
        %1361 = vmatpush1.msra.mxu0 0.0
        %1362 = vmatprep.subr.mxu0 0.0
        %1363 = vmatpush1.msra.mxu0 0.0
        %1364 = vmatprep.subr.mxu0 0.0
        %1365 = vmatpush1.msra.mxu0 0.0
        %1366 = vmatprep.subr.mxu0 0.0
        %1367 = vmatpush1.msra.mxu0 0.0
        %1368 = vmatprep.subr.mxu0 0.0
        %1369 = vmatpush1.msra.mxu0 0.0
        %1370 = vmatprep.subr.mxu0 0.0
        %1371 = vmatpush1.msra.mxu0 0.0
        %1372 = vmatprep.subr.mxu0 0.0
        %1373 = vmatpush1.msra.mxu0 0.0
        %1374 = vmatprep.subr.mxu0 0.0
        %1375 = vmatpush1.msra.mxu0 0.0
        %1376 = vmatprep.subr.mxu0 0.0
        %1377 = vmatpush1.msra.mxu0 0.0
        %1378 = vmatprep.subr.mxu0 0.0
        %1379 = vmatpush1.msra.mxu0 0.0
        %1380 = vmatprep.subr.mxu0 0.0
        %1381 = vmatpush1.msra.mxu0 0.0
        %1382 = vmatprep.subr.mxu0 0.0
        %1383 = vmatpush1.msra.mxu0 0.0
        %1384 = vmatprep.subr.mxu0 0.0
        %1385 = vmatpush1.msra.mxu0 0.0
        %1386 = vmatprep.subr.mxu0 0.0
        %1387 = vmatpush1.msra.mxu0 0.0
        %1388 = vmatprep.subr.mxu0 0.0
        %1389 = vmatpush1.msra.mxu0 0.0
        %1390 = vmatprep.subr.mxu0 0.0
        %1391 = vmatpush1.msra.mxu0 0.0
        %1392 = vmatprep.subr.mxu0 0.0
        %1393 = vmatpush1.msra.mxu0 0.0
        %1394 = vmatprep.mubr.f32.mxu0 0.0
        %1395 = vmatmul.mubr.f32.gmra.mrb[0].mxu0 %v1328
        %v1396 = vpop.f32.mrb[0].mxu0
        %v1397 = vadd.f32 %v1325, %v1396
        %v1398 = vpop.f32.mrb[0].mxu0
        %1399 = vdwg.mxu0
        %v1400 = vmax.f32 %v1397, 0.0
        %v1401 = vld [vmem:[%s7] sm:$0xff]
        %v1402 = vld [vmem:[%s7 + $0x8] sm:$0xff]
        %v1403 = vld [vmem:[%s7 + $0x10] sm:$0xff]
        %v1404 = vld [vmem:[%s7 + $0x18] sm:$0xff]
        %v1405 = vld [vmem:[%s7 + $0x20] sm:$0xff]
        %v1406 = vld [vmem:[%s7 + $0x28] sm:$0xff]
        %v1407 = vld [vmem:[%s7 + $0x30] sm:$0xff]
        %v1408 = vld [vmem:[%s7 + $0x38] sm:$0xff]
        %v1409 = vld [vmem:[%s8] sm:$0x1]
        %v1411 = vlaneseq
        %v1412 = vshrl.u32 %v1411, 7
        %v1413 = vsub.s32 0, %v1412
        %v1414 = vrot.slane %v1409, %v1413
        %vm1416 = vcmask 523264
        %v1418 = vsel %vm1416, %v1400, 0
        %1420 = vmatprep.subr.mxu0 0.0
        %1421 = vmatpush1.msra.mxu0 %v1401
        %1422 = vmatprep.subr.mxu0 0.0
        %1423 = vmatpush1.msra.mxu0 %v1402
        %1424 = vmatprep.subr.mxu0 0.0
        %1425 = vmatpush1.msra.mxu0 %v1403
        %1426 = vmatprep.subr.mxu0 0.0
        %1427 = vmatpush1.msra.mxu0 %v1404
        %1428 = vmatprep.subr.mxu0 0.0
        %1429 = vmatpush1.msra.mxu0 %v1405
        %1430 = vmatprep.subr.mxu0 0.0
        %1431 = vmatpush1.msra.mxu0 %v1406
        %1432 = vmatprep.subr.mxu0 0.0
        %1433 = vmatpush1.msra.mxu0 %v1407
        %1434 = vmatprep.subr.mxu0 0.0
        %1435 = vmatpush1.msra.mxu0 %v1408
        %1436 = vmatprep.subr.mxu0 0.0
        %1437 = vmatpush1.msra.mxu0 0.0
        %1438 = vmatprep.subr.mxu0 0.0
        %1439 = vmatpush1.msra.mxu0 0.0
        %1440 = vmatprep.subr.mxu0 0.0
        %1441 = vmatpush1.msra.mxu0 0.0
        %1442 = vmatprep.subr.mxu0 0.0
        %1443 = vmatpush1.msra.mxu0 0.0
        %1444 = vmatprep.subr.mxu0 0.0
        %1445 = vmatpush1.msra.mxu0 0.0
        %1446 = vmatprep.subr.mxu0 0.0
        %1447 = vmatpush1.msra.mxu0 0.0
        %1448 = vmatprep.subr.mxu0 0.0
        %1449 = vmatpush1.msra.mxu0 0.0
        %1450 = vmatprep.subr.mxu0 0.0
        %1451 = vmatpush1.msra.mxu0 0.0
        %1452 = vmatprep.subr.mxu0 0.0
        %1453 = vmatpush1.msra.mxu0 0.0
        %1454 = vmatprep.subr.mxu0 0.0
        %1455 = vmatpush1.msra.mxu0 0.0
        %1456 = vmatprep.subr.mxu0 0.0
        %1457 = vmatpush1.msra.mxu0 0.0
        %1458 = vmatprep.subr.mxu0 0.0
        %1459 = vmatpush1.msra.mxu0 0.0
        %1460 = vmatprep.subr.mxu0 0.0
        %1461 = vmatpush1.msra.mxu0 0.0
        %1462 = vmatprep.subr.mxu0 0.0
        %1463 = vmatpush1.msra.mxu0 0.0
        %1464 = vmatprep.subr.mxu0 0.0
        %1465 = vmatpush1.msra.mxu0 0.0
        %1466 = vmatprep.subr.mxu0 0.0
        %1467 = vmatpush1.msra.mxu0 0.0
        %1468 = vmatprep.subr.mxu0 0.0
        %1469 = vmatpush1.msra.mxu0 0.0
        %1470 = vmatprep.subr.mxu0 0.0
        %1471 = vmatpush1.msra.mxu0 0.0
        %1472 = vmatprep.subr.mxu0 0.0
        %1473 = vmatpush1.msra.mxu0 0.0
        %1474 = vmatprep.subr.mxu0 0.0
        %1475 = vmatpush1.msra.mxu0 0.0
        %1476 = vmatprep.subr.mxu0 0.0
        %1477 = vmatpush1.msra.mxu0 0.0
        %1478 = vmatprep.subr.mxu0 0.0
        %1479 = vmatpush1.msra.mxu0 0.0
        %1480 = vmatprep.subr.mxu0 0.0
        %1481 = vmatpush1.msra.mxu0 0.0
        %1482 = vmatprep.subr.mxu0 0.0
        %1483 = vmatpush1.msra.mxu0 0.0
        %1484 = vmatprep.mubr.f32.mxu0 0.0
        %1485 = vmatmul.mubr.f32.gmra.mrb[0].mxu0 %v1418
        %v1486 = vpop.f32.mrb[0].mxu0
        %v1487 = vadd.f32 %v1414, %v1486
        %v1488 = vpop.f32.mrb[0].mxu0
        %1489 = vdwg.mxu0
        %v1490 = vadd.f32 %v1315, %v1487
        %v1491 = vld [vmem:[%s11] sm:$0x1]
        %v1492 = vld [vmem:[%s12] sm:$0x1]
        %v1493 = vsel %vm448, %v1490, 0.0
        %1494 = vadd.xlane.f32.xlu0 %v1493
        %v1495 = vpop.xlane.xlu0 %1494
        %v1496 = vmul.f32 %v1495, %v1291
        %v1497 = vsub.f32 %v1490, %v1496
        %v1498 = vmul.f32 %v1497, %v1497
        %v1499 = vsel %vm448, %v1498, 0.0
        %1500 = vadd.xlane.f32.xlu0 %v1499
        %v1501 = vpop.xlane.xlu0 %1500
        %v1502 = vmul.f32 %v1501, %v1291
        %v1503 = vadd.f32 %v1502, 1e-05
        %v1504 = vrsqrt.pop %v1503
        %v1505 = vmul.f32 %v1497, %v1504
        %v1507 = vlaneseq
        %v1508 = vshrl.u32 %v1507, 7
        %v1509 = vsub.s32 0, %v1508
        %v1510 = vrot.slane %v1491, %v1509
        %v1512 = vmul.f32 %v1505, %v1510
        %v1514 = vlaneseq
        %v1515 = vshrl.u32 %v1514, 7
        %v1516 = vsub.s32 0, %v1515
        %v1517 = vrot.slane %v1492, %v1516
        %v1519 = vadd.f32 %v1512, %v1517
        %1520 = vst.msk [vmem:[%s431] sm:$0xff] %vm448, %v1519
        %s1521 = sand.u32 %s313, 1
        %s1522 = scalar_lea.sflag [#allocation3], %s1521
        %s1523 = sand.u32 %s313, 1
        %s1524 = smul.addr %s1523, 8
        %s1525 = scalar_lea.vmem [#allocation2], %s1524
        // Predicated region
        $region73: #{encoder_forward.3} parent=71 // pred_check
          %p1526 = pneg %p323
        $region74: #{encoder_forward.3} parent=71 // pred_check_branch
          %1528 = sbr.rel (%p1526) target = $region76
        $region75: #{encoder_forward.3} parent=71 // pred_region
          %s1530 = ssub.s32 128, 128
          %1531 = vsyncadd %s1522, %s1530
          %s1532 = smul.addr %s27, 128
          %s1533 = scalar_lea.hbm %s13, %s1532
          %s1535 = sshll.u32 %s1525, 4
          %s1536 = int_to_ptr.vmem [resolvable:$true] %s1535
          %1538 = dma.vmem_to_hbm [thread:$0]  %s1536, 128, %s1533, %s1522
        $region76: #{encoder_forward.3} parent=71 // pred_fallthru
          _
      $region72: #{encoder_forward.3} parent=5 // pred_fallthru
        _
      %p1539 = scmp.le.s32.totalorder 2, %s22
      // Predicated region
      $region77: #{encoder_forward.3} parent=5 // pred_check
        %p1540 = pneg %p1539
      $region78: #{encoder_forward.3} parent=5 // pred_check_branch
        %1542 = sbr.rel (%p1540) target = $region80
      $region79: #{encoder_forward.3} parent=5 // pred_region
        %s1543 = ssub.s32 %s22, 2
        // Predicated region
        $region81: #{encoder_forward.3} parent=79 // pred_check
          %p1544 = pneg %p329
        $region82: #{encoder_forward.3} parent=79 // pred_check_branch
          %1546 = sbr.rel (%p1544) target = $region84
        $region83: #{encoder_forward.3} parent=79 // pred_region
          %s1547 = sand.u32 %s314, 1
          %s1548 = scalar_lea.sflag [#allocation3], %s1547
          %s1549 = sand.u32 %s314, 1
          %s1550 = smul.addr %s1549, 8
          %s1551 = scalar_lea.vmem [#allocation2], %s1550
          %1552 = dma.done %s1548, 128
        $region84: #{encoder_forward.3} parent=79 // pred_fallthru
          _
      $region80: #{encoder_forward.3} parent=5 // pred_fallthru
        _
    $region6: #{encoder_forward.3} parent=1 // loop_footer
      %s26 = sadd.s32 1, %s22
    $region7: #{encoder_forward.3} parent=1 // loop_footer_branch
      %21 = sbr.rel target = $region3
    $region8: #{encoder_forward.3} parent=1 // loop_exit
      _
    %1553 = vsyncpa [#allocation3], 1
    %s1554 = scalar_lea.sflag [#allocation3], 1
    %1555 = vsyncpa %s1554, 1

</llo_original>
